<compile_context>
chip_gen: v6e
topology: v6e:2x2x1
jax: 0.10.0
libtpu: 0.0.40
codegen_flags: <defaults>
</compile_context>

<pallas_src>
import jax
import jax.numpy as jnp
from jax.experimental import pallas as pl
from jax.experimental.pallas import tpu as pltpu


def _leaky_relu(x, slope=0.2):
    # single VALU max instead of compare + select
    return jnp.maximum(x, slope * x)


def discriminator_kernel(x_ref, w1_ref, b1_ref, w2_ref, b2_ref, w3_ref, b3_ref,
                         out_ref):
    x = x_ref[...]                                                      # (TB, F) bf16

    h1 = jnp.dot(x, w1_ref[...], preferred_element_type=jnp.float32)   # (TB, 512) f32
    h1 = _leaky_relu(h1 + b1_ref[...])

    h2 = jnp.dot(h1.astype(jnp.bfloat16), w2_ref[...],
                 preferred_element_type=jnp.float32)                    # (TB, 256) f32
    h2 = _leaky_relu(h2 + b2_ref[...])

    # Final 256 -> 1 projection: N=1 would waste the MXU columns, so do it on the
    # VPU (elementwise mul) + XLU (cross-lane reduce).  w3 is stored as (1, 256).
    w3 = w3_ref[...].astype(jnp.float32)                                # (1, 256)
    h3 = jnp.sum(h2 * w3, axis=-1, keepdims=True) + b3_ref[...]         # (TB, 1)

    # sigmoid = 1 / (1 + exp(-h3)); exp and approximate reciprocal both go to the
    # EUP slot, keeping the divide off the VPU.
    e = jnp.exp(-h3)
    out_ref[...] = pl.reciprocal(1.0 + e, approx=True)


def discriminator_forward(img, params):
    """img: (B, C, H, W) float32.  Returns validity (B, 1) float32."""
    B = img.shape[0]
    x = img.reshape(B, -1)                       # == img.view(B, -1) (row-major NCHW)
    F = x.shape[1]
    w1, b1, w2, b2, w3, b3 = params

    # Batch tile: >= 128 rows so the MXU systolic array is filled; 256 once the
    # batch is big enough to feed the 256-wide MXU on v6e/v7x.
    tb = 256 if B >= 256 else 128
    b_pad = pl.cdiv(B, tb) * tb
    if b_pad != B:
        x = jnp.pad(x, ((0, b_pad - B), (0, 0)))
    x = x.astype(jnp.bfloat16)                   # halves the x HBM traffic

    grid = (b_pad // tb,)

    def resident(shape):
        # Same block index every grid step -> block stays resident in VMEM.
        return pl.BlockSpec(shape, lambda i: tuple(0 for _ in shape))

    out = pl.pallas_call(
        discriminator_kernel,
        out_shape=jax.ShapeDtypeStruct((b_pad, 1), jnp.float32),
        grid=grid,
        in_specs=[
            pl.BlockSpec((tb, F), lambda i: (i, 0)),
            resident(w1.shape), resident(b1.shape),
            resident(w2.shape), resident(b2.shape),
            resident(w3.shape), resident(b3.shape),
        ],
        out_specs=pl.BlockSpec((tb, 1), lambda i: (i, 0)),
        compiler_params=pltpu.CompilerParams(
            dimension_semantics=("parallel",),   # pipelining + 2-TC sharding on v7x
            vmem_limit_bytes=32 * 1024 * 1024,
        ),
    )(x, w1, b1, w2, b2, w3, b3)
    # TODO(synk): if `features` grows so large that w1 (F x 512 bf16) plus the
    # pipelined x tiles no longer fit v5e's scoped VMEM, add an "arbitrary"
    # K-axis over F with a VMEM f32 accumulator + pl.when init/finalize.
    return out[:B]


def init_params(key, features):
    """Mimics nn.Linear's U(-1/sqrt(fan_in), 1/sqrt(fan_in)) init.
    w1, w2 are stored transposed as (in, out) so the kernel computes x @ W;
    w3 is stored in PyTorch layout (1, 256) for the broadcast VPU reduction.
    Weights are bf16, biases stay f32."""
    dims = [(features, 512), (512, 256), (256, 1)]
    params = []
    for li, (fan_in, fan_out) in enumerate(dims):
        key, kw, kb = jax.random.split(key, 3)
        bound = 1.0 / float(fan_in) ** 0.5
        if li < 2:
            w = jax.random.uniform(kw, (fan_in, fan_out), jnp.float32, -bound, bound)
        else:
            w = jax.random.uniform(kw, (fan_out, fan_in), jnp.float32, -bound, bound)
        b = jax.random.uniform(kb, (1, fan_out), jnp.float32, -bound, bound)
        params += [w.astype(jnp.bfloat16), b]
    return tuple(params)


def discriminator_reference(img, params):
    """Pure-JAX f32 reference (same math as the PyTorch module)."""
    w1, b1, w2, b2, w3, b3 = params
    x = img.reshape(img.shape[0], -1).astype(jnp.float32)
    h = x @ w1.astype(jnp.float32) + b1
    h = jnp.maximum(h, 0.2 * h)
    h = h @ w2.astype(jnp.float32) + b2
    h = jnp.maximum(h, 0.2 * h)
    h = h @ w3.astype(jnp.float32).T + b3
    return jax.nn.sigmoid(h)


if __name__ == "__main__":
    key = jax.random.PRNGKey(0)
    k_img, k_params = jax.random.split(key)

    B, C, H, W = 2, 4, 16, 16          # opt.features = C*H*W = 1024
    features = C * H * W

    img = jax.random.normal(k_img, (B, C, H, W), dtype=jnp.float32)
    params = init_params(k_params, features)

    validity = jax.block_until_ready(discriminator_forward(img, params))

    assert validity.shape == (B, 1)
    # approx reciprocal may overshoot 1.0 by <1e-3
    assert bool(jnp.all((validity >= 0.0) & (validity <= 1.0 + 1e-3)))

    ref = discriminator_reference(img, params)
    assert bool(jnp.allclose(validity, ref, atol=3e-2)), (validity, ref)

    print("KERNEL_OK")
</pallas_src>

<mosaic_0001>
module attributes {stable_mosaic.version = 11 : i64} {
  func.func @discriminator_kernel(%arg0: i32, %arg1: memref<128x1024xbf16, #tpu.memory_space<vmem>>, %arg2: memref<1024x512xbf16, #tpu.memory_space<vmem>>, %arg3: memref<1x512xf32, #tpu.memory_space<vmem>>, %arg4: memref<512x256xbf16, #tpu.memory_space<vmem>>, %arg5: memref<1x256xf32, #tpu.memory_space<vmem>>, %arg6: memref<1x256xbf16, #tpu.memory_space<vmem>>, %arg7: memref<1x1xf32, #tpu.memory_space<vmem>>, %arg8: memref<128x1xf32, #tpu.memory_space<vmem>>) attributes {dimension_semantics = [#tpu.dimension_semantics<parallel>], iteration_bounds = array<i64: 1>, scalar_prefetch = 0 : i64, scratch_operands = 0 : i64, tpu.core_type = #tpu.core_type<tc>, window_params = [{transform_indices = @transform_0, window_bounds = array<i64: 128, 1024>}, {pipeline_mode = #tpu.pipeline_mode<synchronous>, transform_indices = @transform_1, window_bounds = array<i64: 1024, 512>}, {pipeline_mode = #tpu.pipeline_mode<synchronous>, transform_indices = @transform_2, window_bounds = array<i64: 1, 512>}, {pipeline_mode = #tpu.pipeline_mode<synchronous>, transform_indices = @transform_3, window_bounds = array<i64: 512, 256>}, {pipeline_mode = #tpu.pipeline_mode<synchronous>, transform_indices = @transform_4, window_bounds = array<i64: 1, 256>}, {pipeline_mode = #tpu.pipeline_mode<synchronous>, transform_indices = @transform_5, window_bounds = array<i64: 1, 256>}, {pipeline_mode = #tpu.pipeline_mode<synchronous>, transform_indices = @transform_6, window_bounds = array<i64: 1, 1>}, {transform_indices = @transform_7, window_bounds = array<i64: 128, 1>}]} {
    %c0 = arith.constant 0 : index
    %c0_0 = arith.constant 0 : index
    %0 = vector.load %arg1[%c0, %c0_0] : memref<128x1024xbf16, #tpu.memory_space<vmem>>, vector<128x1024xbf16>
    %c0_1 = arith.constant 0 : index
    %c0_2 = arith.constant 0 : index
    %1 = vector.load %arg2[%c0_1, %c0_2] : memref<1024x512xbf16, #tpu.memory_space<vmem>>, vector<1024x512xbf16>
    %cst = arith.constant dense<0.000000e+00> : vector<128x512xf32>
    %2 = tpu.matmul %0, %1, %cst {dimension_numbers = #tpu.dot_dimension_numbers<[1], [0], [0], [1], [0, 0, 1, 1], [], []>} : vector<128x1024xbf16>, vector<1024x512xbf16>, vector<128x512xf32> -> vector<128x512xf32>
    %c0_3 = arith.constant 0 : index
    %c0_4 = arith.constant 0 : index
    %3 = vector.load %arg3[%c0_3, %c0_4] : memref<1x512xf32, #tpu.memory_space<vmem>>, vector<1x512xf32>
    %4 = vector.broadcast %3 : vector<1x512xf32> to vector<128x512xf32>
    %5 = arith.addf %2, %4 : vector<128x512xf32>
    %cst_5 = arith.constant 2.000000e-01 : f32
    %6 = vector.broadcast %cst_5 : f32 to vector<128x512xf32>
    %7 = arith.mulf %6, %5 : vector<128x512xf32>
    %8 = arith.maximumf %5, %7 : vector<128x512xf32>
    %9 = arith.truncf %8 : vector<128x512xf32> to vector<128x512xbf16>
    %c0_6 = arith.constant 0 : index
    %c0_7 = arith.constant 0 : index
    %10 = vector.load %arg4[%c0_6, %c0_7] : memref<512x256xbf16, #tpu.memory_space<vmem>>, vector<512x256xbf16>
    %cst_8 = arith.constant dense<0.000000e+00> : vector<128x256xf32>
    %11 = tpu.matmul %9, %10, %cst_8 {dimension_numbers = #tpu.dot_dimension_numbers<[1], [0], [0], [1], [0, 0, 1, 1], [], []>} : vector<128x512xbf16>, vector<512x256xbf16>, vector<128x256xf32> -> vector<128x256xf32>
    %c0_9 = arith.constant 0 : index
    %c0_10 = arith.constant 0 : index
    %12 = vector.load %arg5[%c0_9, %c0_10] : memref<1x256xf32, #tpu.memory_space<vmem>>, vector<1x256xf32>
    %13 = vector.broadcast %12 : vector<1x256xf32> to vector<128x256xf32>
    %14 = arith.addf %11, %13 : vector<128x256xf32>
    %cst_11 = arith.constant 2.000000e-01 : f32
    %15 = vector.broadcast %cst_11 : f32 to vector<128x256xf32>
    %16 = arith.mulf %15, %14 : vector<128x256xf32>
    %17 = arith.maximumf %14, %16 : vector<128x256xf32>
    %c0_12 = arith.constant 0 : index
    %c0_13 = arith.constant 0 : index
    %18 = vector.load %arg6[%c0_12, %c0_13] : memref<1x256xbf16, #tpu.memory_space<vmem>>, vector<1x256xbf16>
    %19 = arith.extf %18 : vector<1x256xbf16> to vector<1x256xf32>
    %20 = vector.broadcast %19 : vector<1x256xf32> to vector<128x256xf32>
    %21 = arith.mulf %17, %20 : vector<128x256xf32>
    %cst_14 = arith.constant dense<0.000000e+00> : vector<128xf32>
    %22 = vector.multi_reduction <add>, %21, %cst_14 [1] : vector<128x256xf32> to vector<128xf32>
    %23 = vector.shape_cast %22 : vector<128xf32> to vector<128x1xf32>
    %c0_15 = arith.constant 0 : index
    %c0_16 = arith.constant 0 : index
    %24 = vector.load %arg7[%c0_15, %c0_16] : memref<1x1xf32, #tpu.memory_space<vmem>>, vector<1x1xf32>
    %25 = vector.broadcast %24 : vector<1x1xf32> to vector<128x1xf32>
    %26 = arith.addf %23, %25 : vector<128x1xf32>
    %cst_17 = arith.constant 0.000000e+00 : f32
    %27 = vector.broadcast %cst_17 : f32 to vector<128x1xf32>
    %28 = arith.subf %27, %26 : vector<128x1xf32>
    %29 = math.exp %28 : vector<128x1xf32>
    %cst_18 = arith.constant 1.000000e+00 : f32
    %30 = vector.broadcast %cst_18 : f32 to vector<128x1xf32>
    %31 = arith.addf %30, %29 : vector<128x1xf32>
    %32 = tpu.reciprocal %31 {approx = true} : vector<128x1xf32> -> vector<128x1xf32>
    %c0_19 = arith.constant 0 : index
    %c0_20 = arith.constant 0 : index
    %33 = vector.load %arg8[%c0_19, %c0_20] : memref<128x1xf32, #tpu.memory_space<vmem>>, vector<128x1xf32>
    tpu.vector_store %arg8[%c0_19, %c0_20], %32 {strides = array<i32>} : memref<128x1xf32, #tpu.memory_space<vmem>>, vector<128x1xf32>,
    return
  }
  func.func @transform_0(%arg0: i32) -> (i32, i32) {
    %c0_i32 = arith.constant 0 : i32
    %c0_i32_0 = arith.constant 0 : i32
    return %arg0, %c0_i32 : i32, i32
  }
  func.func @transform_1(%arg0: i32) -> (i32, i32) {
    %c0_i32 = arith.constant 0 : i32
    %c0_i32_0 = arith.constant 0 : i32
    %c0_i32_1 = arith.constant 0 : i32
    return %c0_i32, %c0_i32_0 : i32, i32
  }
  func.func @transform_2(%arg0: i32) -> (i32, i32) {
    %c0_i32 = arith.constant 0 : i32
    %c0_i32_0 = arith.constant 0 : i32
    %c0_i32_1 = arith.constant 0 : i32
    return %c0_i32, %c0_i32_0 : i32, i32
  }
  func.func @transform_3(%arg0: i32) -> (i32, i32) {
    %c0_i32 = arith.constant 0 : i32
    %c0_i32_0 = arith.constant 0 : i32
    %c0_i32_1 = arith.constant 0 : i32
    return %c0_i32, %c0_i32_0 : i32, i32
  }
  func.func @transform_4(%arg0: i32) -> (i32, i32) {
    %c0_i32 = arith.constant 0 : i32
    %c0_i32_0 = arith.constant 0 : i32
    %c0_i32_1 = arith.constant 0 : i32
    return %c0_i32, %c0_i32_0 : i32, i32
  }
  func.func @transform_5(%arg0: i32) -> (i32, i32) {
    %c0_i32 = arith.constant 0 : i32
    %c0_i32_0 = arith.constant 0 : i32
    %c0_i32_1 = arith.constant 0 : i32
    return %c0_i32, %c0_i32_0 : i32, i32
  }
  func.func @transform_6(%arg0: i32) -> (i32, i32) {
    %c0_i32 = arith.constant 0 : i32
    %c0_i32_0 = arith.constant 0 : i32
    %c0_i32_1 = arith.constant 0 : i32
    return %c0_i32, %c0_i32_0 : i32, i32
  }
  func.func @transform_7(%arg0: i32) -> (i32, i32) {
    %c0_i32 = arith.constant 0 : i32
    %c0_i32_0 = arith.constant 0 : i32
    return %arg0, %c0_i32 : i32, i32
  }
}

</mosaic_0001>

<llo_original>
// kernel: tpu_custom_call.1
$region0: #{tpu_custom_call.1}
  #allocation0 [shape = 'u32[]', space=smem, size = 0x4, offset = 0x4, fixed_abs, tag = 'smem constant byte address 0x4 - core index']
  #allocation1 [shape = 'u32[144,128]{1,0:T(1,128)}', space=vmem, size = 0x12000, scoped, tag = 'internal scratch']
  #allocation2 [shape = 'f32[1,1]{1,0:T(1,128)S(1)}', space=vmem, size = 0x200, scoped, tag = 'scoped memory for tpu_custom_call.1']
  %s0 = inlined_call_operand.hbm [shape: bf16[128,1024], index: 0, kind: input, shape index: {}]
  %s1 = inlined_call_operand.hbm [shape: bf16[1024,512], index: 1, kind: input, shape index: {}]
  %s2 = inlined_call_operand.vmem [shape: f32[1,512], index: 2, kind: input, shape index: {}]
  %s3 = inlined_call_operand.hbm [shape: bf16[512,256], index: 3, kind: input, shape index: {}]
  %s4 = inlined_call_operand.vmem [shape: f32[1,256], index: 4, kind: input, shape index: {}]
  %s5 = inlined_call_operand.vmem [shape: bf16[1,256], index: 5, kind: input, shape index: {}]
  %s6 = inlined_call_operand.<no memory space> [shape: f32[1,1], index: 6, kind: input, shape index: {}]
  %s7 = inlined_call_operand.vmem [shape: f32[128,1], index: 7, kind: output, shape index: {}]
  %s8 = sld [smem:[#allocation0]]
  $region50: #{tpu_custom_call.1} parent=0
    _
  %s10 = ssub.s32 1, %s8
  %s11 = scalar_select 0, %s10, %s8
  %v12 = vstv %s6
  %13 = vst [vmem:[#allocation2] sm:$0x1] %v12
  $region1: #{tpu_custom_call.1} parent=0
    #allocation3 [shape = 'u8[262144]{0}', space=vmem, size = 0x40000, scoped, tag = 'input window, operand 0, single buffered']
    #allocation4 [shape = 's32[1]{0}', space=sflag, size = 0x4, scoped, tag = 'scoped memory for tpu_custom_call.1']
    #allocation5 [shape = 'u8[1048576]{0}', space=vmem, size = 0x100000, scoped, tag = 'input window, operand 1, single buffered']
    #allocation6 [shape = 's32[1]{0}', space=sflag, size = 0x4, scoped, tag = 'scoped memory for tpu_custom_call.1']
    #allocation7 [shape = 'u8[262144]{0}', space=vmem, size = 0x40000, scoped, tag = 'input window, operand 3, single buffered']
    %14 = vsyncpa [#allocation4], 0
    %15 = vsyncpa [#allocation6], 0
    // Predicated region
    $region2: #{tpu_custom_call.1} parent=1 // pred_check
      _
    $region3: #{tpu_custom_call.1} parent=1 // pred_check_branch
      %17 = sbr.rel (0) target = $region5
    $region4: #{tpu_custom_call.1} parent=1 // pred_region
      %s19 = ssub.s32 8192, 8192
      %20 = vsyncadd [#allocation4], %s19
      %s21 = sshll.u32 [#allocation3], 4
      %s22 = int_to_ptr.vmem [resolvable:$true] %s21
      %27 = dma.hbm_to_vmem [thread:$0]  %s0, 8192, %s22, [#allocation4], 512, 512, 32
    $region5: #{tpu_custom_call.1} parent=1 // pred_fallthru
      _
    // Predicated region
    $region6: #{tpu_custom_call.1} parent=1 // pred_check
      _
    $region7: #{tpu_custom_call.1} parent=1 // pred_check_branch
      %29 = sbr.rel (0) target = $region9
    $region8: #{tpu_custom_call.1} parent=1 // pred_region
      %s31 = ssub.s32 32768, 32768
      %32 = vsyncadd [#allocation6], %s31
      %s33 = sshll.u32 [#allocation5], 4
      %s34 = int_to_ptr.vmem [resolvable:$true] %s33
      %39 = dma.hbm_to_vmem [thread:$0]  %s1, 32768, %s34, [#allocation6], 256, 256, 16
    $region9: #{tpu_custom_call.1} parent=1 // pred_fallthru
      _
    // Predicated region
    $region10: #{tpu_custom_call.1} parent=1 // pred_check
      _
    $region11: #{tpu_custom_call.1} parent=1 // pred_check_branch
      %41 = sbr.rel (0) target = $region13
    $region12: #{tpu_custom_call.1} parent=1 // pred_region
      _
    $region13: #{tpu_custom_call.1} parent=1 // pred_fallthru
      _
    // Predicated region
    $region14: #{tpu_custom_call.1} parent=1 // pred_check
      _
    $region15: #{tpu_custom_call.1} parent=1 // pred_check_branch
      %43 = sbr.rel (0) target = $region17
    $region16: #{tpu_custom_call.1} parent=1 // pred_region
      %s45 = ssub.s32 8192, 8192
      %46 = vsyncadd [#allocation6], %s45
      %s47 = sshll.u32 [#allocation7], 4
      %s48 = int_to_ptr.vmem [resolvable:$true] %s47
      %53 = dma.hbm_to_vmem [thread:$0]  %s3, 8192, %s48, [#allocation6], 128, 128, 8
    $region17: #{tpu_custom_call.1} parent=1 // pred_fallthru
      _
    // Predicated region
    $region18: #{tpu_custom_call.1} parent=1 // pred_check
      _
    $region19: #{tpu_custom_call.1} parent=1 // pred_check_branch
      %55 = sbr.rel (0) target = $region21
    $region20: #{tpu_custom_call.1} parent=1 // pred_region
      _
    $region21: #{tpu_custom_call.1} parent=1 // pred_fallthru
      _
    // Predicated region
    $region22: #{tpu_custom_call.1} parent=1 // pred_check
      _
    $region23: #{tpu_custom_call.1} parent=1 // pred_check_branch
      %57 = sbr.rel (0) target = $region25
    $region24: #{tpu_custom_call.1} parent=1 // pred_region
      _
    $region25: #{tpu_custom_call.1} parent=1 // pred_fallthru
      _
    // Predicated region
    $region26: #{tpu_custom_call.1} parent=1 // pred_check
      _
    $region27: #{tpu_custom_call.1} parent=1 // pred_check_branch
      %59 = sbr.rel (0) target = $region29
    $region28: #{tpu_custom_call.1} parent=1 // pred_region
      _
    $region29: #{tpu_custom_call.1} parent=1 // pred_fallthru
      _
    // Predicated region
    $region30: #{tpu_custom_call.1} parent=1 // pred_check
      _
    $region31: #{tpu_custom_call.1} parent=1 // pred_check_branch
      %61 = sbr.rel (0) target = $region33
    $region32: #{tpu_custom_call.1} parent=1 // pred_region
      %62 = dma.done [#allocation4], 8192
    $region33: #{tpu_custom_call.1} parent=1 // pred_fallthru
      _
    // Predicated region
    $region34: #{tpu_custom_call.1} parent=1 // pred_check
      _
    $region35: #{tpu_custom_call.1} parent=1 // pred_check_branch
      %64 = sbr.rel (0) target = $region37
    $region36: #{tpu_custom_call.1} parent=1 // pred_region
      %65 = dma.done [#allocation6], 32768
    $region37: #{tpu_custom_call.1} parent=1 // pred_fallthru
      _
    // Predicated region
    $region38: #{tpu_custom_call.1} parent=1 // pred_check
      _
    $region39: #{tpu_custom_call.1} parent=1 // pred_check_branch
      %67 = sbr.rel (0) target = $region41
    $region40: #{tpu_custom_call.1} parent=1 // pred_region
      %68 = dma.done [#allocation6], 8192
    $region41: #{tpu_custom_call.1} parent=1 // pred_fallthru
      _
    %v69 = vld [vmem:[#allocation3] sm:$0xff]
    %v70 = vld [vmem:[#allocation3 + $0x8] sm:$0xff]
    %v71 = vld [vmem:[#allocation3 + $0x10] sm:$0xff]
    %v72 = vld [vmem:[#allocation3 + $0x18] sm:$0xff]
    %v73 = vld [vmem:[#allocation3 + $0x20] sm:$0xff]
    %v74 = vld [vmem:[#allocation3 + $0x28] sm:$0xff]
    %v75 = vld [vmem:[#allocation3 + $0x30] sm:$0xff]
    %v76 = vld [vmem:[#allocation3 + $0x38] sm:$0xff]
    %v77 = vld [vmem:[#allocation3 + $0x40] sm:$0xff]
    %v78 = vld [vmem:[#allocation3 + $0x48] sm:$0xff]
    %v79 = vld [vmem:[#allocation3 + $0x50] sm:$0xff]
    %v80 = vld [vmem:[#allocation3 + $0x58] sm:$0xff]
    %v81 = vld [vmem:[#allocation3 + $0x60] sm:$0xff]
    %v82 = vld [vmem:[#allocation3 + $0x68] sm:$0xff]
    %v83 = vld [vmem:[#allocation3 + $0x70] sm:$0xff]
    %v84 = vld [vmem:[#allocation3 + $0x78] sm:$0xff]
    %v85 = vld [vmem:[#allocation3 + $0x80] sm:$0xff]
    %v86 = vld [vmem:[#allocation3 + $0x88] sm:$0xff]
    %v87 = vld [vmem:[#allocation3 + $0x90] sm:$0xff]
    %v88 = vld [vmem:[#allocation3 + $0x98] sm:$0xff]
    %v89 = vld [vmem:[#allocation3 + $0xa0] sm:$0xff]
    %v90 = vld [vmem:[#allocation3 + $0xa8] sm:$0xff]
    %v91 = vld [vmem:[#allocation3 + $0xb0] sm:$0xff]
    %v92 = vld [vmem:[#allocation3 + $0xb8] sm:$0xff]
    %v93 = vld [vmem:[#allocation3 + $0xc0] sm:$0xff]
    %v94 = vld [vmem:[#allocation3 + $0xc8] sm:$0xff]
    %v95 = vld [vmem:[#allocation3 + $0xd0] sm:$0xff]
    %v96 = vld [vmem:[#allocation3 + $0xd8] sm:$0xff]
    %v97 = vld [vmem:[#allocation3 + $0xe0] sm:$0xff]
    %v98 = vld [vmem:[#allocation3 + $0xe8] sm:$0xff]
    %v99 = vld [vmem:[#allocation3 + $0xf0] sm:$0xff]
    %v100 = vld [vmem:[#allocation3 + $0xf8] sm:$0xff]
    %v101 = vld [vmem:[#allocation3 + $0x100] sm:$0xff]
    %v102 = vld [vmem:[#allocation3 + $0x108] sm:$0xff]
    %v103 = vld [vmem:[#allocation3 + $0x110] sm:$0xff]
    %v104 = vld [vmem:[#allocation3 + $0x118] sm:$0xff]
    %v105 = vld [vmem:[#allocation3 + $0x120] sm:$0xff]
    %v106 = vld [vmem:[#allocation3 + $0x128] sm:$0xff]
    %v107 = vld [vmem:[#allocation3 + $0x130] sm:$0xff]
    %v108 = vld [vmem:[#allocation3 + $0x138] sm:$0xff]
    %v109 = vld [vmem:[#allocation3 + $0x140] sm:$0xff]
    %v110 = vld [vmem:[#allocation3 + $0x148] sm:$0xff]
    %v111 = vld [vmem:[#allocation3 + $0x150] sm:$0xff]
    %v112 = vld [vmem:[#allocation3 + $0x158] sm:$0xff]
    %v113 = vld [vmem:[#allocation3 + $0x160] sm:$0xff]
    %v114 = vld [vmem:[#allocation3 + $0x168] sm:$0xff]
    %v115 = vld [vmem:[#allocation3 + $0x170] sm:$0xff]
    %v116 = vld [vmem:[#allocation3 + $0x178] sm:$0xff]
    %v117 = vld [vmem:[#allocation3 + $0x180] sm:$0xff]
    %v118 = vld [vmem:[#allocation3 + $0x188] sm:$0xff]
    %v119 = vld [vmem:[#allocation3 + $0x190] sm:$0xff]
    %v120 = vld [vmem:[#allocation3 + $0x198] sm:$0xff]
    %v121 = vld [vmem:[#allocation3 + $0x1a0] sm:$0xff]
    %v122 = vld [vmem:[#allocation3 + $0x1a8] sm:$0xff]
    %v123 = vld [vmem:[#allocation3 + $0x1b0] sm:$0xff]
    %v124 = vld [vmem:[#allocation3 + $0x1b8] sm:$0xff]
    %v125 = vld [vmem:[#allocation3 + $0x1c0] sm:$0xff]
    %v126 = vld [vmem:[#allocation3 + $0x1c8] sm:$0xff]
    %v127 = vld [vmem:[#allocation3 + $0x1d0] sm:$0xff]
    %v128 = vld [vmem:[#allocation3 + $0x1d8] sm:$0xff]
    %v129 = vld [vmem:[#allocation3 + $0x1e0] sm:$0xff]
    %v130 = vld [vmem:[#allocation3 + $0x1e8] sm:$0xff]
    %v131 = vld [vmem:[#allocation3 + $0x1f0] sm:$0xff]
    %v132 = vld [vmem:[#allocation3 + $0x1f8] sm:$0xff]
    %v133 = vld [vmem:[#allocation5] sm:$0xff]
    %v134 = vld [vmem:[#allocation5 + $0x8] sm:$0xff]
    %v135 = vld [vmem:[#allocation5 + $0x10] sm:$0xff]
    %v136 = vld [vmem:[#allocation5 + $0x18] sm:$0xff]
    %v137 = vld [vmem:[#allocation5 + $0x20] sm:$0xff]
    %v138 = vld [vmem:[#allocation5 + $0x28] sm:$0xff]
    %v139 = vld [vmem:[#allocation5 + $0x30] sm:$0xff]
    %v140 = vld [vmem:[#allocation5 + $0x38] sm:$0xff]
    %v141 = vld [vmem:[#allocation5 + $0x40] sm:$0xff]
    %v142 = vld [vmem:[#allocation5 + $0x48] sm:$0xff]
    %v143 = vld [vmem:[#allocation5 + $0x50] sm:$0xff]
    %v144 = vld [vmem:[#allocation5 + $0x58] sm:$0xff]
    %v145 = vld [vmem:[#allocation5 + $0x60] sm:$0xff]
    %v146 = vld [vmem:[#allocation5 + $0x68] sm:$0xff]
    %v147 = vld [vmem:[#allocation5 + $0x70] sm:$0xff]
    %v148 = vld [vmem:[#allocation5 + $0x78] sm:$0xff]
    %v149 = vld [vmem:[#allocation5 + $0x80] sm:$0xff]
    %v150 = vld [vmem:[#allocation5 + $0x88] sm:$0xff]
    %v151 = vld [vmem:[#allocation5 + $0x90] sm:$0xff]
    %v152 = vld [vmem:[#allocation5 + $0x98] sm:$0xff]
    %v153 = vld [vmem:[#allocation5 + $0xa0] sm:$0xff]
    %v154 = vld [vmem:[#allocation5 + $0xa8] sm:$0xff]
    %v155 = vld [vmem:[#allocation5 + $0xb0] sm:$0xff]
    %v156 = vld [vmem:[#allocation5 + $0xb8] sm:$0xff]
    %v157 = vld [vmem:[#allocation5 + $0xc0] sm:$0xff]
    %v158 = vld [vmem:[#allocation5 + $0xc8] sm:$0xff]
    %v159 = vld [vmem:[#allocation5 + $0xd0] sm:$0xff]
    %v160 = vld [vmem:[#allocation5 + $0xd8] sm:$0xff]
    %v161 = vld [vmem:[#allocation5 + $0xe0] sm:$0xff]
    %v162 = vld [vmem:[#allocation5 + $0xe8] sm:$0xff]
    %v163 = vld [vmem:[#allocation5 + $0xf0] sm:$0xff]
    %v164 = vld [vmem:[#allocation5 + $0xf8] sm:$0xff]
    %v165 = vld [vmem:[#allocation5 + $0x100] sm:$0xff]
    %v166 = vld [vmem:[#allocation5 + $0x108] sm:$0xff]
    %v167 = vld [vmem:[#allocation5 + $0x110] sm:$0xff]
    %v168 = vld [vmem:[#allocation5 + $0x118] sm:$0xff]
    %v169 = vld [vmem:[#allocation5 + $0x120] sm:$0xff]
    %v170 = vld [vmem:[#allocation5 + $0x128] sm:$0xff]
    %v171 = vld [vmem:[#allocation5 + $0x130] sm:$0xff]
    %v172 = vld [vmem:[#allocation5 + $0x138] sm:$0xff]
    %v173 = vld [vmem:[#allocation5 + $0x140] sm:$0xff]
    %v174 = vld [vmem:[#allocation5 + $0x148] sm:$0xff]
    %v175 = vld [vmem:[#allocation5 + $0x150] sm:$0xff]
    %v176 = vld [vmem:[#allocation5 + $0x158] sm:$0xff]
    %v177 = vld [vmem:[#allocation5 + $0x160] sm:$0xff]
    %v178 = vld [vmem:[#allocation5 + $0x168] sm:$0xff]
    %v179 = vld [vmem:[#allocation5 + $0x170] sm:$0xff]
    %v180 = vld [vmem:[#allocation5 + $0x178] sm:$0xff]
    %v181 = vld [vmem:[#allocation5 + $0x180] sm:$0xff]
    %v182 = vld [vmem:[#allocation5 + $0x188] sm:$0xff]
    %v183 = vld [vmem:[#allocation5 + $0x190] sm:$0xff]
    %v184 = vld [vmem:[#allocation5 + $0x198] sm:$0xff]
    %v185 = vld [vmem:[#allocation5 + $0x1a0] sm:$0xff]
    %v186 = vld [vmem:[#allocation5 + $0x1a8] sm:$0xff]
    %v187 = vld [vmem:[#allocation5 + $0x1b0] sm:$0xff]
    %v188 = vld [vmem:[#allocation5 + $0x1b8] sm:$0xff]
    %v189 = vld [vmem:[#allocation5 + $0x1c0] sm:$0xff]
    %v190 = vld [vmem:[#allocation5 + $0x1c8] sm:$0xff]
    %v191 = vld [vmem:[#allocation5 + $0x1d0] sm:$0xff]
    %v192 = vld [vmem:[#allocation5 + $0x1d8] sm:$0xff]
    %v193 = vld [vmem:[#allocation5 + $0x1e0] sm:$0xff]
    %v194 = vld [vmem:[#allocation5 + $0x1e8] sm:$0xff]
    %v195 = vld [vmem:[#allocation5 + $0x1f0] sm:$0xff]
    %v196 = vld [vmem:[#allocation5 + $0x1f8] sm:$0xff]
    %v197 = vld [vmem:[#allocation5 + $0x200] sm:$0xff]
    %v198 = vld [vmem:[#allocation5 + $0x208] sm:$0xff]
    %v199 = vld [vmem:[#allocation5 + $0x210] sm:$0xff]
    %v200 = vld [vmem:[#allocation5 + $0x218] sm:$0xff]
    %v201 = vld [vmem:[#allocation5 + $0x220] sm:$0xff]
    %v202 = vld [vmem:[#allocation5 + $0x228] sm:$0xff]
    %v203 = vld [vmem:[#allocation5 + $0x230] sm:$0xff]
    %v204 = vld [vmem:[#allocation5 + $0x238] sm:$0xff]
    %v205 = vld [vmem:[#allocation5 + $0x240] sm:$0xff]
    %v206 = vld [vmem:[#allocation5 + $0x248] sm:$0xff]
    %v207 = vld [vmem:[#allocation5 + $0x250] sm:$0xff]
    %v208 = vld [vmem:[#allocation5 + $0x258] sm:$0xff]
    %v209 = vld [vmem:[#allocation5 + $0x260] sm:$0xff]
    %v210 = vld [vmem:[#allocation5 + $0x268] sm:$0xff]
    %v211 = vld [vmem:[#allocation5 + $0x270] sm:$0xff]
    %v212 = vld [vmem:[#allocation5 + $0x278] sm:$0xff]
    %v213 = vld [vmem:[#allocation5 + $0x280] sm:$0xff]
    %v214 = vld [vmem:[#allocation5 + $0x288] sm:$0xff]
    %v215 = vld [vmem:[#allocation5 + $0x290] sm:$0xff]
    %v216 = vld [vmem:[#allocation5 + $0x298] sm:$0xff]
    %v217 = vld [vmem:[#allocation5 + $0x2a0] sm:$0xff]
    %v218 = vld [vmem:[#allocation5 + $0x2a8] sm:$0xff]
    %v219 = vld [vmem:[#allocation5 + $0x2b0] sm:$0xff]
    %v220 = vld [vmem:[#allocation5 + $0x2b8] sm:$0xff]
    %v221 = vld [vmem:[#allocation5 + $0x2c0] sm:$0xff]
    %v222 = vld [vmem:[#allocation5 + $0x2c8] sm:$0xff]
    %v223 = vld [vmem:[#allocation5 + $0x2d0] sm:$0xff]
    %v224 = vld [vmem:[#allocation5 + $0x2d8] sm:$0xff]
    %v225 = vld [vmem:[#allocation5 + $0x2e0] sm:$0xff]
    %v226 = vld [vmem:[#allocation5 + $0x2e8] sm:$0xff]
    %v227 = vld [vmem:[#allocation5 + $0x2f0] sm:$0xff]
    %v228 = vld [vmem:[#allocation5 + $0x2f8] sm:$0xff]
    %v229 = vld [vmem:[#allocation5 + $0x300] sm:$0xff]
    %v230 = vld [vmem:[#allocation5 + $0x308] sm:$0xff]
    %v231 = vld [vmem:[#allocation5 + $0x310] sm:$0xff]
    %v232 = vld [vmem:[#allocation5 + $0x318] sm:$0xff]
    %v233 = vld [vmem:[#allocation5 + $0x320] sm:$0xff]
    %v234 = vld [vmem:[#allocation5 + $0x328] sm:$0xff]
    %v235 = vld [vmem:[#allocation5 + $0x330] sm:$0xff]
    %v236 = vld [vmem:[#allocation5 + $0x338] sm:$0xff]
    %v237 = vld [vmem:[#allocation5 + $0x340] sm:$0xff]
    %v238 = vld [vmem:[#allocation5 + $0x348] sm:$0xff]
    %v239 = vld [vmem:[#allocation5 + $0x350] sm:$0xff]
    %v240 = vld [vmem:[#allocation5 + $0x358] sm:$0xff]
    %v241 = vld [vmem:[#allocation5 + $0x360] sm:$0xff]
    %v242 = vld [vmem:[#allocation5 + $0x368] sm:$0xff]
    %v243 = vld [vmem:[#allocation5 + $0x370] sm:$0xff]
    %v244 = vld [vmem:[#allocation5 + $0x378] sm:$0xff]
    %v245 = vld [vmem:[#allocation5 + $0x380] sm:$0xff]
    %v246 = vld [vmem:[#allocation5 + $0x388] sm:$0xff]
    %v247 = vld [vmem:[#allocation5 + $0x390] sm:$0xff]
    %v248 = vld [vmem:[#allocation5 + $0x398] sm:$0xff]
    %v249 = vld [vmem:[#allocation5 + $0x3a0] sm:$0xff]
    %v250 = vld [vmem:[#allocation5 + $0x3a8] sm:$0xff]
    %v251 = vld [vmem:[#allocation5 + $0x3b0] sm:$0xff]
    %v252 = vld [vmem:[#allocation5 + $0x3b8] sm:$0xff]
    %v253 = vld [vmem:[#allocation5 + $0x3c0] sm:$0xff]
    %v254 = vld [vmem:[#allocation5 + $0x3c8] sm:$0xff]
    %v255 = vld [vmem:[#allocation5 + $0x3d0] sm:$0xff]
    %v256 = vld [vmem:[#allocation5 + $0x3d8] sm:$0xff]
    %v257 = vld [vmem:[#allocation5 + $0x3e0] sm:$0xff]
    %v258 = vld [vmem:[#allocation5 + $0x3e8] sm:$0xff]
    %v259 = vld [vmem:[#allocation5 + $0x3f0] sm:$0xff]
    %v260 = vld [vmem:[#allocation5 + $0x3f8] sm:$0xff]
    %v261 = vld [vmem:[#allocation5 + $0x400] sm:$0xff]
    %v262 = vld [vmem:[#allocation5 + $0x408] sm:$0xff]
    %v263 = vld [vmem:[#allocation5 + $0x410] sm:$0xff]
    %v264 = vld [vmem:[#allocation5 + $0x418] sm:$0xff]
    %v265 = vld [vmem:[#allocation5 + $0x420] sm:$0xff]
    %v266 = vld [vmem:[#allocation5 + $0x428] sm:$0xff]
    %v267 = vld [vmem:[#allocation5 + $0x430] sm:$0xff]
    %v268 = vld [vmem:[#allocation5 + $0x438] sm:$0xff]
    %v269 = vld [vmem:[#allocation5 + $0x440] sm:$0xff]
    %v270 = vld [vmem:[#allocation5 + $0x448] sm:$0xff]
    %v271 = vld [vmem:[#allocation5 + $0x450] sm:$0xff]
    %v272 = vld [vmem:[#allocation5 + $0x458] sm:$0xff]
    %v273 = vld [vmem:[#allocation5 + $0x460] sm:$0xff]
    %v274 = vld [vmem:[#allocation5 + $0x468] sm:$0xff]
    %v275 = vld [vmem:[#allocation5 + $0x470] sm:$0xff]
    %v276 = vld [vmem:[#allocation5 + $0x478] sm:$0xff]
    %v277 = vld [vmem:[#allocation5 + $0x480] sm:$0xff]
    %v278 = vld [vmem:[#allocation5 + $0x488] sm:$0xff]
    %v279 = vld [vmem:[#allocation5 + $0x490] sm:$0xff]
    %v280 = vld [vmem:[#allocation5 + $0x498] sm:$0xff]
    %v281 = vld [vmem:[#allocation5 + $0x4a0] sm:$0xff]
    %v282 = vld [vmem:[#allocation5 + $0x4a8] sm:$0xff]
    %v283 = vld [vmem:[#allocation5 + $0x4b0] sm:$0xff]
    %v284 = vld [vmem:[#allocation5 + $0x4b8] sm:$0xff]
    %v285 = vld [vmem:[#allocation5 + $0x4c0] sm:$0xff]
    %v286 = vld [vmem:[#allocation5 + $0x4c8] sm:$0xff]
    %v287 = vld [vmem:[#allocation5 + $0x4d0] sm:$0xff]
    %v288 = vld [vmem:[#allocation5 + $0x4d8] sm:$0xff]
    %v289 = vld [vmem:[#allocation5 + $0x4e0] sm:$0xff]
    %v290 = vld [vmem:[#allocation5 + $0x4e8] sm:$0xff]
    %v291 = vld [vmem:[#allocation5 + $0x4f0] sm:$0xff]
    %v292 = vld [vmem:[#allocation5 + $0x4f8] sm:$0xff]
    %v293 = vld [vmem:[#allocation5 + $0x500] sm:$0xff]
    %v294 = vld [vmem:[#allocation5 + $0x508] sm:$0xff]
    %v295 = vld [vmem:[#allocation5 + $0x510] sm:$0xff]
    %v296 = vld [vmem:[#allocation5 + $0x518] sm:$0xff]
    %v297 = vld [vmem:[#allocation5 + $0x520] sm:$0xff]
    %v298 = vld [vmem:[#allocation5 + $0x528] sm:$0xff]
    %v299 = vld [vmem:[#allocation5 + $0x530] sm:$0xff]
    %v300 = vld [vmem:[#allocation5 + $0x538] sm:$0xff]
    %v301 = vld [vmem:[#allocation5 + $0x540] sm:$0xff]
    %v302 = vld [vmem:[#allocation5 + $0x548] sm:$0xff]
    %v303 = vld [vmem:[#allocation5 + $0x550] sm:$0xff]
    %v304 = vld [vmem:[#allocation5 + $0x558] sm:$0xff]
    %v305 = vld [vmem:[#allocation5 + $0x560] sm:$0xff]
    %v306 = vld [vmem:[#allocation5 + $0x568] sm:$0xff]
    %v307 = vld [vmem:[#allocation5 + $0x570] sm:$0xff]
    %v308 = vld [vmem:[#allocation5 + $0x578] sm:$0xff]
    %v309 = vld [vmem:[#allocation5 + $0x580] sm:$0xff]
    %v310 = vld [vmem:[#allocation5 + $0x588] sm:$0xff]
    %v311 = vld [vmem:[#allocation5 + $0x590] sm:$0xff]
    %v312 = vld [vmem:[#allocation5 + $0x598] sm:$0xff]
    %v313 = vld [vmem:[#allocation5 + $0x5a0] sm:$0xff]
    %v314 = vld [vmem:[#allocation5 + $0x5a8] sm:$0xff]
    %v315 = vld [vmem:[#allocation5 + $0x5b0] sm:$0xff]
    %v316 = vld [vmem:[#allocation5 + $0x5b8] sm:$0xff]
    %v317 = vld [vmem:[#allocation5 + $0x5c0] sm:$0xff]
    %v318 = vld [vmem:[#allocation5 + $0x5c8] sm:$0xff]
    %v319 = vld [vmem:[#allocation5 + $0x5d0] sm:$0xff]
    %v320 = vld [vmem:[#allocation5 + $0x5d8] sm:$0xff]
    %v321 = vld [vmem:[#allocation5 + $0x5e0] sm:$0xff]
    %v322 = vld [vmem:[#allocation5 + $0x5e8] sm:$0xff]
    %v323 = vld [vmem:[#allocation5 + $0x5f0] sm:$0xff]
    %v324 = vld [vmem:[#allocation5 + $0x5f8] sm:$0xff]
    %v325 = vld [vmem:[#allocation5 + $0x600] sm:$0xff]
    %v326 = vld [vmem:[#allocation5 + $0x608] sm:$0xff]
    %v327 = vld [vmem:[#allocation5 + $0x610] sm:$0xff]
    %v328 = vld [vmem:[#allocation5 + $0x618] sm:$0xff]
    %v329 = vld [vmem:[#allocation5 + $0x620] sm:$0xff]
    %v330 = vld [vmem:[#allocation5 + $0x628] sm:$0xff]
    %v331 = vld [vmem:[#allocation5 + $0x630] sm:$0xff]
    %v332 = vld [vmem:[#allocation5 + $0x638] sm:$0xff]
    %v333 = vld [vmem:[#allocation5 + $0x640] sm:$0xff]
    %v334 = vld [vmem:[#allocation5 + $0x648] sm:$0xff]
    %v335 = vld [vmem:[#allocation5 + $0x650] sm:$0xff]
    %v336 = vld [vmem:[#allocation5 + $0x658] sm:$0xff]
    %v337 = vld [vmem:[#allocation5 + $0x660] sm:$0xff]
    %v338 = vld [vmem:[#allocation5 + $0x668] sm:$0xff]
    %v339 = vld [vmem:[#allocation5 + $0x670] sm:$0xff]
    %v340 = vld [vmem:[#allocation5 + $0x678] sm:$0xff]
    %v341 = vld [vmem:[#allocation5 + $0x680] sm:$0xff]
    %v342 = vld [vmem:[#allocation5 + $0x688] sm:$0xff]
    %v343 = vld [vmem:[#allocation5 + $0x690] sm:$0xff]
    %v344 = vld [vmem:[#allocation5 + $0x698] sm:$0xff]
    %v345 = vld [vmem:[#allocation5 + $0x6a0] sm:$0xff]
    %v346 = vld [vmem:[#allocation5 + $0x6a8] sm:$0xff]
    %v347 = vld [vmem:[#allocation5 + $0x6b0] sm:$0xff]
    %v348 = vld [vmem:[#allocation5 + $0x6b8] sm:$0xff]
    %v349 = vld [vmem:[#allocation5 + $0x6c0] sm:$0xff]
    %v350 = vld [vmem:[#allocation5 + $0x6c8] sm:$0xff]
    %v351 = vld [vmem:[#allocation5 + $0x6d0] sm:$0xff]
    %v352 = vld [vmem:[#allocation5 + $0x6d8] sm:$0xff]
    %v353 = vld [vmem:[#allocation5 + $0x6e0] sm:$0xff]
    %v354 = vld [vmem:[#allocation5 + $0x6e8] sm:$0xff]
    %v355 = vld [vmem:[#allocation5 + $0x6f0] sm:$0xff]
    %v356 = vld [vmem:[#allocation5 + $0x6f8] sm:$0xff]
    %v357 = vld [vmem:[#allocation5 + $0x700] sm:$0xff]
    %v358 = vld [vmem:[#allocation5 + $0x708] sm:$0xff]
    %v359 = vld [vmem:[#allocation5 + $0x710] sm:$0xff]
    %v360 = vld [vmem:[#allocation5 + $0x718] sm:$0xff]
    %v361 = vld [vmem:[#allocation5 + $0x720] sm:$0xff]
    %v362 = vld [vmem:[#allocation5 + $0x728] sm:$0xff]
    %v363 = vld [vmem:[#allocation5 + $0x730] sm:$0xff]
    %v364 = vld [vmem:[#allocation5 + $0x738] sm:$0xff]
    %v365 = vld [vmem:[#allocation5 + $0x740] sm:$0xff]
    %v366 = vld [vmem:[#allocation5 + $0x748] sm:$0xff]
    %v367 = vld [vmem:[#allocation5 + $0x750] sm:$0xff]
    %v368 = vld [vmem:[#allocation5 + $0x758] sm:$0xff]
    %v369 = vld [vmem:[#allocation5 + $0x760] sm:$0xff]
    %v370 = vld [vmem:[#allocation5 + $0x768] sm:$0xff]
    %v371 = vld [vmem:[#allocation5 + $0x770] sm:$0xff]
    %v372 = vld [vmem:[#allocation5 + $0x778] sm:$0xff]
    %v373 = vld [vmem:[#allocation5 + $0x780] sm:$0xff]
    %v374 = vld [vmem:[#allocation5 + $0x788] sm:$0xff]
    %v375 = vld [vmem:[#allocation5 + $0x790] sm:$0xff]
    %v376 = vld [vmem:[#allocation5 + $0x798] sm:$0xff]
    %v377 = vld [vmem:[#allocation5 + $0x7a0] sm:$0xff]
    %v378 = vld [vmem:[#allocation5 + $0x7a8] sm:$0xff]
    %v379 = vld [vmem:[#allocation5 + $0x7b0] sm:$0xff]
    %v380 = vld [vmem:[#allocation5 + $0x7b8] sm:$0xff]
    %v381 = vld [vmem:[#allocation5 + $0x7c0] sm:$0xff]
    %v382 = vld [vmem:[#allocation5 + $0x7c8] sm:$0xff]
    %v383 = vld [vmem:[#allocation5 + $0x7d0] sm:$0xff]
    %v384 = vld [vmem:[#allocation5 + $0x7d8] sm:$0xff]
    %v385 = vld [vmem:[#allocation5 + $0x7e0] sm:$0xff]
    %v386 = vld [vmem:[#allocation5 + $0x7e8] sm:$0xff]
    %v387 = vld [vmem:[#allocation5 + $0x7f0] sm:$0xff]
    %v388 = vld [vmem:[#allocation5 + $0x7f8] sm:$0xff]
    %v389 = vld [vmem:[%s2] sm:$0xf]
    %v391 = vlaneseq
    %v392 = vshrl.u32 %v391, 7
    %v393 = vsub.s32 0, %v392
    %v394 = vrot.slane %v389, %v393
    %v395 = vlaneseq
    %v396 = vshrl.u32 %v395, 7
    %v397 = vsub.s32 1, %v396
    %v398 = vrot.slane %v389, %v397
    %v399 = vlaneseq
    %v400 = vshrl.u32 %v399, 7
    %v401 = vsub.s32 2, %v400
    %v402 = vrot.slane %v389, %v401
    %v403 = vlaneseq
    %v404 = vshrl.u32 %v403, 7
    %v405 = vsub.s32 3, %v404
    %v406 = vrot.slane %v389, %v405
    %v475 = vunpack.c.l.b16 %v69
    %v476 = vunpack.c.h.b16 %v69
    %v477 = vunpack.c.l.b16 %v70
    %v478 = vunpack.c.h.b16 %v70
    %v479 = vunpack.c.l.b16 %v71
    %v480 = vunpack.c.h.b16 %v71
    %v481 = vunpack.c.l.b16 %v72
    %v482 = vunpack.c.h.b16 %v72
    %v483 = vunpack.c.l.b16 %v73
    %v484 = vunpack.c.h.b16 %v73
    %v485 = vunpack.c.l.b16 %v74
    %v486 = vunpack.c.h.b16 %v74
    %v487 = vunpack.c.l.b16 %v75
    %v488 = vunpack.c.h.b16 %v75
    %v489 = vunpack.c.l.b16 %v76
    %v490 = vunpack.c.h.b16 %v76
    %v491 = vunpack.c.l.b16 %v77
    %v492 = vunpack.c.h.b16 %v77
    %v493 = vunpack.c.l.b16 %v78
    %v494 = vunpack.c.h.b16 %v78
    %v495 = vunpack.c.l.b16 %v79
    %v496 = vunpack.c.h.b16 %v79
    %v497 = vunpack.c.l.b16 %v80
    %v498 = vunpack.c.h.b16 %v80
    %v499 = vunpack.c.l.b16 %v81
    %v500 = vunpack.c.h.b16 %v81
    %v501 = vunpack.c.l.b16 %v82
    %v502 = vunpack.c.h.b16 %v82
    %v503 = vunpack.c.l.b16 %v83
    %v504 = vunpack.c.h.b16 %v83
    %v505 = vunpack.c.l.b16 %v84
    %v506 = vunpack.c.h.b16 %v84
    %v507 = vunpack.c.l.b16 %v85
    %v508 = vunpack.c.h.b16 %v85
    %v509 = vunpack.c.l.b16 %v86
    %v510 = vunpack.c.h.b16 %v86
    %v511 = vunpack.c.l.b16 %v87
    %v512 = vunpack.c.h.b16 %v87
    %v513 = vunpack.c.l.b16 %v88
    %v514 = vunpack.c.h.b16 %v88
    %v515 = vunpack.c.l.b16 %v89
    %v516 = vunpack.c.h.b16 %v89
    %v517 = vunpack.c.l.b16 %v90
    %v518 = vunpack.c.h.b16 %v90
    %v519 = vunpack.c.l.b16 %v91
    %v520 = vunpack.c.h.b16 %v91
    %v521 = vunpack.c.l.b16 %v92
    %v522 = vunpack.c.h.b16 %v92
    %v523 = vunpack.c.l.b16 %v93
    %v524 = vunpack.c.h.b16 %v93
    %v525 = vunpack.c.l.b16 %v94
    %v526 = vunpack.c.h.b16 %v94
    %v527 = vunpack.c.l.b16 %v95
    %v528 = vunpack.c.h.b16 %v95
    %v529 = vunpack.c.l.b16 %v96
    %v530 = vunpack.c.h.b16 %v96
    %v531 = vunpack.c.l.b16 %v97
    %v532 = vunpack.c.h.b16 %v97
    %v533 = vunpack.c.l.b16 %v98
    %v534 = vunpack.c.h.b16 %v98
    %v535 = vunpack.c.l.b16 %v99
    %v536 = vunpack.c.h.b16 %v99
    %v537 = vunpack.c.l.b16 %v100
    %v538 = vunpack.c.h.b16 %v100
    %v539 = vunpack.c.l.b16 %v101
    %v540 = vunpack.c.h.b16 %v101
    %v541 = vunpack.c.l.b16 %v102
    %v542 = vunpack.c.h.b16 %v102
    %v543 = vunpack.c.l.b16 %v103
    %v544 = vunpack.c.h.b16 %v103
    %v545 = vunpack.c.l.b16 %v104
    %v546 = vunpack.c.h.b16 %v104
    %v547 = vunpack.c.l.b16 %v105
    %v548 = vunpack.c.h.b16 %v105
    %v549 = vunpack.c.l.b16 %v106
    %v550 = vunpack.c.h.b16 %v106
    %v551 = vunpack.c.l.b16 %v107
    %v552 = vunpack.c.h.b16 %v107
    %v553 = vunpack.c.l.b16 %v108
    %v554 = vunpack.c.h.b16 %v108
    %v555 = vunpack.c.l.b16 %v109
    %v556 = vunpack.c.h.b16 %v109
    %v557 = vunpack.c.l.b16 %v110
    %v558 = vunpack.c.h.b16 %v110
    %v559 = vunpack.c.l.b16 %v111
    %v560 = vunpack.c.h.b16 %v111
    %v561 = vunpack.c.l.b16 %v112
    %v562 = vunpack.c.h.b16 %v112
    %v563 = vunpack.c.l.b16 %v113
    %v564 = vunpack.c.h.b16 %v113
    %v565 = vunpack.c.l.b16 %v114
    %v566 = vunpack.c.h.b16 %v114
    %v567 = vunpack.c.l.b16 %v115
    %v568 = vunpack.c.h.b16 %v115
    %v569 = vunpack.c.l.b16 %v116
    %v570 = vunpack.c.h.b16 %v116
    %v571 = vunpack.c.l.b16 %v117
    %v572 = vunpack.c.h.b16 %v117
    %v573 = vunpack.c.l.b16 %v118
    %v574 = vunpack.c.h.b16 %v118
    %v575 = vunpack.c.l.b16 %v119
    %v576 = vunpack.c.h.b16 %v119
    %v577 = vunpack.c.l.b16 %v120
    %v578 = vunpack.c.h.b16 %v120
    %v579 = vunpack.c.l.b16 %v121
    %v580 = vunpack.c.h.b16 %v121
    %v581 = vunpack.c.l.b16 %v122
    %v582 = vunpack.c.h.b16 %v122
    %v583 = vunpack.c.l.b16 %v123
    %v584 = vunpack.c.h.b16 %v123
    %v585 = vunpack.c.l.b16 %v124
    %v586 = vunpack.c.h.b16 %v124
    %v587 = vunpack.c.l.b16 %v125
    %v588 = vunpack.c.h.b16 %v125
    %v589 = vunpack.c.l.b16 %v126
    %v590 = vunpack.c.h.b16 %v126
    %v591 = vunpack.c.l.b16 %v127
    %v592 = vunpack.c.h.b16 %v127
    %v593 = vunpack.c.l.b16 %v128
    %v594 = vunpack.c.h.b16 %v128
    %v595 = vunpack.c.l.b16 %v129
    %v596 = vunpack.c.h.b16 %v129
    %v597 = vunpack.c.l.b16 %v130
    %v598 = vunpack.c.h.b16 %v130
    %v599 = vunpack.c.l.b16 %v131
    %v600 = vunpack.c.h.b16 %v131
    %v601 = vunpack.c.l.b16 %v132
    %v602 = vunpack.c.h.b16 %v132
    %v603 = vpack.c.b16 %v483, %v475
    %v604 = vpack.c.b16 %v484, %v476
    %v605 = vpack.c.b16 %v485, %v477
    %v606 = vpack.c.b16 %v486, %v478
    %v607 = vpack.c.b16 %v487, %v479
    %v608 = vpack.c.b16 %v488, %v480
    %v609 = vpack.c.b16 %v489, %v481
    %v610 = vpack.c.b16 %v490, %v482
    %v611 = vpack.c.b16 %v499, %v491
    %v612 = vpack.c.b16 %v500, %v492
    %v613 = vpack.c.b16 %v501, %v493
    %v614 = vpack.c.b16 %v502, %v494
    %v615 = vpack.c.b16 %v503, %v495
    %v616 = vpack.c.b16 %v504, %v496
    %v617 = vpack.c.b16 %v505, %v497
    %v618 = vpack.c.b16 %v506, %v498
    %v619 = vpack.c.b16 %v515, %v507
    %v620 = vpack.c.b16 %v516, %v508
    %v621 = vpack.c.b16 %v517, %v509
    %v622 = vpack.c.b16 %v518, %v510
    %v623 = vpack.c.b16 %v519, %v511
    %v624 = vpack.c.b16 %v520, %v512
    %v625 = vpack.c.b16 %v521, %v513
    %v626 = vpack.c.b16 %v522, %v514
    %v627 = vpack.c.b16 %v531, %v523
    %v628 = vpack.c.b16 %v532, %v524
    %v629 = vpack.c.b16 %v533, %v525
    %v630 = vpack.c.b16 %v534, %v526
    %v631 = vpack.c.b16 %v535, %v527
    %v632 = vpack.c.b16 %v536, %v528
    %v633 = vpack.c.b16 %v537, %v529
    %v634 = vpack.c.b16 %v538, %v530
    %v635 = vpack.c.b16 %v547, %v539
    %v636 = vpack.c.b16 %v548, %v540
    %v637 = vpack.c.b16 %v549, %v541
    %v638 = vpack.c.b16 %v550, %v542
    %v639 = vpack.c.b16 %v551, %v543
    %v640 = vpack.c.b16 %v552, %v544
    %v641 = vpack.c.b16 %v553, %v545
    %v642 = vpack.c.b16 %v554, %v546
    %v643 = vpack.c.b16 %v563, %v555
    %v644 = vpack.c.b16 %v564, %v556
    %v645 = vpack.c.b16 %v565, %v557
    %v646 = vpack.c.b16 %v566, %v558
    %v647 = vpack.c.b16 %v567, %v559
    %v648 = vpack.c.b16 %v568, %v560
    %v649 = vpack.c.b16 %v569, %v561
    %v650 = vpack.c.b16 %v570, %v562
    %v651 = vpack.c.b16 %v579, %v571
    %v652 = vpack.c.b16 %v580, %v572
    %v653 = vpack.c.b16 %v581, %v573
    %v654 = vpack.c.b16 %v582, %v574
    %v655 = vpack.c.b16 %v583, %v575
    %v656 = vpack.c.b16 %v584, %v576
    %v657 = vpack.c.b16 %v585, %v577
    %v658 = vpack.c.b16 %v586, %v578
    %v659 = vpack.c.b16 %v595, %v587
    %v660 = vpack.c.b16 %v596, %v588
    %v661 = vpack.c.b16 %v597, %v589
    %v662 = vpack.c.b16 %v598, %v590
    %v663 = vpack.c.b16 %v599, %v591
    %v664 = vpack.c.b16 %v600, %v592
    %v665 = vpack.c.b16 %v601, %v593
    %v666 = vpack.c.b16 %v602, %v594
    %v987 = vunpack.c.l.b16 %v133
    %v988 = vunpack.c.h.b16 %v133
    %v989 = vunpack.c.l.b16 %v134
    %v990 = vunpack.c.h.b16 %v134
    %v991 = vunpack.c.l.b16 %v135
    %v992 = vunpack.c.h.b16 %v135
    %v993 = vunpack.c.l.b16 %v136
    %v994 = vunpack.c.h.b16 %v136
    %v995 = vunpack.c.l.b16 %v137
    %v996 = vunpack.c.h.b16 %v137
    %v997 = vunpack.c.l.b16 %v138
    %v998 = vunpack.c.h.b16 %v138
    %v999 = vunpack.c.l.b16 %v139
    %v1000 = vunpack.c.h.b16 %v139
    %v1001 = vunpack.c.l.b16 %v140
    %v1002 = vunpack.c.h.b16 %v140
    %v1003 = vunpack.c.l.b16 %v141
    %v1004 = vunpack.c.h.b16 %v141
    %v1005 = vunpack.c.l.b16 %v142
    %v1006 = vunpack.c.h.b16 %v142
    %v1007 = vunpack.c.l.b16 %v143
    %v1008 = vunpack.c.h.b16 %v143
    %v1009 = vunpack.c.l.b16 %v144
    %v1010 = vunpack.c.h.b16 %v144
    %v1011 = vunpack.c.l.b16 %v145
    %v1012 = vunpack.c.h.b16 %v145
    %v1013 = vunpack.c.l.b16 %v146
    %v1014 = vunpack.c.h.b16 %v146
    %v1015 = vunpack.c.l.b16 %v147
    %v1016 = vunpack.c.h.b16 %v147
    %v1017 = vunpack.c.l.b16 %v148
    %v1018 = vunpack.c.h.b16 %v148
    %v1019 = vunpack.c.l.b16 %v149
    %v1020 = vunpack.c.h.b16 %v149
    %v1021 = vunpack.c.l.b16 %v150
    %v1022 = vunpack.c.h.b16 %v150
    %v1023 = vunpack.c.l.b16 %v151
    %v1024 = vunpack.c.h.b16 %v151
    %v1025 = vunpack.c.l.b16 %v152
    %v1026 = vunpack.c.h.b16 %v152
    %v1027 = vunpack.c.l.b16 %v153
    %v1028 = vunpack.c.h.b16 %v153
    %v1029 = vunpack.c.l.b16 %v154
    %v1030 = vunpack.c.h.b16 %v154
    %v1031 = vunpack.c.l.b16 %v155
    %v1032 = vunpack.c.h.b16 %v155
    %v1033 = vunpack.c.l.b16 %v156
    %v1034 = vunpack.c.h.b16 %v156
    %v1035 = vunpack.c.l.b16 %v157
    %v1036 = vunpack.c.h.b16 %v157
    %v1037 = vunpack.c.l.b16 %v158
    %v1038 = vunpack.c.h.b16 %v158
    %v1039 = vunpack.c.l.b16 %v159
    %v1040 = vunpack.c.h.b16 %v159
    %v1041 = vunpack.c.l.b16 %v160
    %v1042 = vunpack.c.h.b16 %v160
    %v1043 = vunpack.c.l.b16 %v161
    %v1044 = vunpack.c.h.b16 %v161
    %v1045 = vunpack.c.l.b16 %v162
    %v1046 = vunpack.c.h.b16 %v162
    %v1047 = vunpack.c.l.b16 %v163
    %v1048 = vunpack.c.h.b16 %v163
    %v1049 = vunpack.c.l.b16 %v164
    %v1050 = vunpack.c.h.b16 %v164
    %v1051 = vunpack.c.l.b16 %v165
    %v1052 = vunpack.c.h.b16 %v165
    %v1053 = vunpack.c.l.b16 %v166
    %v1054 = vunpack.c.h.b16 %v166
    %v1055 = vunpack.c.l.b16 %v167
    %v1056 = vunpack.c.h.b16 %v167
    %v1057 = vunpack.c.l.b16 %v168
    %v1058 = vunpack.c.h.b16 %v168
    %v1059 = vunpack.c.l.b16 %v169
    %v1060 = vunpack.c.h.b16 %v169
    %v1061 = vunpack.c.l.b16 %v170
    %v1062 = vunpack.c.h.b16 %v170
    %v1063 = vunpack.c.l.b16 %v171
    %v1064 = vunpack.c.h.b16 %v171
    %v1065 = vunpack.c.l.b16 %v172
    %v1066 = vunpack.c.h.b16 %v172
    %v1067 = vunpack.c.l.b16 %v173
    %v1068 = vunpack.c.h.b16 %v173
    %v1069 = vunpack.c.l.b16 %v174
    %v1070 = vunpack.c.h.b16 %v174
    %v1071 = vunpack.c.l.b16 %v175
    %v1072 = vunpack.c.h.b16 %v175
    %v1073 = vunpack.c.l.b16 %v176
    %v1074 = vunpack.c.h.b16 %v176
    %v1075 = vunpack.c.l.b16 %v177
    %v1076 = vunpack.c.h.b16 %v177
    %v1077 = vunpack.c.l.b16 %v178
    %v1078 = vunpack.c.h.b16 %v178
    %v1079 = vunpack.c.l.b16 %v179
    %v1080 = vunpack.c.h.b16 %v179
    %v1081 = vunpack.c.l.b16 %v180
    %v1082 = vunpack.c.h.b16 %v180
    %v1083 = vunpack.c.l.b16 %v181
    %v1084 = vunpack.c.h.b16 %v181
    %v1085 = vunpack.c.l.b16 %v182
    %v1086 = vunpack.c.h.b16 %v182
    %v1087 = vunpack.c.l.b16 %v183
    %v1088 = vunpack.c.h.b16 %v183
    %v1089 = vunpack.c.l.b16 %v184
    %v1090 = vunpack.c.h.b16 %v184
    %v1091 = vunpack.c.l.b16 %v185
    %v1092 = vunpack.c.h.b16 %v185
    %v1093 = vunpack.c.l.b16 %v186
    %v1094 = vunpack.c.h.b16 %v186
    %v1095 = vunpack.c.l.b16 %v187
    %v1096 = vunpack.c.h.b16 %v187
    %v1097 = vunpack.c.l.b16 %v188
    %v1098 = vunpack.c.h.b16 %v188
    %v1099 = vunpack.c.l.b16 %v189
    %v1100 = vunpack.c.h.b16 %v189
    %v1101 = vunpack.c.l.b16 %v190
    %v1102 = vunpack.c.h.b16 %v190
    %v1103 = vunpack.c.l.b16 %v191
    %v1104 = vunpack.c.h.b16 %v191
    %v1105 = vunpack.c.l.b16 %v192
    %v1106 = vunpack.c.h.b16 %v192
    %v1107 = vunpack.c.l.b16 %v193
    %v1108 = vunpack.c.h.b16 %v193
    %v1109 = vunpack.c.l.b16 %v194
    %v1110 = vunpack.c.h.b16 %v194
    %v1111 = vunpack.c.l.b16 %v195
    %v1112 = vunpack.c.h.b16 %v195
    %v1113 = vunpack.c.l.b16 %v196
    %v1114 = vunpack.c.h.b16 %v196
    %v1115 = vunpack.c.l.b16 %v197
    %v1116 = vunpack.c.h.b16 %v197
    %v1117 = vunpack.c.l.b16 %v198
    %v1118 = vunpack.c.h.b16 %v198
    %v1119 = vunpack.c.l.b16 %v199
    %v1120 = vunpack.c.h.b16 %v199
    %v1121 = vunpack.c.l.b16 %v200
    %v1122 = vunpack.c.h.b16 %v200
    %v1123 = vunpack.c.l.b16 %v201
    %v1124 = vunpack.c.h.b16 %v201
    %v1125 = vunpack.c.l.b16 %v202
    %v1126 = vunpack.c.h.b16 %v202
    %v1127 = vunpack.c.l.b16 %v203
    %v1128 = vunpack.c.h.b16 %v203
    %v1129 = vunpack.c.l.b16 %v204
    %v1130 = vunpack.c.h.b16 %v204
    %v1131 = vunpack.c.l.b16 %v205
    %v1132 = vunpack.c.h.b16 %v205
    %v1133 = vunpack.c.l.b16 %v206
    %v1134 = vunpack.c.h.b16 %v206
    %v1135 = vunpack.c.l.b16 %v207
    %v1136 = vunpack.c.h.b16 %v207
    %v1137 = vunpack.c.l.b16 %v208
    %v1138 = vunpack.c.h.b16 %v208
    %v1139 = vunpack.c.l.b16 %v209
    %v1140 = vunpack.c.h.b16 %v209
    %v1141 = vunpack.c.l.b16 %v210
    %v1142 = vunpack.c.h.b16 %v210
    %v1143 = vunpack.c.l.b16 %v211
    %v1144 = vunpack.c.h.b16 %v211
    %v1145 = vunpack.c.l.b16 %v212
    %v1146 = vunpack.c.h.b16 %v212
    %v1147 = vunpack.c.l.b16 %v213
    %v1148 = vunpack.c.h.b16 %v213
    %v1149 = vunpack.c.l.b16 %v214
    %v1150 = vunpack.c.h.b16 %v214
    %v1151 = vunpack.c.l.b16 %v215
    %v1152 = vunpack.c.h.b16 %v215
    %v1153 = vunpack.c.l.b16 %v216
    %v1154 = vunpack.c.h.b16 %v216
    %v1155 = vunpack.c.l.b16 %v217
    %v1156 = vunpack.c.h.b16 %v217
    %v1157 = vunpack.c.l.b16 %v218
    %v1158 = vunpack.c.h.b16 %v218
    %v1159 = vunpack.c.l.b16 %v219
    %v1160 = vunpack.c.h.b16 %v219
    %v1161 = vunpack.c.l.b16 %v220
    %v1162 = vunpack.c.h.b16 %v220
    %v1163 = vunpack.c.l.b16 %v221
    %v1164 = vunpack.c.h.b16 %v221
    %v1165 = vunpack.c.l.b16 %v222
    %v1166 = vunpack.c.h.b16 %v222
    %v1167 = vunpack.c.l.b16 %v223
    %v1168 = vunpack.c.h.b16 %v223
    %v1169 = vunpack.c.l.b16 %v224
    %v1170 = vunpack.c.h.b16 %v224
    %v1171 = vunpack.c.l.b16 %v225
    %v1172 = vunpack.c.h.b16 %v225
    %v1173 = vunpack.c.l.b16 %v226
    %v1174 = vunpack.c.h.b16 %v226
    %v1175 = vunpack.c.l.b16 %v227
    %v1176 = vunpack.c.h.b16 %v227
    %v1177 = vunpack.c.l.b16 %v228
    %v1178 = vunpack.c.h.b16 %v228
    %v1179 = vunpack.c.l.b16 %v229
    %v1180 = vunpack.c.h.b16 %v229
    %v1181 = vunpack.c.l.b16 %v230
    %v1182 = vunpack.c.h.b16 %v230
    %v1183 = vunpack.c.l.b16 %v231
    %v1184 = vunpack.c.h.b16 %v231
    %v1185 = vunpack.c.l.b16 %v232
    %v1186 = vunpack.c.h.b16 %v232
    %v1187 = vunpack.c.l.b16 %v233
    %v1188 = vunpack.c.h.b16 %v233
    %v1189 = vunpack.c.l.b16 %v234
    %v1190 = vunpack.c.h.b16 %v234
    %v1191 = vunpack.c.l.b16 %v235
    %v1192 = vunpack.c.h.b16 %v235
    %v1193 = vunpack.c.l.b16 %v236
    %v1194 = vunpack.c.h.b16 %v236
    %v1195 = vunpack.c.l.b16 %v237
    %v1196 = vunpack.c.h.b16 %v237
    %v1197 = vunpack.c.l.b16 %v238
    %v1198 = vunpack.c.h.b16 %v238
    %v1199 = vunpack.c.l.b16 %v239
    %v1200 = vunpack.c.h.b16 %v239
    %v1201 = vunpack.c.l.b16 %v240
    %v1202 = vunpack.c.h.b16 %v240
    %v1203 = vunpack.c.l.b16 %v241
    %v1204 = vunpack.c.h.b16 %v241
    %v1205 = vunpack.c.l.b16 %v242
    %v1206 = vunpack.c.h.b16 %v242
    %v1207 = vunpack.c.l.b16 %v243
    %v1208 = vunpack.c.h.b16 %v243
    %v1209 = vunpack.c.l.b16 %v244
    %v1210 = vunpack.c.h.b16 %v244
    %v1211 = vunpack.c.l.b16 %v245
    %v1212 = vunpack.c.h.b16 %v245
    %v1213 = vunpack.c.l.b16 %v246
    %v1214 = vunpack.c.h.b16 %v246
    %v1215 = vunpack.c.l.b16 %v247
    %v1216 = vunpack.c.h.b16 %v247
    %v1217 = vunpack.c.l.b16 %v248
    %v1218 = vunpack.c.h.b16 %v248
    %v1219 = vunpack.c.l.b16 %v249
    %v1220 = vunpack.c.h.b16 %v249
    %v1221 = vunpack.c.l.b16 %v250
    %v1222 = vunpack.c.h.b16 %v250
    %v1223 = vunpack.c.l.b16 %v251
    %v1224 = vunpack.c.h.b16 %v251
    %v1225 = vunpack.c.l.b16 %v252
    %v1226 = vunpack.c.h.b16 %v252
    %v1227 = vunpack.c.l.b16 %v253
    %v1228 = vunpack.c.h.b16 %v253
    %v1229 = vunpack.c.l.b16 %v254
    %v1230 = vunpack.c.h.b16 %v254
    %v1231 = vunpack.c.l.b16 %v255
    %v1232 = vunpack.c.h.b16 %v255
    %v1233 = vunpack.c.l.b16 %v256
    %v1234 = vunpack.c.h.b16 %v256
    %v1235 = vunpack.c.l.b16 %v257
    %v1236 = vunpack.c.h.b16 %v257
    %v1237 = vunpack.c.l.b16 %v258
    %v1238 = vunpack.c.h.b16 %v258
    %v1239 = vunpack.c.l.b16 %v259
    %v1240 = vunpack.c.h.b16 %v259
    %v1241 = vunpack.c.l.b16 %v260
    %v1242 = vunpack.c.h.b16 %v260
    %v1243 = vunpack.c.l.b16 %v261
    %v1244 = vunpack.c.h.b16 %v261
    %v1245 = vunpack.c.l.b16 %v262
    %v1246 = vunpack.c.h.b16 %v262
    %v1247 = vunpack.c.l.b16 %v263
    %v1248 = vunpack.c.h.b16 %v263
    %v1249 = vunpack.c.l.b16 %v264
    %v1250 = vunpack.c.h.b16 %v264
    %v1251 = vunpack.c.l.b16 %v265
    %v1252 = vunpack.c.h.b16 %v265
    %v1253 = vunpack.c.l.b16 %v266
    %v1254 = vunpack.c.h.b16 %v266
    %v1255 = vunpack.c.l.b16 %v267
    %v1256 = vunpack.c.h.b16 %v267
    %v1257 = vunpack.c.l.b16 %v268
    %v1258 = vunpack.c.h.b16 %v268
    %v1259 = vunpack.c.l.b16 %v269
    %v1260 = vunpack.c.h.b16 %v269
    %v1261 = vunpack.c.l.b16 %v270
    %v1262 = vunpack.c.h.b16 %v270
    %v1263 = vunpack.c.l.b16 %v271
    %v1264 = vunpack.c.h.b16 %v271
    %v1265 = vunpack.c.l.b16 %v272
    %v1266 = vunpack.c.h.b16 %v272
    %v1267 = vunpack.c.l.b16 %v273
    %v1268 = vunpack.c.h.b16 %v273
    %v1269 = vunpack.c.l.b16 %v274
    %v1270 = vunpack.c.h.b16 %v274
    %v1271 = vunpack.c.l.b16 %v275
    %v1272 = vunpack.c.h.b16 %v275
    %v1273 = vunpack.c.l.b16 %v276
    %v1274 = vunpack.c.h.b16 %v276
    %v1275 = vunpack.c.l.b16 %v277
    %v1276 = vunpack.c.h.b16 %v277
    %v1277 = vunpack.c.l.b16 %v278
    %v1278 = vunpack.c.h.b16 %v278
    %v1279 = vunpack.c.l.b16 %v279
    %v1280 = vunpack.c.h.b16 %v279
    %v1281 = vunpack.c.l.b16 %v280
    %v1282 = vunpack.c.h.b16 %v280
    %v1283 = vunpack.c.l.b16 %v281
    %v1284 = vunpack.c.h.b16 %v281
    %v1285 = vunpack.c.l.b16 %v282
    %v1286 = vunpack.c.h.b16 %v282
    %v1287 = vunpack.c.l.b16 %v283
    %v1288 = vunpack.c.h.b16 %v283
    %v1289 = vunpack.c.l.b16 %v284
    %v1290 = vunpack.c.h.b16 %v284
    %v1291 = vunpack.c.l.b16 %v285
    %v1292 = vunpack.c.h.b16 %v285
    %v1293 = vunpack.c.l.b16 %v286
    %v1294 = vunpack.c.h.b16 %v286
    %v1295 = vunpack.c.l.b16 %v287
    %v1296 = vunpack.c.h.b16 %v287
    %v1297 = vunpack.c.l.b16 %v288
    %v1298 = vunpack.c.h.b16 %v288
    %v1299 = vunpack.c.l.b16 %v289
    %v1300 = vunpack.c.h.b16 %v289
    %v1301 = vunpack.c.l.b16 %v290
    %v1302 = vunpack.c.h.b16 %v290
    %v1303 = vunpack.c.l.b16 %v291
    %v1304 = vunpack.c.h.b16 %v291
    %v1305 = vunpack.c.l.b16 %v292
    %v1306 = vunpack.c.h.b16 %v292
    %v1307 = vunpack.c.l.b16 %v293
    %v1308 = vunpack.c.h.b16 %v293
    %v1309 = vunpack.c.l.b16 %v294
    %v1310 = vunpack.c.h.b16 %v294
    %v1311 = vunpack.c.l.b16 %v295
    %v1312 = vunpack.c.h.b16 %v295
    %v1313 = vunpack.c.l.b16 %v296
    %v1314 = vunpack.c.h.b16 %v296
    %v1315 = vunpack.c.l.b16 %v297
    %v1316 = vunpack.c.h.b16 %v297
    %v1317 = vunpack.c.l.b16 %v298
    %v1318 = vunpack.c.h.b16 %v298
    %v1319 = vunpack.c.l.b16 %v299
    %v1320 = vunpack.c.h.b16 %v299
    %v1321 = vunpack.c.l.b16 %v300
    %v1322 = vunpack.c.h.b16 %v300
    %v1323 = vunpack.c.l.b16 %v301
    %v1324 = vunpack.c.h.b16 %v301
    %v1325 = vunpack.c.l.b16 %v302
    %v1326 = vunpack.c.h.b16 %v302
    %v1327 = vunpack.c.l.b16 %v303
    %v1328 = vunpack.c.h.b16 %v303
    %v1329 = vunpack.c.l.b16 %v304
    %v1330 = vunpack.c.h.b16 %v304
    %v1331 = vunpack.c.l.b16 %v305
    %v1332 = vunpack.c.h.b16 %v305
    %v1333 = vunpack.c.l.b16 %v306
    %v1334 = vunpack.c.h.b16 %v306
    %v1335 = vunpack.c.l.b16 %v307
    %v1336 = vunpack.c.h.b16 %v307
    %v1337 = vunpack.c.l.b16 %v308
    %v1338 = vunpack.c.h.b16 %v308
    %v1339 = vunpack.c.l.b16 %v309
    %v1340 = vunpack.c.h.b16 %v309
    %v1341 = vunpack.c.l.b16 %v310
    %v1342 = vunpack.c.h.b16 %v310
    %v1343 = vunpack.c.l.b16 %v311
    %v1344 = vunpack.c.h.b16 %v311
    %v1345 = vunpack.c.l.b16 %v312
    %v1346 = vunpack.c.h.b16 %v312
    %v1347 = vunpack.c.l.b16 %v313
    %v1348 = vunpack.c.h.b16 %v313
    %v1349 = vunpack.c.l.b16 %v314
    %v1350 = vunpack.c.h.b16 %v314
    %v1351 = vunpack.c.l.b16 %v315
    %v1352 = vunpack.c.h.b16 %v315
    %v1353 = vunpack.c.l.b16 %v316
    %v1354 = vunpack.c.h.b16 %v316
    %v1355 = vunpack.c.l.b16 %v317
    %v1356 = vunpack.c.h.b16 %v317
    %v1357 = vunpack.c.l.b16 %v318
    %v1358 = vunpack.c.h.b16 %v318
    %v1359 = vunpack.c.l.b16 %v319
    %v1360 = vunpack.c.h.b16 %v319
    %v1361 = vunpack.c.l.b16 %v320
    %v1362 = vunpack.c.h.b16 %v320
    %v1363 = vunpack.c.l.b16 %v321
    %v1364 = vunpack.c.h.b16 %v321
    %v1365 = vunpack.c.l.b16 %v322
    %v1366 = vunpack.c.h.b16 %v322
    %v1367 = vunpack.c.l.b16 %v323
    %v1368 = vunpack.c.h.b16 %v323
    %v1369 = vunpack.c.l.b16 %v324
    %v1370 = vunpack.c.h.b16 %v324
    %v1371 = vunpack.c.l.b16 %v325
    %v1372 = vunpack.c.h.b16 %v325
    %v1373 = vunpack.c.l.b16 %v326
    %v1374 = vunpack.c.h.b16 %v326
    %v1375 = vunpack.c.l.b16 %v327
    %v1376 = vunpack.c.h.b16 %v327
    %v1377 = vunpack.c.l.b16 %v328
    %v1378 = vunpack.c.h.b16 %v328
    %v1379 = vunpack.c.l.b16 %v329
    %v1380 = vunpack.c.h.b16 %v329
    %v1381 = vunpack.c.l.b16 %v330
    %v1382 = vunpack.c.h.b16 %v330
    %v1383 = vunpack.c.l.b16 %v331
    %v1384 = vunpack.c.h.b16 %v331
    %v1385 = vunpack.c.l.b16 %v332
    %v1386 = vunpack.c.h.b16 %v332
    %v1387 = vunpack.c.l.b16 %v333
    %v1388 = vunpack.c.h.b16 %v333
    %v1389 = vunpack.c.l.b16 %v334
    %v1390 = vunpack.c.h.b16 %v334
    %v1391 = vunpack.c.l.b16 %v335
    %v1392 = vunpack.c.h.b16 %v335
    %v1393 = vunpack.c.l.b16 %v336
    %v1394 = vunpack.c.h.b16 %v336
    %v1395 = vunpack.c.l.b16 %v337
    %v1396 = vunpack.c.h.b16 %v337
    %v1397 = vunpack.c.l.b16 %v338
    %v1398 = vunpack.c.h.b16 %v338
    %v1399 = vunpack.c.l.b16 %v339
    %v1400 = vunpack.c.h.b16 %v339
    %v1401 = vunpack.c.l.b16 %v340
    %v1402 = vunpack.c.h.b16 %v340
    %v1403 = vunpack.c.l.b16 %v341
    %v1404 = vunpack.c.h.b16 %v341
    %v1405 = vunpack.c.l.b16 %v342
    %v1406 = vunpack.c.h.b16 %v342
    %v1407 = vunpack.c.l.b16 %v343
    %v1408 = vunpack.c.h.b16 %v343
    %v1409 = vunpack.c.l.b16 %v344
    %v1410 = vunpack.c.h.b16 %v344
    %v1411 = vunpack.c.l.b16 %v345
    %v1412 = vunpack.c.h.b16 %v345
    %v1413 = vunpack.c.l.b16 %v346
    %v1414 = vunpack.c.h.b16 %v346
    %v1415 = vunpack.c.l.b16 %v347
    %v1416 = vunpack.c.h.b16 %v347
    %v1417 = vunpack.c.l.b16 %v348
    %v1418 = vunpack.c.h.b16 %v348
    %v1419 = vunpack.c.l.b16 %v349
    %v1420 = vunpack.c.h.b16 %v349
    %v1421 = vunpack.c.l.b16 %v350
    %v1422 = vunpack.c.h.b16 %v350
    %v1423 = vunpack.c.l.b16 %v351
    %v1424 = vunpack.c.h.b16 %v351
    %v1425 = vunpack.c.l.b16 %v352
    %v1426 = vunpack.c.h.b16 %v352
    %v1427 = vunpack.c.l.b16 %v353
    %v1428 = vunpack.c.h.b16 %v353
    %v1429 = vunpack.c.l.b16 %v354
    %v1430 = vunpack.c.h.b16 %v354
    %v1431 = vunpack.c.l.b16 %v355
    %v1432 = vunpack.c.h.b16 %v355
    %v1433 = vunpack.c.l.b16 %v356
    %v1434 = vunpack.c.h.b16 %v356
    %v1435 = vunpack.c.l.b16 %v357
    %v1436 = vunpack.c.h.b16 %v357
    %v1437 = vunpack.c.l.b16 %v358
    %v1438 = vunpack.c.h.b16 %v358
    %v1439 = vunpack.c.l.b16 %v359
    %v1440 = vunpack.c.h.b16 %v359
    %v1441 = vunpack.c.l.b16 %v360
    %v1442 = vunpack.c.h.b16 %v360
    %v1443 = vunpack.c.l.b16 %v361
    %v1444 = vunpack.c.h.b16 %v361
    %v1445 = vunpack.c.l.b16 %v362
    %v1446 = vunpack.c.h.b16 %v362
    %v1447 = vunpack.c.l.b16 %v363
    %v1448 = vunpack.c.h.b16 %v363
    %v1449 = vunpack.c.l.b16 %v364
    %v1450 = vunpack.c.h.b16 %v364
    %v1451 = vunpack.c.l.b16 %v365
    %v1452 = vunpack.c.h.b16 %v365
    %v1453 = vunpack.c.l.b16 %v366
    %v1454 = vunpack.c.h.b16 %v366
    %v1455 = vunpack.c.l.b16 %v367
    %v1456 = vunpack.c.h.b16 %v367
    %v1457 = vunpack.c.l.b16 %v368
    %v1458 = vunpack.c.h.b16 %v368
    %v1459 = vunpack.c.l.b16 %v369
    %v1460 = vunpack.c.h.b16 %v369
    %v1461 = vunpack.c.l.b16 %v370
    %v1462 = vunpack.c.h.b16 %v370
    %v1463 = vunpack.c.l.b16 %v371
    %v1464 = vunpack.c.h.b16 %v371
    %v1465 = vunpack.c.l.b16 %v372
    %v1466 = vunpack.c.h.b16 %v372
    %v1467 = vunpack.c.l.b16 %v373
    %v1468 = vunpack.c.h.b16 %v373
    %v1469 = vunpack.c.l.b16 %v374
    %v1470 = vunpack.c.h.b16 %v374
    %v1471 = vunpack.c.l.b16 %v375
    %v1472 = vunpack.c.h.b16 %v375
    %v1473 = vunpack.c.l.b16 %v376
    %v1474 = vunpack.c.h.b16 %v376
    %v1475 = vunpack.c.l.b16 %v377
    %v1476 = vunpack.c.h.b16 %v377
    %v1477 = vunpack.c.l.b16 %v378
    %v1478 = vunpack.c.h.b16 %v378
    %v1479 = vunpack.c.l.b16 %v379
    %v1480 = vunpack.c.h.b16 %v379
    %v1481 = vunpack.c.l.b16 %v380
    %v1482 = vunpack.c.h.b16 %v380
    %v1483 = vunpack.c.l.b16 %v381
    %v1484 = vunpack.c.h.b16 %v381
    %v1485 = vunpack.c.l.b16 %v382
    %v1486 = vunpack.c.h.b16 %v382
    %v1487 = vunpack.c.l.b16 %v383
    %v1488 = vunpack.c.h.b16 %v383
    %v1489 = vunpack.c.l.b16 %v384
    %v1490 = vunpack.c.h.b16 %v384
    %v1491 = vunpack.c.l.b16 %v385
    %v1492 = vunpack.c.h.b16 %v385
    %v1493 = vunpack.c.l.b16 %v386
    %v1494 = vunpack.c.h.b16 %v386
    %v1495 = vunpack.c.l.b16 %v387
    %v1496 = vunpack.c.h.b16 %v387
    %v1497 = vunpack.c.l.b16 %v388
    %v1498 = vunpack.c.h.b16 %v388
    %v1499 = vpack.c.b16 %v991, %v987
    %v1500 = vpack.c.b16 %v992, %v988
    %v1501 = vpack.c.b16 %v993, %v989
    %v1502 = vpack.c.b16 %v994, %v990
    %v1503 = vpack.c.b16 %v999, %v995
    %v1504 = vpack.c.b16 %v1000, %v996
    %v1505 = vpack.c.b16 %v1001, %v997
    %v1506 = vpack.c.b16 %v1002, %v998
    %v1507 = vpack.c.b16 %v1007, %v1003
    %v1508 = vpack.c.b16 %v1008, %v1004
    %v1509 = vpack.c.b16 %v1009, %v1005
    %v1510 = vpack.c.b16 %v1010, %v1006
    %v1511 = vpack.c.b16 %v1015, %v1011
    %v1512 = vpack.c.b16 %v1016, %v1012
    %v1513 = vpack.c.b16 %v1017, %v1013
    %v1514 = vpack.c.b16 %v1018, %v1014
    %v1515 = vpack.c.b16 %v1023, %v1019
    %v1516 = vpack.c.b16 %v1024, %v1020
    %v1517 = vpack.c.b16 %v1025, %v1021
    %v1518 = vpack.c.b16 %v1026, %v1022
    %v1519 = vpack.c.b16 %v1031, %v1027
    %v1520 = vpack.c.b16 %v1032, %v1028
    %v1521 = vpack.c.b16 %v1033, %v1029
    %v1522 = vpack.c.b16 %v1034, %v1030
    %v1523 = vpack.c.b16 %v1039, %v1035
    %v1524 = vpack.c.b16 %v1040, %v1036
    %v1525 = vpack.c.b16 %v1041, %v1037
    %v1526 = vpack.c.b16 %v1042, %v1038
    %v1527 = vpack.c.b16 %v1047, %v1043
    %v1528 = vpack.c.b16 %v1048, %v1044
    %v1529 = vpack.c.b16 %v1049, %v1045
    %v1530 = vpack.c.b16 %v1050, %v1046
    %v1531 = vpack.c.b16 %v1055, %v1051
    %v1532 = vpack.c.b16 %v1056, %v1052
    %v1533 = vpack.c.b16 %v1057, %v1053
    %v1534 = vpack.c.b16 %v1058, %v1054
    %v1535 = vpack.c.b16 %v1063, %v1059
    %v1536 = vpack.c.b16 %v1064, %v1060
    %v1537 = vpack.c.b16 %v1065, %v1061
    %v1538 = vpack.c.b16 %v1066, %v1062
    %v1539 = vpack.c.b16 %v1071, %v1067
    %v1540 = vpack.c.b16 %v1072, %v1068
    %v1541 = vpack.c.b16 %v1073, %v1069
    %v1542 = vpack.c.b16 %v1074, %v1070
    %v1543 = vpack.c.b16 %v1079, %v1075
    %v1544 = vpack.c.b16 %v1080, %v1076
    %v1545 = vpack.c.b16 %v1081, %v1077
    %v1546 = vpack.c.b16 %v1082, %v1078
    %v1547 = vpack.c.b16 %v1087, %v1083
    %v1548 = vpack.c.b16 %v1088, %v1084
    %v1549 = vpack.c.b16 %v1089, %v1085
    %v1550 = vpack.c.b16 %v1090, %v1086
    %v1551 = vpack.c.b16 %v1095, %v1091
    %v1552 = vpack.c.b16 %v1096, %v1092
    %v1553 = vpack.c.b16 %v1097, %v1093
    %v1554 = vpack.c.b16 %v1098, %v1094
    %v1555 = vpack.c.b16 %v1103, %v1099
    %v1556 = vpack.c.b16 %v1104, %v1100
    %v1557 = vpack.c.b16 %v1105, %v1101
    %v1558 = vpack.c.b16 %v1106, %v1102
    %v1559 = vpack.c.b16 %v1111, %v1107
    %v1560 = vpack.c.b16 %v1112, %v1108
    %v1561 = vpack.c.b16 %v1113, %v1109
    %v1562 = vpack.c.b16 %v1114, %v1110
    %v1563 = vpack.c.b16 %v1119, %v1115
    %v1564 = vpack.c.b16 %v1120, %v1116
    %v1565 = vpack.c.b16 %v1121, %v1117
    %v1566 = vpack.c.b16 %v1122, %v1118
    %v1567 = vpack.c.b16 %v1127, %v1123
    %v1568 = vpack.c.b16 %v1128, %v1124
    %v1569 = vpack.c.b16 %v1129, %v1125
    %v1570 = vpack.c.b16 %v1130, %v1126
    %v1571 = vpack.c.b16 %v1135, %v1131
    %v1572 = vpack.c.b16 %v1136, %v1132
    %v1573 = vpack.c.b16 %v1137, %v1133
    %v1574 = vpack.c.b16 %v1138, %v1134
    %v1575 = vpack.c.b16 %v1143, %v1139
    %v1576 = vpack.c.b16 %v1144, %v1140
    %v1577 = vpack.c.b16 %v1145, %v1141
    %v1578 = vpack.c.b16 %v1146, %v1142
    %v1579 = vpack.c.b16 %v1151, %v1147
    %v1580 = vpack.c.b16 %v1152, %v1148
    %v1581 = vpack.c.b16 %v1153, %v1149
    %v1582 = vpack.c.b16 %v1154, %v1150
    %v1583 = vpack.c.b16 %v1159, %v1155
    %v1584 = vpack.c.b16 %v1160, %v1156
    %v1585 = vpack.c.b16 %v1161, %v1157
    %v1586 = vpack.c.b16 %v1162, %v1158
    %v1587 = vpack.c.b16 %v1167, %v1163
    %v1588 = vpack.c.b16 %v1168, %v1164
    %v1589 = vpack.c.b16 %v1169, %v1165
    %v1590 = vpack.c.b16 %v1170, %v1166
    %v1591 = vpack.c.b16 %v1175, %v1171
    %v1592 = vpack.c.b16 %v1176, %v1172
    %v1593 = vpack.c.b16 %v1177, %v1173
    %v1594 = vpack.c.b16 %v1178, %v1174
    %v1595 = vpack.c.b16 %v1183, %v1179
    %v1596 = vpack.c.b16 %v1184, %v1180
    %v1597 = vpack.c.b16 %v1185, %v1181
    %v1598 = vpack.c.b16 %v1186, %v1182
    %v1599 = vpack.c.b16 %v1191, %v1187
    %v1600 = vpack.c.b16 %v1192, %v1188
    %v1601 = vpack.c.b16 %v1193, %v1189
    %v1602 = vpack.c.b16 %v1194, %v1190
    %v1603 = vpack.c.b16 %v1199, %v1195
    %v1604 = vpack.c.b16 %v1200, %v1196
    %v1605 = vpack.c.b16 %v1201, %v1197
    %v1606 = vpack.c.b16 %v1202, %v1198
    %v1607 = vpack.c.b16 %v1207, %v1203
    %v1608 = vpack.c.b16 %v1208, %v1204
    %v1609 = vpack.c.b16 %v1209, %v1205
    %v1610 = vpack.c.b16 %v1210, %v1206
    %v1611 = vpack.c.b16 %v1215, %v1211
    %v1612 = vpack.c.b16 %v1216, %v1212
    %v1613 = vpack.c.b16 %v1217, %v1213
    %v1614 = vpack.c.b16 %v1218, %v1214
    %v1615 = vpack.c.b16 %v1223, %v1219
    %v1616 = vpack.c.b16 %v1224, %v1220
    %v1617 = vpack.c.b16 %v1225, %v1221
    %v1618 = vpack.c.b16 %v1226, %v1222
    %v1619 = vpack.c.b16 %v1231, %v1227
    %v1620 = vpack.c.b16 %v1232, %v1228
    %v1621 = vpack.c.b16 %v1233, %v1229
    %v1622 = vpack.c.b16 %v1234, %v1230
    %v1623 = vpack.c.b16 %v1239, %v1235
    %v1624 = vpack.c.b16 %v1240, %v1236
    %v1625 = vpack.c.b16 %v1241, %v1237
    %v1626 = vpack.c.b16 %v1242, %v1238
    %v1627 = vpack.c.b16 %v1247, %v1243
    %v1628 = vpack.c.b16 %v1248, %v1244
    %v1629 = vpack.c.b16 %v1249, %v1245
    %v1630 = vpack.c.b16 %v1250, %v1246
    %v1631 = vpack.c.b16 %v1255, %v1251
    %v1632 = vpack.c.b16 %v1256, %v1252
    %v1633 = vpack.c.b16 %v1257, %v1253
    %v1634 = vpack.c.b16 %v1258, %v1254
    %v1635 = vpack.c.b16 %v1263, %v1259
    %v1636 = vpack.c.b16 %v1264, %v1260
    %v1637 = vpack.c.b16 %v1265, %v1261
    %v1638 = vpack.c.b16 %v1266, %v1262
    %v1639 = vpack.c.b16 %v1271, %v1267
    %v1640 = vpack.c.b16 %v1272, %v1268
    %v1641 = vpack.c.b16 %v1273, %v1269
    %v1642 = vpack.c.b16 %v1274, %v1270
    %v1643 = vpack.c.b16 %v1279, %v1275
    %v1644 = vpack.c.b16 %v1280, %v1276
    %v1645 = vpack.c.b16 %v1281, %v1277
    %v1646 = vpack.c.b16 %v1282, %v1278
    %v1647 = vpack.c.b16 %v1287, %v1283
    %v1648 = vpack.c.b16 %v1288, %v1284
    %v1649 = vpack.c.b16 %v1289, %v1285
    %v1650 = vpack.c.b16 %v1290, %v1286
    %v1651 = vpack.c.b16 %v1295, %v1291
    %v1652 = vpack.c.b16 %v1296, %v1292
    %v1653 = vpack.c.b16 %v1297, %v1293
    %v1654 = vpack.c.b16 %v1298, %v1294
    %v1655 = vpack.c.b16 %v1303, %v1299
    %v1656 = vpack.c.b16 %v1304, %v1300
    %v1657 = vpack.c.b16 %v1305, %v1301
    %v1658 = vpack.c.b16 %v1306, %v1302
    %v1659 = vpack.c.b16 %v1311, %v1307
    %v1660 = vpack.c.b16 %v1312, %v1308
    %v1661 = vpack.c.b16 %v1313, %v1309
    %v1662 = vpack.c.b16 %v1314, %v1310
    %v1663 = vpack.c.b16 %v1319, %v1315
    %v1664 = vpack.c.b16 %v1320, %v1316
    %v1665 = vpack.c.b16 %v1321, %v1317
    %v1666 = vpack.c.b16 %v1322, %v1318
    %v1667 = vpack.c.b16 %v1327, %v1323
    %v1668 = vpack.c.b16 %v1328, %v1324
    %v1669 = vpack.c.b16 %v1329, %v1325
    %v1670 = vpack.c.b16 %v1330, %v1326
    %v1671 = vpack.c.b16 %v1335, %v1331
    %v1672 = vpack.c.b16 %v1336, %v1332
    %v1673 = vpack.c.b16 %v1337, %v1333
    %v1674 = vpack.c.b16 %v1338, %v1334
    %v1675 = vpack.c.b16 %v1343, %v1339
    %v1676 = vpack.c.b16 %v1344, %v1340
    %v1677 = vpack.c.b16 %v1345, %v1341
    %v1678 = vpack.c.b16 %v1346, %v1342
    %v1679 = vpack.c.b16 %v1351, %v1347
    %v1680 = vpack.c.b16 %v1352, %v1348
    %v1681 = vpack.c.b16 %v1353, %v1349
    %v1682 = vpack.c.b16 %v1354, %v1350
    %v1683 = vpack.c.b16 %v1359, %v1355
    %v1684 = vpack.c.b16 %v1360, %v1356
    %v1685 = vpack.c.b16 %v1361, %v1357
    %v1686 = vpack.c.b16 %v1362, %v1358
    %v1687 = vpack.c.b16 %v1367, %v1363
    %v1688 = vpack.c.b16 %v1368, %v1364
    %v1689 = vpack.c.b16 %v1369, %v1365
    %v1690 = vpack.c.b16 %v1370, %v1366
    %v1691 = vpack.c.b16 %v1375, %v1371
    %v1692 = vpack.c.b16 %v1376, %v1372
    %v1693 = vpack.c.b16 %v1377, %v1373
    %v1694 = vpack.c.b16 %v1378, %v1374
    %v1695 = vpack.c.b16 %v1383, %v1379
    %v1696 = vpack.c.b16 %v1384, %v1380
    %v1697 = vpack.c.b16 %v1385, %v1381
    %v1698 = vpack.c.b16 %v1386, %v1382
    %v1699 = vpack.c.b16 %v1391, %v1387
    %v1700 = vpack.c.b16 %v1392, %v1388
    %v1701 = vpack.c.b16 %v1393, %v1389
    %v1702 = vpack.c.b16 %v1394, %v1390
    %v1703 = vpack.c.b16 %v1399, %v1395
    %v1704 = vpack.c.b16 %v1400, %v1396
    %v1705 = vpack.c.b16 %v1401, %v1397
    %v1706 = vpack.c.b16 %v1402, %v1398
    %v1707 = vpack.c.b16 %v1407, %v1403
    %v1708 = vpack.c.b16 %v1408, %v1404
    %v1709 = vpack.c.b16 %v1409, %v1405
    %v1710 = vpack.c.b16 %v1410, %v1406
    %v1711 = vpack.c.b16 %v1415, %v1411
    %v1712 = vpack.c.b16 %v1416, %v1412
    %v1713 = vpack.c.b16 %v1417, %v1413
    %v1714 = vpack.c.b16 %v1418, %v1414
    %v1715 = vpack.c.b16 %v1423, %v1419
    %v1716 = vpack.c.b16 %v1424, %v1420
    %v1717 = vpack.c.b16 %v1425, %v1421
    %v1718 = vpack.c.b16 %v1426, %v1422
    %v1719 = vpack.c.b16 %v1431, %v1427
    %v1720 = vpack.c.b16 %v1432, %v1428
    %v1721 = vpack.c.b16 %v1433, %v1429
    %v1722 = vpack.c.b16 %v1434, %v1430
    %v1723 = vpack.c.b16 %v1439, %v1435
    %v1724 = vpack.c.b16 %v1440, %v1436
    %v1725 = vpack.c.b16 %v1441, %v1437
    %v1726 = vpack.c.b16 %v1442, %v1438
    %v1727 = vpack.c.b16 %v1447, %v1443
    %v1728 = vpack.c.b16 %v1448, %v1444
    %v1729 = vpack.c.b16 %v1449, %v1445
    %v1730 = vpack.c.b16 %v1450, %v1446
    %v1731 = vpack.c.b16 %v1455, %v1451
    %v1732 = vpack.c.b16 %v1456, %v1452
    %v1733 = vpack.c.b16 %v1457, %v1453
    %v1734 = vpack.c.b16 %v1458, %v1454
    %v1735 = vpack.c.b16 %v1463, %v1459
    %v1736 = vpack.c.b16 %v1464, %v1460
    %v1737 = vpack.c.b16 %v1465, %v1461
    %v1738 = vpack.c.b16 %v1466, %v1462
    %v1739 = vpack.c.b16 %v1471, %v1467
    %v1740 = vpack.c.b16 %v1472, %v1468
    %v1741 = vpack.c.b16 %v1473, %v1469
    %v1742 = vpack.c.b16 %v1474, %v1470
    %v1743 = vpack.c.b16 %v1479, %v1475
    %v1744 = vpack.c.b16 %v1480, %v1476
    %v1745 = vpack.c.b16 %v1481, %v1477
    %v1746 = vpack.c.b16 %v1482, %v1478
    %v1747 = vpack.c.b16 %v1487, %v1483
    %v1748 = vpack.c.b16 %v1488, %v1484
    %v1749 = vpack.c.b16 %v1489, %v1485
    %v1750 = vpack.c.b16 %v1490, %v1486
    %v1751 = vpack.c.b16 %v1495, %v1491
    %v1752 = vpack.c.b16 %v1496, %v1492
    %v1753 = vpack.c.b16 %v1497, %v1493
    %v1754 = vpack.c.b16 %v1498, %v1494
    %2011 = vmatprep.subr.bf16.mxu0 %v1528
    %2012 = vmatpush1.bf16.msra.mxu0 %v1527
    %2013 = vmatprep.subr.bf16.mxu0 %v1524
    %2014 = vmatpush1.bf16.msra.mxu0 %v1523
    %2015 = vmatprep.subr.bf16.mxu0 %v1520
    %2016 = vmatpush1.bf16.msra.mxu0 %v1519
    %2017 = vmatprep.subr.bf16.mxu0 %v1516
    %2018 = vmatpush1.bf16.msra.mxu0 %v1515
    %2019 = vmatprep.subr.bf16.mxu0 %v1512
    %2020 = vmatpush1.bf16.msra.mxu0 %v1511
    %2021 = vmatprep.subr.bf16.mxu0 %v1508
    %2022 = vmatpush1.bf16.msra.mxu0 %v1507
    %2023 = vmatprep.subr.bf16.mxu0 %v1504
    %2024 = vmatpush1.bf16.msra.mxu0 %v1503
    %2025 = vmatprep.subr.bf16.mxu0 %v1500
    %2026 = vmatpush1.bf16.msra.mxu0 %v1499
    %2027 = vmatprep.subr.bf16.mxu0 %v1560
    %2028 = vmatpush2.bf16.msra.mxu0 %v1559
    %2029 = vmatprep.subr.bf16.mxu0 %v1556
    %2030 = vmatpush2.bf16.msra.mxu0 %v1555
    %2031 = vmatprep.subr.bf16.mxu0 %v1552
    %2032 = vmatpush2.bf16.msra.mxu0 %v1551
    %2033 = vmatprep.subr.bf16.mxu0 %v1548
    %2034 = vmatpush2.bf16.msra.mxu0 %v1547
    %2035 = vmatprep.subr.bf16.mxu0 %v1544
    %2036 = vmatpush2.bf16.msra.mxu0 %v1543
    %2037 = vmatprep.subr.bf16.mxu0 %v1540
    %2038 = vmatpush2.bf16.msra.mxu0 %v1539
    %2039 = vmatprep.subr.bf16.mxu0 %v1536
    %2040 = vmatpush2.bf16.msra.mxu0 %v1535
    %2041 = vmatprep.subr.bf16.mxu0 %v1532
    %2042 = vmatpush2.bf16.msra.mxu0 %v1531
    %2043 = vmatprep.mubr.bf16.mxu0 %v604
    %2044 = vmatmul.mubr.bf16.gmra.mxu0 %v603
    %v2045 = vpop.f32.mrf.mxu0
    %v2046 = vadd.f32 %v394, %v2045
    %v2047 = vpop.f32.mrf.mxu0
    %v2048 = vadd.f32 %v398, %v2047
    %v2049 = vpop.f32.mrf.mxu0
    %v2050 = vadd.f32 %v394, %v2049
    %v2051 = vpop.f32.mrf.mxu0
    %v2052 = vadd.f32 %v398, %v2051
    %2053 = vmatprep.mubr.bf16.mxu0 %v612
    %2054 = vmatmul.mubr.bf16.gmra.mxu0 %v611
    %v2055 = vpop.f32.mrf.mxu0
    %v2056 = vadd.f32 %v394, %v2055
    %v2057 = vpop.f32.mrf.mxu0
    %v2058 = vadd.f32 %v398, %v2057
    %v2059 = vpop.f32.mrf.mxu0
    %v2060 = vadd.f32 %v394, %v2059
    %v2061 = vpop.f32.mrf.mxu0
    %v2062 = vadd.f32 %v398, %v2061
    %2063 = vmatprep.mubr.bf16.mxu0 %v620
    %2064 = vmatmul.mubr.bf16.gmra.mxu0 %v619
    %v2065 = vpop.f32.mrf.mxu0
    %v2066 = vadd.f32 %v394, %v2065
    %v2067 = vpop.f32.mrf.mxu0
    %v2068 = vadd.f32 %v398, %v2067
    %v2069 = vpop.f32.mrf.mxu0
    %v2070 = vadd.f32 %v394, %v2069
    %v2071 = vpop.f32.mrf.mxu0
    %v2072 = vadd.f32 %v398, %v2071
    %2073 = vmatprep.mubr.bf16.mxu0 %v628
    %2074 = vmatmul.mubr.bf16.gmra.mxu0 %v627
    %v2075 = vpop.f32.mrf.mxu0
    %v2076 = vadd.f32 %v394, %v2075
    %v2077 = vpop.f32.mrf.mxu0
    %v2078 = vadd.f32 %v398, %v2077
    %v2079 = vpop.f32.mrf.mxu0
    %v2080 = vadd.f32 %v394, %v2079
    %v2081 = vpop.f32.mrf.mxu0
    %v2082 = vadd.f32 %v398, %v2081
    %2083 = vmatprep.mubr.bf16.mxu0 %v636
    %2084 = vmatmul.mubr.bf16.gmra.mxu0 %v635
    %v2085 = vpop.f32.mrf.mxu0
    %v2086 = vadd.f32 %v394, %v2085
    %v2087 = vpop.f32.mrf.mxu0
    %v2088 = vadd.f32 %v398, %v2087
    %v2089 = vpop.f32.mrf.mxu0
    %v2090 = vadd.f32 %v394, %v2089
    %v2091 = vpop.f32.mrf.mxu0
    %v2092 = vadd.f32 %v398, %v2091
    %2093 = vmatprep.mubr.bf16.mxu0 %v644
    %2094 = vmatmul.mubr.bf16.gmra.mxu0 %v643
    %v2095 = vpop.f32.mrf.mxu0
    %v2096 = vadd.f32 %v394, %v2095
    %v2097 = vpop.f32.mrf.mxu0
    %v2098 = vadd.f32 %v398, %v2097
    %v2099 = vpop.f32.mrf.mxu0
    %v2100 = vadd.f32 %v394, %v2099
    %v2101 = vpop.f32.mrf.mxu0
    %v2102 = vadd.f32 %v398, %v2101
    %2103 = vmatprep.mubr.bf16.mxu0 %v652
    %2104 = vmatmul.mubr.bf16.gmra.mxu0 %v651
    %v2105 = vpop.f32.mrf.mxu0
    %v2106 = vadd.f32 %v394, %v2105
    %v2107 = vpop.f32.mrf.mxu0
    %v2108 = vadd.f32 %v398, %v2107
    %v2109 = vpop.f32.mrf.mxu0
    %v2110 = vadd.f32 %v394, %v2109
    %v2111 = vpop.f32.mrf.mxu0
    %v2112 = vadd.f32 %v398, %v2111
    %2113 = vmatprep.mubr.bf16.mxu0 %v660
    %2114 = vmatmul.mubr.bf16.gmra.mxu0 %v659
    %v2115 = vpop.f32.mrf.mxu0
    %v2116 = vadd.f32 %v394, %v2115
    %v2117 = vpop.f32.mrf.mxu0
    %v2118 = vadd.f32 %v398, %v2117
    %v2119 = vpop.f32.mrf.mxu0
    %v2120 = vadd.f32 %v394, %v2119
    %v2121 = vpop.f32.mrf.mxu0
    %v2122 = vadd.f32 %v398, %v2121
    %2123 = vdwg.mxu0
    %2124 = vmatprep.subr.bf16.mxu0 %v1592
    %2125 = vmatpush1.bf16.msra.mxu0 %v1591
    %2126 = vmatprep.subr.bf16.mxu0 %v1588
    %2127 = vmatpush1.bf16.msra.mxu0 %v1587
    %2128 = vmatprep.subr.bf16.mxu0 %v1584
    %2129 = vmatpush1.bf16.msra.mxu0 %v1583
    %2130 = vmatprep.subr.bf16.mxu0 %v1580
    %2131 = vmatpush1.bf16.msra.mxu0 %v1579
    %2132 = vmatprep.subr.bf16.mxu0 %v1576
    %2133 = vmatpush1.bf16.msra.mxu0 %v1575
    %2134 = vmatprep.subr.bf16.mxu0 %v1572
    %2135 = vmatpush1.bf16.msra.mxu0 %v1571
    %2136 = vmatprep.subr.bf16.mxu0 %v1568
    %2137 = vmatpush1.bf16.msra.mxu0 %v1567
    %2138 = vmatprep.subr.bf16.mxu0 %v1564
    %2139 = vmatpush1.bf16.msra.mxu0 %v1563
    %2140 = vmatprep.subr.bf16.mxu0 %v1624
    %2141 = vmatpush2.bf16.msra.mxu0 %v1623
    %2142 = vmatprep.subr.bf16.mxu0 %v1620
    %2143 = vmatpush2.bf16.msra.mxu0 %v1619
    %2144 = vmatprep.subr.bf16.mxu0 %v1616
    %2145 = vmatpush2.bf16.msra.mxu0 %v1615
    %2146 = vmatprep.subr.bf16.mxu0 %v1612
    %2147 = vmatpush2.bf16.msra.mxu0 %v1611
    %2148 = vmatprep.subr.bf16.mxu0 %v1608
    %2149 = vmatpush2.bf16.msra.mxu0 %v1607
    %2150 = vmatprep.subr.bf16.mxu0 %v1604
    %2151 = vmatpush2.bf16.msra.mxu0 %v1603
    %2152 = vmatprep.subr.bf16.mxu0 %v1600
    %2153 = vmatpush2.bf16.msra.mxu0 %v1599
    %2154 = vmatprep.subr.bf16.mxu0 %v1596
    %2155 = vmatpush2.bf16.msra.mxu0 %v1595
    %2156 = vmatprep.mubr.bf16.mxu0 %v606
    %2157 = vmatmul.mubr.bf16.gmra.mxu0 %v605
    %v2158 = vpop.f32.mrf.mxu0
    %v2159 = vadd.f32 %v2046, %v2158
    %v2160 = vpop.f32.mrf.mxu0
    %v2161 = vadd.f32 %v2048, %v2160
    %v2162 = vpop.f32.mrf.mxu0
    %v2163 = vadd.f32 %v2050, %v2162
    %v2164 = vpop.f32.mrf.mxu0
    %v2165 = vadd.f32 %v2052, %v2164
    %2166 = vmatprep.mubr.bf16.mxu0 %v614
    %2167 = vmatmul.mubr.bf16.gmra.mxu0 %v613
    %v2168 = vpop.f32.mrf.mxu0
    %v2169 = vadd.f32 %v2056, %v2168
    %v2170 = vpop.f32.mrf.mxu0
    %v2171 = vadd.f32 %v2058, %v2170
    %v2172 = vpop.f32.mrf.mxu0
    %v2173 = vadd.f32 %v2060, %v2172
    %v2174 = vpop.f32.mrf.mxu0
    %v2175 = vadd.f32 %v2062, %v2174
    %2176 = vmatprep.mubr.bf16.mxu0 %v622
    %2177 = vmatmul.mubr.bf16.gmra.mxu0 %v621
    %v2178 = vpop.f32.mrf.mxu0
    %v2179 = vadd.f32 %v2066, %v2178
    %v2180 = vpop.f32.mrf.mxu0
    %v2181 = vadd.f32 %v2068, %v2180
    %v2182 = vpop.f32.mrf.mxu0
    %v2183 = vadd.f32 %v2070, %v2182
    %v2184 = vpop.f32.mrf.mxu0
    %v2185 = vadd.f32 %v2072, %v2184
    %2186 = vmatprep.mubr.bf16.mxu0 %v630
    %2187 = vmatmul.mubr.bf16.gmra.mxu0 %v629
    %v2188 = vpop.f32.mrf.mxu0
    %v2189 = vadd.f32 %v2076, %v2188
    %v2190 = vpop.f32.mrf.mxu0
    %v2191 = vadd.f32 %v2078, %v2190
    %v2192 = vpop.f32.mrf.mxu0
    %v2193 = vadd.f32 %v2080, %v2192
    %v2194 = vpop.f32.mrf.mxu0
    %v2195 = vadd.f32 %v2082, %v2194
    %2196 = vmatprep.mubr.bf16.mxu0 %v638
    %2197 = vmatmul.mubr.bf16.gmra.mxu0 %v637
    %v2198 = vpop.f32.mrf.mxu0
    %v2199 = vadd.f32 %v2086, %v2198
    %v2200 = vpop.f32.mrf.mxu0
    %v2201 = vadd.f32 %v2088, %v2200
    %v2202 = vpop.f32.mrf.mxu0
    %v2203 = vadd.f32 %v2090, %v2202
    %v2204 = vpop.f32.mrf.mxu0
    %v2205 = vadd.f32 %v2092, %v2204
    %2206 = vmatprep.mubr.bf16.mxu0 %v646
    %2207 = vmatmul.mubr.bf16.gmra.mxu0 %v645
    %v2208 = vpop.f32.mrf.mxu0
    %v2209 = vadd.f32 %v2096, %v2208
    %v2210 = vpop.f32.mrf.mxu0
    %v2211 = vadd.f32 %v2098, %v2210
    %v2212 = vpop.f32.mrf.mxu0
    %v2213 = vadd.f32 %v2100, %v2212
    %v2214 = vpop.f32.mrf.mxu0
    %v2215 = vadd.f32 %v2102, %v2214
    %2216 = vmatprep.mubr.bf16.mxu0 %v654
    %2217 = vmatmul.mubr.bf16.gmra.mxu0 %v653
    %v2218 = vpop.f32.mrf.mxu0
    %v2219 = vadd.f32 %v2106, %v2218
    %v2220 = vpop.f32.mrf.mxu0
    %v2221 = vadd.f32 %v2108, %v2220
    %v2222 = vpop.f32.mrf.mxu0
    %v2223 = vadd.f32 %v2110, %v2222
    %v2224 = vpop.f32.mrf.mxu0
    %v2225 = vadd.f32 %v2112, %v2224
    %2226 = vmatprep.mubr.bf16.mxu0 %v662
    %2227 = vmatmul.mubr.bf16.gmra.mxu0 %v661
    %v2228 = vpop.f32.mrf.mxu0
    %v2229 = vadd.f32 %v2116, %v2228
    %v2230 = vpop.f32.mrf.mxu0
    %v2231 = vadd.f32 %v2118, %v2230
    %v2232 = vpop.f32.mrf.mxu0
    %v2233 = vadd.f32 %v2120, %v2232
    %v2234 = vpop.f32.mrf.mxu0
    %v2235 = vadd.f32 %v2122, %v2234
    %2236 = vdwg.mxu0
    %2237 = vmatprep.subr.bf16.mxu0 %v1656
    %2238 = vmatpush1.bf16.msra.mxu0 %v1655
    %2239 = vmatprep.subr.bf16.mxu0 %v1652
    %2240 = vmatpush1.bf16.msra.mxu0 %v1651
    %2241 = vmatprep.subr.bf16.mxu0 %v1648
    %2242 = vmatpush1.bf16.msra.mxu0 %v1647
    %2243 = vmatprep.subr.bf16.mxu0 %v1644
    %2244 = vmatpush1.bf16.msra.mxu0 %v1643
    %2245 = vmatprep.subr.bf16.mxu0 %v1640
    %2246 = vmatpush1.bf16.msra.mxu0 %v1639
    %2247 = vmatprep.subr.bf16.mxu0 %v1636
    %2248 = vmatpush1.bf16.msra.mxu0 %v1635
    %2249 = vmatprep.subr.bf16.mxu0 %v1632
    %2250 = vmatpush1.bf16.msra.mxu0 %v1631
    %2251 = vmatprep.subr.bf16.mxu0 %v1628
    %2252 = vmatpush1.bf16.msra.mxu0 %v1627
    %2253 = vmatprep.subr.bf16.mxu0 %v1688
    %2254 = vmatpush2.bf16.msra.mxu0 %v1687
    %2255 = vmatprep.subr.bf16.mxu0 %v1684
    %2256 = vmatpush2.bf16.msra.mxu0 %v1683
    %2257 = vmatprep.subr.bf16.mxu0 %v1680
    %2258 = vmatpush2.bf16.msra.mxu0 %v1679
    %2259 = vmatprep.subr.bf16.mxu0 %v1676
    %2260 = vmatpush2.bf16.msra.mxu0 %v1675
    %2261 = vmatprep.subr.bf16.mxu0 %v1672
    %2262 = vmatpush2.bf16.msra.mxu0 %v1671
    %2263 = vmatprep.subr.bf16.mxu0 %v1668
    %2264 = vmatpush2.bf16.msra.mxu0 %v1667
    %2265 = vmatprep.subr.bf16.mxu0 %v1664
    %2266 = vmatpush2.bf16.msra.mxu0 %v1663
    %2267 = vmatprep.subr.bf16.mxu0 %v1660
    %2268 = vmatpush2.bf16.msra.mxu0 %v1659
    %2269 = vmatprep.mubr.bf16.mxu0 %v608
    %2270 = vmatmul.mubr.bf16.gmra.mxu0 %v607
    %v2271 = vpop.f32.mrf.mxu0
    %v2272 = vadd.f32 %v2159, %v2271
    %v2273 = vpop.f32.mrf.mxu0
    %v2274 = vadd.f32 %v2161, %v2273
    %v2275 = vpop.f32.mrf.mxu0
    %v2276 = vadd.f32 %v2163, %v2275
    %v2277 = vpop.f32.mrf.mxu0
    %v2278 = vadd.f32 %v2165, %v2277
    %2279 = vmatprep.mubr.bf16.mxu0 %v616
    %2280 = vmatmul.mubr.bf16.gmra.mxu0 %v615
    %v2281 = vpop.f32.mrf.mxu0
    %v2282 = vadd.f32 %v2169, %v2281
    %v2283 = vpop.f32.mrf.mxu0
    %v2284 = vadd.f32 %v2171, %v2283
    %v2285 = vpop.f32.mrf.mxu0
    %v2286 = vadd.f32 %v2173, %v2285
    %v2287 = vpop.f32.mrf.mxu0
    %v2288 = vadd.f32 %v2175, %v2287
    %2289 = vmatprep.mubr.bf16.mxu0 %v624
    %2290 = vmatmul.mubr.bf16.gmra.mxu0 %v623
    %v2291 = vpop.f32.mrf.mxu0
    %v2292 = vadd.f32 %v2179, %v2291
    %v2293 = vpop.f32.mrf.mxu0
    %v2294 = vadd.f32 %v2181, %v2293
    %v2295 = vpop.f32.mrf.mxu0
    %v2296 = vadd.f32 %v2183, %v2295
    %v2297 = vpop.f32.mrf.mxu0
    %v2298 = vadd.f32 %v2185, %v2297
    %2299 = vmatprep.mubr.bf16.mxu0 %v632
    %2300 = vmatmul.mubr.bf16.gmra.mxu0 %v631
    %v2301 = vpop.f32.mrf.mxu0
    %v2302 = vadd.f32 %v2189, %v2301
    %v2303 = vpop.f32.mrf.mxu0
    %v2304 = vadd.f32 %v2191, %v2303
    %v2305 = vpop.f32.mrf.mxu0
    %v2306 = vadd.f32 %v2193, %v2305
    %v2307 = vpop.f32.mrf.mxu0
    %v2308 = vadd.f32 %v2195, %v2307
    %2309 = vmatprep.mubr.bf16.mxu0 %v640
    %2310 = vmatmul.mubr.bf16.gmra.mxu0 %v639
    %v2311 = vpop.f32.mrf.mxu0
    %v2312 = vadd.f32 %v2199, %v2311
    %v2313 = vpop.f32.mrf.mxu0
    %v2314 = vadd.f32 %v2201, %v2313
    %v2315 = vpop.f32.mrf.mxu0
    %v2316 = vadd.f32 %v2203, %v2315
    %v2317 = vpop.f32.mrf.mxu0
    %v2318 = vadd.f32 %v2205, %v2317
    %2319 = vmatprep.mubr.bf16.mxu0 %v648
    %2320 = vmatmul.mubr.bf16.gmra.mxu0 %v647
    %v2321 = vpop.f32.mrf.mxu0
    %v2322 = vadd.f32 %v2209, %v2321
    %v2323 = vpop.f32.mrf.mxu0
    %v2324 = vadd.f32 %v2211, %v2323
    %v2325 = vpop.f32.mrf.mxu0
    %v2326 = vadd.f32 %v2213, %v2325
    %v2327 = vpop.f32.mrf.mxu0
    %v2328 = vadd.f32 %v2215, %v2327
    %2329 = vmatprep.mubr.bf16.mxu0 %v656
    %2330 = vmatmul.mubr.bf16.gmra.mxu0 %v655
    %v2331 = vpop.f32.mrf.mxu0
    %v2332 = vadd.f32 %v2219, %v2331
    %v2333 = vpop.f32.mrf.mxu0
    %v2334 = vadd.f32 %v2221, %v2333
    %v2335 = vpop.f32.mrf.mxu0
    %v2336 = vadd.f32 %v2223, %v2335
    %v2337 = vpop.f32.mrf.mxu0
    %v2338 = vadd.f32 %v2225, %v2337
    %2339 = vmatprep.mubr.bf16.mxu0 %v664
    %2340 = vmatmul.mubr.bf16.gmra.mxu0 %v663
    %v2341 = vpop.f32.mrf.mxu0
    %v2342 = vadd.f32 %v2229, %v2341
    %v2343 = vpop.f32.mrf.mxu0
    %v2344 = vadd.f32 %v2231, %v2343
    %v2345 = vpop.f32.mrf.mxu0
    %v2346 = vadd.f32 %v2233, %v2345
    %v2347 = vpop.f32.mrf.mxu0
    %v2348 = vadd.f32 %v2235, %v2347
    %2349 = vdwg.mxu0
    %2350 = vmatprep.subr.bf16.mxu0 %v1720
    %2351 = vmatpush1.bf16.msra.mxu0 %v1719
    %2352 = vmatprep.subr.bf16.mxu0 %v1716
    %2353 = vmatpush1.bf16.msra.mxu0 %v1715
    %2354 = vmatprep.subr.bf16.mxu0 %v1712
    %2355 = vmatpush1.bf16.msra.mxu0 %v1711
    %2356 = vmatprep.subr.bf16.mxu0 %v1708
    %2357 = vmatpush1.bf16.msra.mxu0 %v1707
    %2358 = vmatprep.subr.bf16.mxu0 %v1704
    %2359 = vmatpush1.bf16.msra.mxu0 %v1703
    %2360 = vmatprep.subr.bf16.mxu0 %v1700
    %2361 = vmatpush1.bf16.msra.mxu0 %v1699
    %2362 = vmatprep.subr.bf16.mxu0 %v1696
    %2363 = vmatpush1.bf16.msra.mxu0 %v1695
    %2364 = vmatprep.subr.bf16.mxu0 %v1692
    %2365 = vmatpush1.bf16.msra.mxu0 %v1691
    %2366 = vmatprep.subr.bf16.mxu0 %v1752
    %2367 = vmatpush2.bf16.msra.mxu0 %v1751
    %2368 = vmatprep.subr.bf16.mxu0 %v1748
    %2369 = vmatpush2.bf16.msra.mxu0 %v1747
    %2370 = vmatprep.subr.bf16.mxu0 %v1744
    %2371 = vmatpush2.bf16.msra.mxu0 %v1743
    %2372 = vmatprep.subr.bf16.mxu0 %v1740
    %2373 = vmatpush2.bf16.msra.mxu0 %v1739
    %2374 = vmatprep.subr.bf16.mxu0 %v1736
    %2375 = vmatpush2.bf16.msra.mxu0 %v1735
    %2376 = vmatprep.subr.bf16.mxu0 %v1732
    %2377 = vmatpush2.bf16.msra.mxu0 %v1731
    %2378 = vmatprep.subr.bf16.mxu0 %v1728
    %2379 = vmatpush2.bf16.msra.mxu0 %v1727
    %2380 = vmatprep.subr.bf16.mxu0 %v1724
    %2381 = vmatpush2.bf16.msra.mxu0 %v1723
    %2382 = vmatprep.mubr.bf16.mxu0 %v610
    %2383 = vmatmul.mubr.bf16.gmra.mxu0 %v609
    %v2384 = vpop.f32.mrf.mxu0
    %v2385 = vadd.f32 %v2272, %v2384
    %v2386 = vpop.f32.mrf.mxu0
    %v2387 = vadd.f32 %v2274, %v2386
    %v2388 = vpop.f32.mrf.mxu0
    %v2389 = vadd.f32 %v2276, %v2388
    %v2390 = vpop.f32.mrf.mxu0
    %v2391 = vadd.f32 %v2278, %v2390
    %2392 = vmatprep.mubr.bf16.mxu0 %v618
    %2393 = vmatmul.mubr.bf16.gmra.mxu0 %v617
    %v2394 = vpop.f32.mrf.mxu0
    %v2395 = vadd.f32 %v2282, %v2394
    %v2396 = vpop.f32.mrf.mxu0
    %v2397 = vadd.f32 %v2284, %v2396
    %v2398 = vpop.f32.mrf.mxu0
    %v2399 = vadd.f32 %v2286, %v2398
    %v2400 = vpop.f32.mrf.mxu0
    %v2401 = vadd.f32 %v2288, %v2400
    %2402 = vmatprep.mubr.bf16.mxu0 %v626
    %2403 = vmatmul.mubr.bf16.gmra.mxu0 %v625
    %v2404 = vpop.f32.mrf.mxu0
    %v2405 = vadd.f32 %v2292, %v2404
    %v2406 = vpop.f32.mrf.mxu0
    %v2407 = vadd.f32 %v2294, %v2406
    %v2408 = vpop.f32.mrf.mxu0
    %v2409 = vadd.f32 %v2296, %v2408
    %v2410 = vpop.f32.mrf.mxu0
    %v2411 = vadd.f32 %v2298, %v2410
    %2412 = vmatprep.mubr.bf16.mxu0 %v634
    %2413 = vmatmul.mubr.bf16.gmra.mxu0 %v633
    %v2414 = vpop.f32.mrf.mxu0
    %v2415 = vadd.f32 %v2302, %v2414
    %v2416 = vpop.f32.mrf.mxu0
    %v2417 = vadd.f32 %v2304, %v2416
    %v2418 = vpop.f32.mrf.mxu0
    %v2419 = vadd.f32 %v2306, %v2418
    %v2420 = vpop.f32.mrf.mxu0
    %v2421 = vadd.f32 %v2308, %v2420
    %2422 = vmatprep.mubr.bf16.mxu0 %v642
    %2423 = vmatmul.mubr.bf16.gmra.mxu0 %v641
    %v2424 = vpop.f32.mrf.mxu0
    %v2425 = vadd.f32 %v2312, %v2424
    %v2426 = vpop.f32.mrf.mxu0
    %v2427 = vadd.f32 %v2314, %v2426
    %v2428 = vpop.f32.mrf.mxu0
    %v2429 = vadd.f32 %v2316, %v2428
    %v2430 = vpop.f32.mrf.mxu0
    %v2431 = vadd.f32 %v2318, %v2430
    %2432 = vmatprep.mubr.bf16.mxu0 %v650
    %2433 = vmatmul.mubr.bf16.gmra.mxu0 %v649
    %v2434 = vpop.f32.mrf.mxu0
    %v2435 = vadd.f32 %v2322, %v2434
    %v2436 = vpop.f32.mrf.mxu0
    %v2437 = vadd.f32 %v2324, %v2436
    %v2438 = vpop.f32.mrf.mxu0
    %v2439 = vadd.f32 %v2326, %v2438
    %v2440 = vpop.f32.mrf.mxu0
    %v2441 = vadd.f32 %v2328, %v2440
    %2442 = vmatprep.mubr.bf16.mxu0 %v658
    %2443 = vmatmul.mubr.bf16.gmra.mxu0 %v657
    %v2444 = vpop.f32.mrf.mxu0
    %v2445 = vadd.f32 %v2332, %v2444
    %v2446 = vpop.f32.mrf.mxu0
    %v2447 = vadd.f32 %v2334, %v2446
    %v2448 = vpop.f32.mrf.mxu0
    %v2449 = vadd.f32 %v2336, %v2448
    %v2450 = vpop.f32.mrf.mxu0
    %v2451 = vadd.f32 %v2338, %v2450
    %2452 = vmatprep.mubr.bf16.mxu0 %v666
    %2453 = vmatmul.mubr.bf16.gmra.mxu0 %v665
    %v2454 = vpop.f32.mrf.mxu0
    %v2455 = vadd.f32 %v2342, %v2454
    %v2456 = vpop.f32.mrf.mxu0
    %v2457 = vadd.f32 %v2344, %v2456
    %v2458 = vpop.f32.mrf.mxu0
    %v2459 = vadd.f32 %v2346, %v2458
    %v2460 = vpop.f32.mrf.mxu0
    %v2461 = vadd.f32 %v2348, %v2460
    %2462 = vdwg.mxu0
    %2463 = vmatprep.subr.bf16.mxu0 %v1530
    %2464 = vmatpush1.bf16.msra.mxu0 %v1529
    %2465 = vmatprep.subr.bf16.mxu0 %v1526
    %2466 = vmatpush1.bf16.msra.mxu0 %v1525
    %2467 = vmatprep.subr.bf16.mxu0 %v1522
    %2468 = vmatpush1.bf16.msra.mxu0 %v1521
    %2469 = vmatprep.subr.bf16.mxu0 %v1518
    %2470 = vmatpush1.bf16.msra.mxu0 %v1517
    %2471 = vmatprep.subr.bf16.mxu0 %v1514
    %2472 = vmatpush1.bf16.msra.mxu0 %v1513
    %2473 = vmatprep.subr.bf16.mxu0 %v1510
    %2474 = vmatpush1.bf16.msra.mxu0 %v1509
    %2475 = vmatprep.subr.bf16.mxu0 %v1506
    %2476 = vmatpush1.bf16.msra.mxu0 %v1505
    %2477 = vmatprep.subr.bf16.mxu0 %v1502
    %2478 = vmatpush1.bf16.msra.mxu0 %v1501
    %2479 = vmatprep.subr.bf16.mxu0 %v1562
    %2480 = vmatpush2.bf16.msra.mxu0 %v1561
    %2481 = vmatprep.subr.bf16.mxu0 %v1558
    %2482 = vmatpush2.bf16.msra.mxu0 %v1557
    %2483 = vmatprep.subr.bf16.mxu0 %v1554
    %2484 = vmatpush2.bf16.msra.mxu0 %v1553
    %2485 = vmatprep.subr.bf16.mxu0 %v1550
    %2486 = vmatpush2.bf16.msra.mxu0 %v1549
    %2487 = vmatprep.subr.bf16.mxu0 %v1546
    %2488 = vmatpush2.bf16.msra.mxu0 %v1545
    %2489 = vmatprep.subr.bf16.mxu0 %v1542
    %2490 = vmatpush2.bf16.msra.mxu0 %v1541
    %2491 = vmatprep.subr.bf16.mxu0 %v1538
    %2492 = vmatpush2.bf16.msra.mxu0 %v1537
    %2493 = vmatprep.subr.bf16.mxu0 %v1534
    %2494 = vmatpush2.bf16.msra.mxu0 %v1533
    %2495 = vmatprep.mubr.bf16.mxu0 %v604
    %2496 = vmatmul.mubr.bf16.gmra.mxu0 %v603
    %v2497 = vpop.f32.mrf.mxu0
    %v2498 = vadd.f32 %v402, %v2497
    %v2499 = vpop.f32.mrf.mxu0
    %v2500 = vadd.f32 %v406, %v2499
    %v2501 = vpop.f32.mrf.mxu0
    %v2502 = vadd.f32 %v402, %v2501
    %v2503 = vpop.f32.mrf.mxu0
    %v2504 = vadd.f32 %v406, %v2503
    %2505 = vmatprep.mubr.bf16.mxu0 %v612
    %2506 = vmatmul.mubr.bf16.gmra.mxu0 %v611
    %v2507 = vpop.f32.mrf.mxu0
    %v2508 = vadd.f32 %v402, %v2507
    %v2509 = vpop.f32.mrf.mxu0
    %v2510 = vadd.f32 %v406, %v2509
    %v2511 = vpop.f32.mrf.mxu0
    %v2512 = vadd.f32 %v402, %v2511
    %v2513 = vpop.f32.mrf.mxu0
    %v2514 = vadd.f32 %v406, %v2513
    %2515 = vmatprep.mubr.bf16.mxu0 %v620
    %2516 = vmatmul.mubr.bf16.gmra.mxu0 %v619
    %v2517 = vpop.f32.mrf.mxu0
    %v2518 = vadd.f32 %v402, %v2517
    %v2519 = vpop.f32.mrf.mxu0
    %v2520 = vadd.f32 %v406, %v2519
    %v2521 = vpop.f32.mrf.mxu0
    %v2522 = vadd.f32 %v402, %v2521
    %v2523 = vpop.f32.mrf.mxu0
    %v2524 = vadd.f32 %v406, %v2523
    %2525 = vmatprep.mubr.bf16.mxu0 %v628
    %2526 = vmatmul.mubr.bf16.gmra.mxu0 %v627
    %v2527 = vpop.f32.mrf.mxu0
    %v2528 = vadd.f32 %v402, %v2527
    %v2529 = vpop.f32.mrf.mxu0
    %v2530 = vadd.f32 %v406, %v2529
    %v2531 = vpop.f32.mrf.mxu0
    %v2532 = vadd.f32 %v402, %v2531
    %v2533 = vpop.f32.mrf.mxu0
    %v2534 = vadd.f32 %v406, %v2533
    %2535 = vmatprep.mubr.bf16.mxu0 %v636
    %2536 = vmatmul.mubr.bf16.gmra.mxu0 %v635
    %v2537 = vpop.f32.mrf.mxu0
    %v2538 = vadd.f32 %v402, %v2537
    %v2539 = vpop.f32.mrf.mxu0
    %v2540 = vadd.f32 %v406, %v2539
    %v2541 = vpop.f32.mrf.mxu0
    %v2542 = vadd.f32 %v402, %v2541
    %v2543 = vpop.f32.mrf.mxu0
    %v2544 = vadd.f32 %v406, %v2543
    %2545 = vmatprep.mubr.bf16.mxu0 %v644
    %2546 = vmatmul.mubr.bf16.gmra.mxu0 %v643
    %v2547 = vpop.f32.mrf.mxu0
    %v2548 = vadd.f32 %v402, %v2547
    %v2549 = vpop.f32.mrf.mxu0
    %v2550 = vadd.f32 %v406, %v2549
    %v2551 = vpop.f32.mrf.mxu0
    %v2552 = vadd.f32 %v402, %v2551
    %v2553 = vpop.f32.mrf.mxu0
    %v2554 = vadd.f32 %v406, %v2553
    %2555 = vmatprep.mubr.bf16.mxu0 %v652
    %2556 = vmatmul.mubr.bf16.gmra.mxu0 %v651
    %v2557 = vpop.f32.mrf.mxu0
    %v2558 = vadd.f32 %v402, %v2557
    %v2559 = vpop.f32.mrf.mxu0
    %v2560 = vadd.f32 %v406, %v2559
    %v2561 = vpop.f32.mrf.mxu0
    %v2562 = vadd.f32 %v402, %v2561
    %v2563 = vpop.f32.mrf.mxu0
    %v2564 = vadd.f32 %v406, %v2563
    %2565 = vmatprep.mubr.bf16.mxu0 %v660
    %2566 = vmatmul.mubr.bf16.gmra.mxu0 %v659
    %v2567 = vpop.f32.mrf.mxu0
    %v2568 = vadd.f32 %v402, %v2567
    %v2569 = vpop.f32.mrf.mxu0
    %v2570 = vadd.f32 %v406, %v2569
    %v2571 = vpop.f32.mrf.mxu0
    %v2572 = vadd.f32 %v402, %v2571
    %v2573 = vpop.f32.mrf.mxu0
    %v2574 = vadd.f32 %v406, %v2573
    %2575 = vdwg.mxu0
    %2576 = vmatprep.subr.bf16.mxu0 %v1594
    %2577 = vmatpush1.bf16.msra.mxu0 %v1593
    %2578 = vmatprep.subr.bf16.mxu0 %v1590
    %2579 = vmatpush1.bf16.msra.mxu0 %v1589
    %2580 = vmatprep.subr.bf16.mxu0 %v1586
    %2581 = vmatpush1.bf16.msra.mxu0 %v1585
    %2582 = vmatprep.subr.bf16.mxu0 %v1582
    %2583 = vmatpush1.bf16.msra.mxu0 %v1581
    %2584 = vmatprep.subr.bf16.mxu0 %v1578
    %2585 = vmatpush1.bf16.msra.mxu0 %v1577
    %2586 = vmatprep.subr.bf16.mxu0 %v1574
    %2587 = vmatpush1.bf16.msra.mxu0 %v1573
    %2588 = vmatprep.subr.bf16.mxu0 %v1570
    %2589 = vmatpush1.bf16.msra.mxu0 %v1569
    %2590 = vmatprep.subr.bf16.mxu0 %v1566
    %2591 = vmatpush1.bf16.msra.mxu0 %v1565
    %2592 = vmatprep.subr.bf16.mxu0 %v1626
    %2593 = vmatpush2.bf16.msra.mxu0 %v1625
    %2594 = vmatprep.subr.bf16.mxu0 %v1622
    %2595 = vmatpush2.bf16.msra.mxu0 %v1621
    %2596 = vmatprep.subr.bf16.mxu0 %v1618
    %2597 = vmatpush2.bf16.msra.mxu0 %v1617
    %2598 = vmatprep.subr.bf16.mxu0 %v1614
    %2599 = vmatpush2.bf16.msra.mxu0 %v1613
    %2600 = vmatprep.subr.bf16.mxu0 %v1610
    %2601 = vmatpush2.bf16.msra.mxu0 %v1609
    %2602 = vmatprep.subr.bf16.mxu0 %v1606
    %2603 = vmatpush2.bf16.msra.mxu0 %v1605
    %2604 = vmatprep.subr.bf16.mxu0 %v1602
    %2605 = vmatpush2.bf16.msra.mxu0 %v1601
    %2606 = vmatprep.subr.bf16.mxu0 %v1598
    %2607 = vmatpush2.bf16.msra.mxu0 %v1597
    %2608 = vmatprep.mubr.bf16.mxu0 %v606
    %2609 = vmatmul.mubr.bf16.gmra.mxu0 %v605
    %v2610 = vpop.f32.mrf.mxu0
    %v2611 = vadd.f32 %v2498, %v2610
    %v2612 = vpop.f32.mrf.mxu0
    %v2613 = vadd.f32 %v2500, %v2612
    %v2614 = vpop.f32.mrf.mxu0
    %v2615 = vadd.f32 %v2502, %v2614
    %v2616 = vpop.f32.mrf.mxu0
    %v2617 = vadd.f32 %v2504, %v2616
    %2618 = vmatprep.mubr.bf16.mxu0 %v614
    %2619 = vmatmul.mubr.bf16.gmra.mxu0 %v613
    %v2620 = vpop.f32.mrf.mxu0
    %v2621 = vadd.f32 %v2508, %v2620
    %v2622 = vpop.f32.mrf.mxu0
    %v2623 = vadd.f32 %v2510, %v2622
    %v2624 = vpop.f32.mrf.mxu0
    %v2625 = vadd.f32 %v2512, %v2624
    %v2626 = vpop.f32.mrf.mxu0
    %v2627 = vadd.f32 %v2514, %v2626
    %2628 = vmatprep.mubr.bf16.mxu0 %v622
    %2629 = vmatmul.mubr.bf16.gmra.mxu0 %v621
    %v2630 = vpop.f32.mrf.mxu0
    %v2631 = vadd.f32 %v2518, %v2630
    %v2632 = vpop.f32.mrf.mxu0
    %v2633 = vadd.f32 %v2520, %v2632
    %v2634 = vpop.f32.mrf.mxu0
    %v2635 = vadd.f32 %v2522, %v2634
    %v2636 = vpop.f32.mrf.mxu0
    %v2637 = vadd.f32 %v2524, %v2636
    %2638 = vmatprep.mubr.bf16.mxu0 %v630
    %2639 = vmatmul.mubr.bf16.gmra.mxu0 %v629
    %v2640 = vpop.f32.mrf.mxu0
    %v2641 = vadd.f32 %v2528, %v2640
    %v2642 = vpop.f32.mrf.mxu0
    %v2643 = vadd.f32 %v2530, %v2642
    %v2644 = vpop.f32.mrf.mxu0
    %v2645 = vadd.f32 %v2532, %v2644
    %v2646 = vpop.f32.mrf.mxu0
    %v2647 = vadd.f32 %v2534, %v2646
    %2648 = vmatprep.mubr.bf16.mxu0 %v638
    %2649 = vmatmul.mubr.bf16.gmra.mxu0 %v637
    %v2650 = vpop.f32.mrf.mxu0
    %v2651 = vadd.f32 %v2538, %v2650
    %v2652 = vpop.f32.mrf.mxu0
    %v2653 = vadd.f32 %v2540, %v2652
    %v2654 = vpop.f32.mrf.mxu0
    %v2655 = vadd.f32 %v2542, %v2654
    %v2656 = vpop.f32.mrf.mxu0
    %v2657 = vadd.f32 %v2544, %v2656
    %2658 = vmatprep.mubr.bf16.mxu0 %v646
    %2659 = vmatmul.mubr.bf16.gmra.mxu0 %v645
    %v2660 = vpop.f32.mrf.mxu0
    %v2661 = vadd.f32 %v2548, %v2660
    %v2662 = vpop.f32.mrf.mxu0
    %v2663 = vadd.f32 %v2550, %v2662
    %v2664 = vpop.f32.mrf.mxu0
    %v2665 = vadd.f32 %v2552, %v2664
    %v2666 = vpop.f32.mrf.mxu0
    %v2667 = vadd.f32 %v2554, %v2666
    %2668 = vmatprep.mubr.bf16.mxu0 %v654
    %2669 = vmatmul.mubr.bf16.gmra.mxu0 %v653
    %v2670 = vpop.f32.mrf.mxu0
    %v2671 = vadd.f32 %v2558, %v2670
    %v2672 = vpop.f32.mrf.mxu0
    %v2673 = vadd.f32 %v2560, %v2672
    %v2674 = vpop.f32.mrf.mxu0
    %v2675 = vadd.f32 %v2562, %v2674
    %v2676 = vpop.f32.mrf.mxu0
    %v2677 = vadd.f32 %v2564, %v2676
    %2678 = vmatprep.mubr.bf16.mxu0 %v662
    %2679 = vmatmul.mubr.bf16.gmra.mxu0 %v661
    %v2680 = vpop.f32.mrf.mxu0
    %v2681 = vadd.f32 %v2568, %v2680
    %v2682 = vpop.f32.mrf.mxu0
    %v2683 = vadd.f32 %v2570, %v2682
    %v2684 = vpop.f32.mrf.mxu0
    %v2685 = vadd.f32 %v2572, %v2684
    %v2686 = vpop.f32.mrf.mxu0
    %v2687 = vadd.f32 %v2574, %v2686
    %2688 = vdwg.mxu0
    %2689 = vmatprep.subr.bf16.mxu0 %v1658
    %2690 = vmatpush1.bf16.msra.mxu0 %v1657
    %2691 = vmatprep.subr.bf16.mxu0 %v1654
    %2692 = vmatpush1.bf16.msra.mxu0 %v1653
    %2693 = vmatprep.subr.bf16.mxu0 %v1650
    %2694 = vmatpush1.bf16.msra.mxu0 %v1649
    %2695 = vmatprep.subr.bf16.mxu0 %v1646
    %2696 = vmatpush1.bf16.msra.mxu0 %v1645
    %2697 = vmatprep.subr.bf16.mxu0 %v1642
    %2698 = vmatpush1.bf16.msra.mxu0 %v1641
    %2699 = vmatprep.subr.bf16.mxu0 %v1638
    %2700 = vmatpush1.bf16.msra.mxu0 %v1637
    %2701 = vmatprep.subr.bf16.mxu0 %v1634
    %2702 = vmatpush1.bf16.msra.mxu0 %v1633
    %2703 = vmatprep.subr.bf16.mxu0 %v1630
    %2704 = vmatpush1.bf16.msra.mxu0 %v1629
    %2705 = vmatprep.subr.bf16.mxu0 %v1690
    %2706 = vmatpush2.bf16.msra.mxu0 %v1689
    %2707 = vmatprep.subr.bf16.mxu0 %v1686
    %2708 = vmatpush2.bf16.msra.mxu0 %v1685
    %2709 = vmatprep.subr.bf16.mxu0 %v1682
    %2710 = vmatpush2.bf16.msra.mxu0 %v1681
    %2711 = vmatprep.subr.bf16.mxu0 %v1678
    %2712 = vmatpush2.bf16.msra.mxu0 %v1677
    %2713 = vmatprep.subr.bf16.mxu0 %v1674
    %2714 = vmatpush2.bf16.msra.mxu0 %v1673
    %2715 = vmatprep.subr.bf16.mxu0 %v1670
    %2716 = vmatpush2.bf16.msra.mxu0 %v1669
    %2717 = vmatprep.subr.bf16.mxu0 %v1666
    %2718 = vmatpush2.bf16.msra.mxu0 %v1665
    %2719 = vmatprep.subr.bf16.mxu0 %v1662
    %2720 = vmatpush2.bf16.msra.mxu0 %v1661
    %2721 = vmatprep.mubr.bf16.mxu0 %v608
    %2722 = vmatmul.mubr.bf16.gmra.mxu0 %v607
    %v2723 = vpop.f32.mrf.mxu0
    %v2724 = vadd.f32 %v2611, %v2723
    %v2725 = vpop.f32.mrf.mxu0
    %v2726 = vadd.f32 %v2613, %v2725
    %v2727 = vpop.f32.mrf.mxu0
    %v2728 = vadd.f32 %v2615, %v2727
    %v2729 = vpop.f32.mrf.mxu0
    %v2730 = vadd.f32 %v2617, %v2729
    %2731 = vmatprep.mubr.bf16.mxu0 %v616
    %2732 = vmatmul.mubr.bf16.gmra.mxu0 %v615
    %v2733 = vpop.f32.mrf.mxu0
    %v2734 = vadd.f32 %v2621, %v2733
    %v2735 = vpop.f32.mrf.mxu0
    %v2736 = vadd.f32 %v2623, %v2735
    %v2737 = vpop.f32.mrf.mxu0
    %v2738 = vadd.f32 %v2625, %v2737
    %v2739 = vpop.f32.mrf.mxu0
    %v2740 = vadd.f32 %v2627, %v2739
    %2741 = vmatprep.mubr.bf16.mxu0 %v624
    %2742 = vmatmul.mubr.bf16.gmra.mxu0 %v623
    %v2743 = vpop.f32.mrf.mxu0
    %v2744 = vadd.f32 %v2631, %v2743
    %v2745 = vpop.f32.mrf.mxu0
    %v2746 = vadd.f32 %v2633, %v2745
    %v2747 = vpop.f32.mrf.mxu0
    %v2748 = vadd.f32 %v2635, %v2747
    %v2749 = vpop.f32.mrf.mxu0
    %v2750 = vadd.f32 %v2637, %v2749
    %2751 = vmatprep.mubr.bf16.mxu0 %v632
    %2752 = vmatmul.mubr.bf16.gmra.mxu0 %v631
    %v2753 = vpop.f32.mrf.mxu0
    %v2754 = vadd.f32 %v2641, %v2753
    %v2755 = vpop.f32.mrf.mxu0
    %v2756 = vadd.f32 %v2643, %v2755
    %v2757 = vpop.f32.mrf.mxu0
    %v2758 = vadd.f32 %v2645, %v2757
    %v2759 = vpop.f32.mrf.mxu0
    %v2760 = vadd.f32 %v2647, %v2759
    %2761 = vmatprep.mubr.bf16.mxu0 %v640
    %2762 = vmatmul.mubr.bf16.gmra.mxu0 %v639
    %v2763 = vpop.f32.mrf.mxu0
    %v2764 = vadd.f32 %v2651, %v2763
    %v2765 = vpop.f32.mrf.mxu0
    %v2766 = vadd.f32 %v2653, %v2765
    %v2767 = vpop.f32.mrf.mxu0
    %v2768 = vadd.f32 %v2655, %v2767
    %v2769 = vpop.f32.mrf.mxu0
    %v2770 = vadd.f32 %v2657, %v2769
    %2771 = vmatprep.mubr.bf16.mxu0 %v648
    %2772 = vmatmul.mubr.bf16.gmra.mxu0 %v647
    %v2773 = vpop.f32.mrf.mxu0
    %v2774 = vadd.f32 %v2661, %v2773
    %v2775 = vpop.f32.mrf.mxu0
    %v2776 = vadd.f32 %v2663, %v2775
    %v2777 = vpop.f32.mrf.mxu0
    %v2778 = vadd.f32 %v2665, %v2777
    %v2779 = vpop.f32.mrf.mxu0
    %v2780 = vadd.f32 %v2667, %v2779
    %2781 = vmatprep.mubr.bf16.mxu0 %v656
    %2782 = vmatmul.mubr.bf16.gmra.mxu0 %v655
    %v2783 = vpop.f32.mrf.mxu0
    %v2784 = vadd.f32 %v2671, %v2783
    %v2785 = vpop.f32.mrf.mxu0
    %v2786 = vadd.f32 %v2673, %v2785
    %v2787 = vpop.f32.mrf.mxu0
    %v2788 = vadd.f32 %v2675, %v2787
    %v2789 = vpop.f32.mrf.mxu0
    %v2790 = vadd.f32 %v2677, %v2789
    %2791 = vmatprep.mubr.bf16.mxu0 %v664
    %2792 = vmatmul.mubr.bf16.gmra.mxu0 %v663
    %v2793 = vpop.f32.mrf.mxu0
    %v2794 = vadd.f32 %v2681, %v2793
    %v2795 = vpop.f32.mrf.mxu0
    %v2796 = vadd.f32 %v2683, %v2795
    %v2797 = vpop.f32.mrf.mxu0
    %v2798 = vadd.f32 %v2685, %v2797
    %v2799 = vpop.f32.mrf.mxu0
    %v2800 = vadd.f32 %v2687, %v2799
    %2801 = vdwg.mxu0
    %2802 = vmatprep.subr.bf16.mxu0 %v1722
    %2803 = vmatpush1.bf16.msra.mxu0 %v1721
    %2804 = vmatprep.subr.bf16.mxu0 %v1718
    %2805 = vmatpush1.bf16.msra.mxu0 %v1717
    %2806 = vmatprep.subr.bf16.mxu0 %v1714
    %2807 = vmatpush1.bf16.msra.mxu0 %v1713
    %2808 = vmatprep.subr.bf16.mxu0 %v1710
    %2809 = vmatpush1.bf16.msra.mxu0 %v1709
    %2810 = vmatprep.subr.bf16.mxu0 %v1706
    %2811 = vmatpush1.bf16.msra.mxu0 %v1705
    %2812 = vmatprep.subr.bf16.mxu0 %v1702
    %2813 = vmatpush1.bf16.msra.mxu0 %v1701
    %2814 = vmatprep.subr.bf16.mxu0 %v1698
    %2815 = vmatpush1.bf16.msra.mxu0 %v1697
    %2816 = vmatprep.subr.bf16.mxu0 %v1694
    %2817 = vmatpush1.bf16.msra.mxu0 %v1693
    %2818 = vmatprep.subr.bf16.mxu0 %v1754
    %2819 = vmatpush2.bf16.msra.mxu0 %v1753
    %2820 = vmatprep.subr.bf16.mxu0 %v1750
    %2821 = vmatpush2.bf16.msra.mxu0 %v1749
    %2822 = vmatprep.subr.bf16.mxu0 %v1746
    %2823 = vmatpush2.bf16.msra.mxu0 %v1745
    %2824 = vmatprep.subr.bf16.mxu0 %v1742
    %2825 = vmatpush2.bf16.msra.mxu0 %v1741
    %2826 = vmatprep.subr.bf16.mxu0 %v1738
    %2827 = vmatpush2.bf16.msra.mxu0 %v1737
    %2828 = vmatprep.subr.bf16.mxu0 %v1734
    %2829 = vmatpush2.bf16.msra.mxu0 %v1733
    %2830 = vmatprep.subr.bf16.mxu0 %v1730
    %2831 = vmatpush2.bf16.msra.mxu0 %v1729
    %2832 = vmatprep.subr.bf16.mxu0 %v1726
    %2833 = vmatpush2.bf16.msra.mxu0 %v1725
    %2834 = vmatprep.mubr.bf16.mxu0 %v610
    %2835 = vmatmul.mubr.bf16.gmra.mxu0 %v609
    %v2836 = vpop.f32.mrf.mxu0
    %v2837 = vadd.f32 %v2724, %v2836
    %v2838 = vpop.f32.mrf.mxu0
    %v2839 = vadd.f32 %v2726, %v2838
    %v2840 = vpop.f32.mrf.mxu0
    %v2841 = vadd.f32 %v2728, %v2840
    %v2842 = vpop.f32.mrf.mxu0
    %v2843 = vadd.f32 %v2730, %v2842
    %2844 = vmatprep.mubr.bf16.mxu0 %v618
    %2845 = vmatmul.mubr.bf16.gmra.mxu0 %v617
    %v2846 = vpop.f32.mrf.mxu0
    %v2847 = vadd.f32 %v2734, %v2846
    %v2848 = vpop.f32.mrf.mxu0
    %v2849 = vadd.f32 %v2736, %v2848
    %v2850 = vpop.f32.mrf.mxu0
    %v2851 = vadd.f32 %v2738, %v2850
    %v2852 = vpop.f32.mrf.mxu0
    %v2853 = vadd.f32 %v2740, %v2852
    %2854 = vmatprep.mubr.bf16.mxu0 %v626
    %2855 = vmatmul.mubr.bf16.gmra.mxu0 %v625
    %v2856 = vpop.f32.mrf.mxu0
    %v2857 = vadd.f32 %v2744, %v2856
    %v2858 = vpop.f32.mrf.mxu0
    %v2859 = vadd.f32 %v2746, %v2858
    %v2860 = vpop.f32.mrf.mxu0
    %v2861 = vadd.f32 %v2748, %v2860
    %v2862 = vpop.f32.mrf.mxu0
    %v2863 = vadd.f32 %v2750, %v2862
    %2864 = vmatprep.mubr.bf16.mxu0 %v634
    %2865 = vmatmul.mubr.bf16.gmra.mxu0 %v633
    %v2866 = vpop.f32.mrf.mxu0
    %v2867 = vadd.f32 %v2754, %v2866
    %v2868 = vpop.f32.mrf.mxu0
    %v2869 = vadd.f32 %v2756, %v2868
    %v2870 = vpop.f32.mrf.mxu0
    %v2871 = vadd.f32 %v2758, %v2870
    %v2872 = vpop.f32.mrf.mxu0
    %v2873 = vadd.f32 %v2760, %v2872
    %2874 = vmatprep.mubr.bf16.mxu0 %v642
    %2875 = vmatmul.mubr.bf16.gmra.mxu0 %v641
    %v2876 = vpop.f32.mrf.mxu0
    %v2877 = vadd.f32 %v2764, %v2876
    %v2878 = vpop.f32.mrf.mxu0
    %v2879 = vadd.f32 %v2766, %v2878
    %v2880 = vpop.f32.mrf.mxu0
    %v2881 = vadd.f32 %v2768, %v2880
    %v2882 = vpop.f32.mrf.mxu0
    %v2883 = vadd.f32 %v2770, %v2882
    %2884 = vmatprep.mubr.bf16.mxu0 %v650
    %2885 = vmatmul.mubr.bf16.gmra.mxu0 %v649
    %v2886 = vpop.f32.mrf.mxu0
    %v2887 = vadd.f32 %v2774, %v2886
    %v2888 = vpop.f32.mrf.mxu0
    %v2889 = vadd.f32 %v2776, %v2888
    %v2890 = vpop.f32.mrf.mxu0
    %v2891 = vadd.f32 %v2778, %v2890
    %v2892 = vpop.f32.mrf.mxu0
    %v2893 = vadd.f32 %v2780, %v2892
    %2894 = vmatprep.mubr.bf16.mxu0 %v658
    %2895 = vmatmul.mubr.bf16.gmra.mxu0 %v657
    %v2896 = vpop.f32.mrf.mxu0
    %v2897 = vadd.f32 %v2784, %v2896
    %v2898 = vpop.f32.mrf.mxu0
    %v2899 = vadd.f32 %v2786, %v2898
    %v2900 = vpop.f32.mrf.mxu0
    %v2901 = vadd.f32 %v2788, %v2900
    %v2902 = vpop.f32.mrf.mxu0
    %v2903 = vadd.f32 %v2790, %v2902
    %2904 = vmatprep.mubr.bf16.mxu0 %v666
    %2905 = vmatmul.mubr.bf16.gmra.mxu0 %v665
    %v2906 = vpop.f32.mrf.mxu0
    %v2907 = vadd.f32 %v2794, %v2906
    %v2908 = vpop.f32.mrf.mxu0
    %v2909 = vadd.f32 %v2796, %v2908
    %v2910 = vpop.f32.mrf.mxu0
    %v2911 = vadd.f32 %v2798, %v2910
    %v2912 = vpop.f32.mrf.mxu0
    %v2913 = vadd.f32 %v2800, %v2912
    %2914 = vdwg.mxu0
    %v2915 = vmul.f32 %v2385, 0.2
    %v2916 = vmul.f32 %v2387, 0.2
    %v2917 = vmul.f32 %v2837, 0.2
    %v2918 = vmul.f32 %v2839, 0.2
    %v2919 = vmul.f32 %v2389, 0.2
    %v2920 = vmul.f32 %v2391, 0.2
    %v2921 = vmul.f32 %v2841, 0.2
    %v2922 = vmul.f32 %v2843, 0.2
    %v2923 = vmul.f32 %v2395, 0.2
    %v2924 = vmul.f32 %v2397, 0.2
    %v2925 = vmul.f32 %v2847, 0.2
    %v2926 = vmul.f32 %v2849, 0.2
    %v2927 = vmul.f32 %v2399, 0.2
    %v2928 = vmul.f32 %v2401, 0.2
    %v2929 = vmul.f32 %v2851, 0.2
    %v2930 = vmul.f32 %v2853, 0.2
    %v2931 = vmul.f32 %v2405, 0.2
    %v2932 = vmul.f32 %v2407, 0.2
    %v2933 = vmul.f32 %v2857, 0.2
    %v2934 = vmul.f32 %v2859, 0.2
    %v2935 = vmul.f32 %v2409, 0.2
    %v2936 = vmul.f32 %v2411, 0.2
    %v2937 = vmul.f32 %v2861, 0.2
    %v2938 = vmul.f32 %v2863, 0.2
    %v2939 = vmul.f32 %v2415, 0.2
    %v2940 = vmul.f32 %v2417, 0.2
    %v2941 = vmul.f32 %v2867, 0.2
    %v2942 = vmul.f32 %v2869, 0.2
    %v2943 = vmul.f32 %v2419, 0.2
    %v2944 = vmul.f32 %v2421, 0.2
    %v2945 = vmul.f32 %v2871, 0.2
    %v2946 = vmul.f32 %v2873, 0.2
    %v2947 = vmul.f32 %v2425, 0.2
    %v2948 = vmul.f32 %v2427, 0.2
    %v2949 = vmul.f32 %v2877, 0.2
    %v2950 = vmul.f32 %v2879, 0.2
    %v2951 = vmul.f32 %v2429, 0.2
    %v2952 = vmul.f32 %v2431, 0.2
    %v2953 = vmul.f32 %v2881, 0.2
    %v2954 = vmul.f32 %v2883, 0.2
    %v2955 = vmul.f32 %v2435, 0.2
    %v2956 = vmul.f32 %v2437, 0.2
    %v2957 = vmul.f32 %v2887, 0.2
    %v2958 = vmul.f32 %v2889, 0.2
    %v2959 = vmul.f32 %v2439, 0.2
    %v2960 = vmul.f32 %v2441, 0.2
    %v2961 = vmul.f32 %v2891, 0.2
    %v2962 = vmul.f32 %v2893, 0.2
    %v2963 = vmul.f32 %v2445, 0.2
    %v2964 = vmul.f32 %v2447, 0.2
    %v2965 = vmul.f32 %v2897, 0.2
    %v2966 = vmul.f32 %v2899, 0.2
    %v2967 = vmul.f32 %v2449, 0.2
    %v2968 = vmul.f32 %v2451, 0.2
    %v2969 = vmul.f32 %v2901, 0.2
    %v2970 = vmul.f32 %v2903, 0.2
    %v2971 = vmul.f32 %v2455, 0.2
    %v2972 = vmul.f32 %v2457, 0.2
    %v2973 = vmul.f32 %v2907, 0.2
    %v2974 = vmul.f32 %v2909, 0.2
    %v2975 = vmul.f32 %v2459, 0.2
    %v2976 = vmul.f32 %v2461, 0.2
    %v2977 = vmul.f32 %v2911, 0.2
    %v2978 = vmul.f32 %v2913, 0.2
    %v2979 = vmax.f32 %v2385, %v2915
    %v2980 = vmax.f32 %v2387, %v2916
    %v2981 = vmax.f32 %v2837, %v2917
    %v2982 = vmax.f32 %v2839, %v2918
    %v2983 = vmax.f32 %v2389, %v2919
    %v2984 = vmax.f32 %v2391, %v2920
    %v2985 = vmax.f32 %v2841, %v2921
    %v2986 = vmax.f32 %v2843, %v2922
    %v2987 = vmax.f32 %v2395, %v2923
    %v2988 = vmax.f32 %v2397, %v2924
    %v2989 = vmax.f32 %v2847, %v2925
    %v2990 = vmax.f32 %v2849, %v2926
    %v2991 = vmax.f32 %v2399, %v2927
    %v2992 = vmax.f32 %v2401, %v2928
    %v2993 = vmax.f32 %v2851, %v2929
    %v2994 = vmax.f32 %v2853, %v2930
    %v2995 = vmax.f32 %v2405, %v2931
    %v2996 = vmax.f32 %v2407, %v2932
    %v2997 = vmax.f32 %v2857, %v2933
    %v2998 = vmax.f32 %v2859, %v2934
    %v2999 = vmax.f32 %v2409, %v2935
    %v3000 = vmax.f32 %v2411, %v2936
    %v3001 = vmax.f32 %v2861, %v2937
    %v3002 = vmax.f32 %v2863, %v2938
    %v3003 = vmax.f32 %v2415, %v2939
    %v3004 = vmax.f32 %v2417, %v2940
    %v3005 = vmax.f32 %v2867, %v2941
    %v3006 = vmax.f32 %v2869, %v2942
    %v3007 = vmax.f32 %v2419, %v2943
    %v3008 = vmax.f32 %v2421, %v2944
    %v3009 = vmax.f32 %v2871, %v2945
    %v3010 = vmax.f32 %v2873, %v2946
    %v3011 = vmax.f32 %v2425, %v2947
    %v3012 = vmax.f32 %v2427, %v2948
    %v3013 = vmax.f32 %v2877, %v2949
    %v3014 = vmax.f32 %v2879, %v2950
    %v3015 = vmax.f32 %v2429, %v2951
    %v3016 = vmax.f32 %v2431, %v2952
    %v3017 = vmax.f32 %v2881, %v2953
    %v3018 = vmax.f32 %v2883, %v2954
    %v3019 = vmax.f32 %v2435, %v2955
    %v3020 = vmax.f32 %v2437, %v2956
    %v3021 = vmax.f32 %v2887, %v2957
    %v3022 = vmax.f32 %v2889, %v2958
    %v3023 = vmax.f32 %v2439, %v2959
    %v3024 = vmax.f32 %v2441, %v2960
    %v3025 = vmax.f32 %v2891, %v2961
    %v3026 = vmax.f32 %v2893, %v2962
    %v3027 = vmax.f32 %v2445, %v2963
    %v3028 = vmax.f32 %v2447, %v2964
    %v3029 = vmax.f32 %v2897, %v2965
    %v3030 = vmax.f32 %v2899, %v2966
    %v3031 = vmax.f32 %v2449, %v2967
    %v3032 = vmax.f32 %v2451, %v2968
    %v3033 = vmax.f32 %v2901, %v2969
    %v3034 = vmax.f32 %v2903, %v2970
    %v3035 = vmax.f32 %v2455, %v2971
    %v3036 = vmax.f32 %v2457, %v2972
    %v3037 = vmax.f32 %v2907, %v2973
    %v3038 = vmax.f32 %v2909, %v2974
    %v3039 = vmax.f32 %v2459, %v2975
    %v3040 = vmax.f32 %v2461, %v2976
    %v3041 = vmax.f32 %v2911, %v2977
    %v3042 = vmax.f32 %v2913, %v2978
    %v3043 = vpack.c.bf16 %v2983, %v2979
    %v3044 = vpack.c.bf16 %v2984, %v2980
    %v3045 = vpack.c.bf16 %v2985, %v2981
    %v3046 = vpack.c.bf16 %v2986, %v2982
    %v3047 = vpack.c.bf16 %v2991, %v2987
    %v3048 = vpack.c.bf16 %v2992, %v2988
    %v3049 = vpack.c.bf16 %v2993, %v2989
    %v3050 = vpack.c.bf16 %v2994, %v2990
    %v3051 = vpack.c.bf16 %v2999, %v2995
    %v3052 = vpack.c.bf16 %v3000, %v2996
    %v3053 = vpack.c.bf16 %v3001, %v2997
    %v3054 = vpack.c.bf16 %v3002, %v2998
    %v3055 = vpack.c.bf16 %v3007, %v3003
    %v3056 = vpack.c.bf16 %v3008, %v3004
    %v3057 = vpack.c.bf16 %v3009, %v3005
    %v3058 = vpack.c.bf16 %v3010, %v3006
    %v3059 = vpack.c.bf16 %v3015, %v3011
    %v3060 = vpack.c.bf16 %v3016, %v3012
    %v3061 = vpack.c.bf16 %v3017, %v3013
    %v3062 = vpack.c.bf16 %v3018, %v3014
    %v3063 = vpack.c.bf16 %v3023, %v3019
    %v3064 = vpack.c.bf16 %v3024, %v3020
    %v3065 = vpack.c.bf16 %v3025, %v3021
    %v3066 = vpack.c.bf16 %v3026, %v3022
    %v3067 = vpack.c.bf16 %v3031, %v3027
    %v3068 = vpack.c.bf16 %v3032, %v3028
    %v3069 = vpack.c.bf16 %v3033, %v3029
    %v3070 = vpack.c.bf16 %v3034, %v3030
    %v3071 = vpack.c.bf16 %v3039, %v3035
    %v3072 = vpack.c.bf16 %v3040, %v3036
    %v3073 = vpack.c.bf16 %v3041, %v3037
    %v3074 = vpack.c.bf16 %v3042, %v3038
    %v3075 = vld [vmem:[#allocation7] sm:$0xff]
    %v3076 = vld [vmem:[#allocation7 + $0x8] sm:$0xff]
    %v3077 = vld [vmem:[#allocation7 + $0x10] sm:$0xff]
    %v3078 = vld [vmem:[#allocation7 + $0x18] sm:$0xff]
    %v3079 = vld [vmem:[#allocation7 + $0x20] sm:$0xff]
    %v3080 = vld [vmem:[#allocation7 + $0x28] sm:$0xff]
    %v3081 = vld [vmem:[#allocation7 + $0x30] sm:$0xff]
    %v3082 = vld [vmem:[#allocation7 + $0x38] sm:$0xff]
    %v3083 = vld [vmem:[#allocation7 + $0x40] sm:$0xff]
    %v3084 = vld [vmem:[#allocation7 + $0x48] sm:$0xff]
    %v3085 = vld [vmem:[#allocation7 + $0x50] sm:$0xff]
    %v3086 = vld [vmem:[#allocation7 + $0x58] sm:$0xff]
    %v3087 = vld [vmem:[#allocation7 + $0x60] sm:$0xff]
    %v3088 = vld [vmem:[#allocation7 + $0x68] sm:$0xff]
    %v3089 = vld [vmem:[#allocation7 + $0x70] sm:$0xff]
    %v3090 = vld [vmem:[#allocation7 + $0x78] sm:$0xff]
    %v3091 = vld [vmem:[#allocation7 + $0x80] sm:$0xff]
    %v3092 = vld [vmem:[#allocation7 + $0x88] sm:$0xff]
    %v3093 = vld [vmem:[#allocation7 + $0x90] sm:$0xff]
    %v3094 = vld [vmem:[#allocation7 + $0x98] sm:$0xff]
    %v3095 = vld [vmem:[#allocation7 + $0xa0] sm:$0xff]
    %v3096 = vld [vmem:[#allocation7 + $0xa8] sm:$0xff]
    %v3097 = vld [vmem:[#allocation7 + $0xb0] sm:$0xff]
    %v3098 = vld [vmem:[#allocation7 + $0xb8] sm:$0xff]
    %v3099 = vld [vmem:[#allocation7 + $0xc0] sm:$0xff]
    %v3100 = vld [vmem:[#allocation7 + $0xc8] sm:$0xff]
    %v3101 = vld [vmem:[#allocation7 + $0xd0] sm:$0xff]
    %v3102 = vld [vmem:[#allocation7 + $0xd8] sm:$0xff]
    %v3103 = vld [vmem:[#allocation7 + $0xe0] sm:$0xff]
    %v3104 = vld [vmem:[#allocation7 + $0xe8] sm:$0xff]
    %v3105 = vld [vmem:[#allocation7 + $0xf0] sm:$0xff]
    %v3106 = vld [vmem:[#allocation7 + $0xf8] sm:$0xff]
    %v3107 = vld [vmem:[#allocation7 + $0x100] sm:$0xff]
    %v3108 = vld [vmem:[#allocation7 + $0x108] sm:$0xff]
    %v3109 = vld [vmem:[#allocation7 + $0x110] sm:$0xff]
    %v3110 = vld [vmem:[#allocation7 + $0x118] sm:$0xff]
    %v3111 = vld [vmem:[#allocation7 + $0x120] sm:$0xff]
    %v3112 = vld [vmem:[#allocation7 + $0x128] sm:$0xff]
    %v3113 = vld [vmem:[#allocation7 + $0x130] sm:$0xff]
    %v3114 = vld [vmem:[#allocation7 + $0x138] sm:$0xff]
    %v3115 = vld [vmem:[#allocation7 + $0x140] sm:$0xff]
    %v3116 = vld [vmem:[#allocation7 + $0x148] sm:$0xff]
    %v3117 = vld [vmem:[#allocation7 + $0x150] sm:$0xff]
    %v3118 = vld [vmem:[#allocation7 + $0x158] sm:$0xff]
    %v3119 = vld [vmem:[#allocation7 + $0x160] sm:$0xff]
    %v3120 = vld [vmem:[#allocation7 + $0x168] sm:$0xff]
    %v3121 = vld [vmem:[#allocation7 + $0x170] sm:$0xff]
    %v3122 = vld [vmem:[#allocation7 + $0x178] sm:$0xff]
    %v3123 = vld [vmem:[#allocation7 + $0x180] sm:$0xff]
    %v3124 = vld [vmem:[#allocation7 + $0x188] sm:$0xff]
    %v3125 = vld [vmem:[#allocation7 + $0x190] sm:$0xff]
    %v3126 = vld [vmem:[#allocation7 + $0x198] sm:$0xff]
    %v3127 = vld [vmem:[#allocation7 + $0x1a0] sm:$0xff]
    %v3128 = vld [vmem:[#allocation7 + $0x1a8] sm:$0xff]
    %v3129 = vld [vmem:[#allocation7 + $0x1b0] sm:$0xff]
    %v3130 = vld [vmem:[#allocation7 + $0x1b8] sm:$0xff]
    %v3131 = vld [vmem:[#allocation7 + $0x1c0] sm:$0xff]
    %v3132 = vld [vmem:[#allocation7 + $0x1c8] sm:$0xff]
    %v3133 = vld [vmem:[#allocation7 + $0x1d0] sm:$0xff]
    %v3134 = vld [vmem:[#allocation7 + $0x1d8] sm:$0xff]
    %v3135 = vld [vmem:[#allocation7 + $0x1e0] sm:$0xff]
    %v3136 = vld [vmem:[#allocation7 + $0x1e8] sm:$0xff]
    %v3137 = vld [vmem:[#allocation7 + $0x1f0] sm:$0xff]
    %v3138 = vld [vmem:[#allocation7 + $0x1f8] sm:$0xff]
    %v3139 = vld [vmem:[%s4] sm:$0x3]
    %v3141 = vlaneseq
    %v3142 = vshrl.u32 %v3141, 7
    %v3143 = vsub.s32 0, %v3142
    %v3144 = vrot.slane %v3139, %v3143
    %v3145 = vlaneseq
    %v3146 = vshrl.u32 %v3145, 7
    %v3147 = vsub.s32 1, %v3146
    %v3148 = vrot.slane %v3139, %v3147
    %v3215 = vunpack.c.l.b16 %v3075
    %v3216 = vunpack.c.h.b16 %v3075
    %v3217 = vunpack.c.l.b16 %v3076
    %v3218 = vunpack.c.h.b16 %v3076
    %v3219 = vunpack.c.l.b16 %v3077
    %v3220 = vunpack.c.h.b16 %v3077
    %v3221 = vunpack.c.l.b16 %v3078
    %v3222 = vunpack.c.h.b16 %v3078
    %v3223 = vunpack.c.l.b16 %v3079
    %v3224 = vunpack.c.h.b16 %v3079
    %v3225 = vunpack.c.l.b16 %v3080
    %v3226 = vunpack.c.h.b16 %v3080
    %v3227 = vunpack.c.l.b16 %v3081
    %v3228 = vunpack.c.h.b16 %v3081
    %v3229 = vunpack.c.l.b16 %v3082
    %v3230 = vunpack.c.h.b16 %v3082
    %v3231 = vunpack.c.l.b16 %v3083
    %v3232 = vunpack.c.h.b16 %v3083
    %v3233 = vunpack.c.l.b16 %v3084
    %v3234 = vunpack.c.h.b16 %v3084
    %v3235 = vunpack.c.l.b16 %v3085
    %v3236 = vunpack.c.h.b16 %v3085
    %v3237 = vunpack.c.l.b16 %v3086
    %v3238 = vunpack.c.h.b16 %v3086
    %v3239 = vunpack.c.l.b16 %v3087
    %v3240 = vunpack.c.h.b16 %v3087
    %v3241 = vunpack.c.l.b16 %v3088
    %v3242 = vunpack.c.h.b16 %v3088
    %v3243 = vunpack.c.l.b16 %v3089
    %v3244 = vunpack.c.h.b16 %v3089
    %v3245 = vunpack.c.l.b16 %v3090
    %v3246 = vunpack.c.h.b16 %v3090
    %v3247 = vunpack.c.l.b16 %v3091
    %v3248 = vunpack.c.h.b16 %v3091
    %v3249 = vunpack.c.l.b16 %v3092
    %v3250 = vunpack.c.h.b16 %v3092
    %v3251 = vunpack.c.l.b16 %v3093
    %v3252 = vunpack.c.h.b16 %v3093
    %v3253 = vunpack.c.l.b16 %v3094
    %v3254 = vunpack.c.h.b16 %v3094
    %v3255 = vunpack.c.l.b16 %v3095
    %v3256 = vunpack.c.h.b16 %v3095
    %v3257 = vunpack.c.l.b16 %v3096
    %v3258 = vunpack.c.h.b16 %v3096
    %v3259 = vunpack.c.l.b16 %v3097
    %v3260 = vunpack.c.h.b16 %v3097
    %v3261 = vunpack.c.l.b16 %v3098
    %v3262 = vunpack.c.h.b16 %v3098
    %v3263 = vunpack.c.l.b16 %v3099
    %v3264 = vunpack.c.h.b16 %v3099
    %v3265 = vunpack.c.l.b16 %v3100
    %v3266 = vunpack.c.h.b16 %v3100
    %v3267 = vunpack.c.l.b16 %v3101
    %v3268 = vunpack.c.h.b16 %v3101
    %v3269 = vunpack.c.l.b16 %v3102
    %v3270 = vunpack.c.h.b16 %v3102
    %v3271 = vunpack.c.l.b16 %v3103
    %v3272 = vunpack.c.h.b16 %v3103
    %v3273 = vunpack.c.l.b16 %v3104
    %v3274 = vunpack.c.h.b16 %v3104
    %v3275 = vunpack.c.l.b16 %v3105
    %v3276 = vunpack.c.h.b16 %v3105
    %v3277 = vunpack.c.l.b16 %v3106
    %v3278 = vunpack.c.h.b16 %v3106
    %v3279 = vunpack.c.l.b16 %v3107
    %v3280 = vunpack.c.h.b16 %v3107
    %v3281 = vunpack.c.l.b16 %v3108
    %v3282 = vunpack.c.h.b16 %v3108
    %v3283 = vunpack.c.l.b16 %v3109
    %v3284 = vunpack.c.h.b16 %v3109
    %v3285 = vunpack.c.l.b16 %v3110
    %v3286 = vunpack.c.h.b16 %v3110
    %v3287 = vunpack.c.l.b16 %v3111
    %v3288 = vunpack.c.h.b16 %v3111
    %v3289 = vunpack.c.l.b16 %v3112
    %v3290 = vunpack.c.h.b16 %v3112
    %v3291 = vunpack.c.l.b16 %v3113
    %v3292 = vunpack.c.h.b16 %v3113
    %v3293 = vunpack.c.l.b16 %v3114
    %v3294 = vunpack.c.h.b16 %v3114
    %v3295 = vunpack.c.l.b16 %v3115
    %v3296 = vunpack.c.h.b16 %v3115
    %v3297 = vunpack.c.l.b16 %v3116
    %v3298 = vunpack.c.h.b16 %v3116
    %v3299 = vunpack.c.l.b16 %v3117
    %v3300 = vunpack.c.h.b16 %v3117
    %v3301 = vunpack.c.l.b16 %v3118
    %v3302 = vunpack.c.h.b16 %v3118
    %v3303 = vunpack.c.l.b16 %v3119
    %v3304 = vunpack.c.h.b16 %v3119
    %v3305 = vunpack.c.l.b16 %v3120
    %v3306 = vunpack.c.h.b16 %v3120
    %v3307 = vunpack.c.l.b16 %v3121
    %v3308 = vunpack.c.h.b16 %v3121
    %v3309 = vunpack.c.l.b16 %v3122
    %v3310 = vunpack.c.h.b16 %v3122
    %v3311 = vunpack.c.l.b16 %v3123
    %v3312 = vunpack.c.h.b16 %v3123
    %v3313 = vunpack.c.l.b16 %v3124
    %v3314 = vunpack.c.h.b16 %v3124
    %v3315 = vunpack.c.l.b16 %v3125
    %v3316 = vunpack.c.h.b16 %v3125
    %v3317 = vunpack.c.l.b16 %v3126
    %v3318 = vunpack.c.h.b16 %v3126
    %v3319 = vunpack.c.l.b16 %v3127
    %v3320 = vunpack.c.h.b16 %v3127
    %v3321 = vunpack.c.l.b16 %v3128
    %v3322 = vunpack.c.h.b16 %v3128
    %v3323 = vunpack.c.l.b16 %v3129
    %v3324 = vunpack.c.h.b16 %v3129
    %v3325 = vunpack.c.l.b16 %v3130
    %v3326 = vunpack.c.h.b16 %v3130
    %v3327 = vunpack.c.l.b16 %v3131
    %v3328 = vunpack.c.h.b16 %v3131
    %v3329 = vunpack.c.l.b16 %v3132
    %v3330 = vunpack.c.h.b16 %v3132
    %v3331 = vunpack.c.l.b16 %v3133
    %v3332 = vunpack.c.h.b16 %v3133
    %v3333 = vunpack.c.l.b16 %v3134
    %v3334 = vunpack.c.h.b16 %v3134
    %v3335 = vunpack.c.l.b16 %v3135
    %v3336 = vunpack.c.h.b16 %v3135
    %v3337 = vunpack.c.l.b16 %v3136
    %v3338 = vunpack.c.h.b16 %v3136
    %v3339 = vunpack.c.l.b16 %v3137
    %v3340 = vunpack.c.h.b16 %v3137
    %v3341 = vunpack.c.l.b16 %v3138
    %v3342 = vunpack.c.h.b16 %v3138
    %v3343 = vpack.c.b16 %v3217, %v3215
    %v3344 = vpack.c.b16 %v3218, %v3216
    %v3345 = vpack.c.b16 %v3221, %v3219
    %v3346 = vpack.c.b16 %v3222, %v3220
    %v3347 = vpack.c.b16 %v3225, %v3223
    %v3348 = vpack.c.b16 %v3226, %v3224
    %v3349 = vpack.c.b16 %v3229, %v3227
    %v3350 = vpack.c.b16 %v3230, %v3228
    %v3351 = vpack.c.b16 %v3233, %v3231
    %v3352 = vpack.c.b16 %v3234, %v3232
    %v3353 = vpack.c.b16 %v3237, %v3235
    %v3354 = vpack.c.b16 %v3238, %v3236
    %v3355 = vpack.c.b16 %v3241, %v3239
    %v3356 = vpack.c.b16 %v3242, %v3240
    %v3357 = vpack.c.b16 %v3245, %v3243
    %v3358 = vpack.c.b16 %v3246, %v3244
    %v3359 = vpack.c.b16 %v3249, %v3247
    %v3360 = vpack.c.b16 %v3250, %v3248
    %v3361 = vpack.c.b16 %v3253, %v3251
    %v3362 = vpack.c.b16 %v3254, %v3252
    %v3363 = vpack.c.b16 %v3257, %v3255
    %v3364 = vpack.c.b16 %v3258, %v3256
    %v3365 = vpack.c.b16 %v3261, %v3259
    %v3366 = vpack.c.b16 %v3262, %v3260
    %v3367 = vpack.c.b16 %v3265, %v3263
    %v3368 = vpack.c.b16 %v3266, %v3264
    %v3369 = vpack.c.b16 %v3269, %v3267
    %v3370 = vpack.c.b16 %v3270, %v3268
    %v3371 = vpack.c.b16 %v3273, %v3271
    %v3372 = vpack.c.b16 %v3274, %v3272
    %v3373 = vpack.c.b16 %v3277, %v3275
    %v3374 = vpack.c.b16 %v3278, %v3276
    %v3375 = vpack.c.b16 %v3281, %v3279
    %v3376 = vpack.c.b16 %v3282, %v3280
    %v3377 = vpack.c.b16 %v3285, %v3283
    %v3378 = vpack.c.b16 %v3286, %v3284
    %v3379 = vpack.c.b16 %v3289, %v3287
    %v3380 = vpack.c.b16 %v3290, %v3288
    %v3381 = vpack.c.b16 %v3293, %v3291
    %v3382 = vpack.c.b16 %v3294, %v3292
    %v3383 = vpack.c.b16 %v3297, %v3295
    %v3384 = vpack.c.b16 %v3298, %v3296
    %v3385 = vpack.c.b16 %v3301, %v3299
    %v3386 = vpack.c.b16 %v3302, %v3300
    %v3387 = vpack.c.b16 %v3305, %v3303
    %v3388 = vpack.c.b16 %v3306, %v3304
    %v3389 = vpack.c.b16 %v3309, %v3307
    %v3390 = vpack.c.b16 %v3310, %v3308
    %v3391 = vpack.c.b16 %v3313, %v3311
    %v3392 = vpack.c.b16 %v3314, %v3312
    %v3393 = vpack.c.b16 %v3317, %v3315
    %v3394 = vpack.c.b16 %v3318, %v3316
    %v3395 = vpack.c.b16 %v3321, %v3319
    %v3396 = vpack.c.b16 %v3322, %v3320
    %v3397 = vpack.c.b16 %v3325, %v3323
    %v3398 = vpack.c.b16 %v3326, %v3324
    %v3399 = vpack.c.b16 %v3329, %v3327
    %v3400 = vpack.c.b16 %v3330, %v3328
    %v3401 = vpack.c.b16 %v3333, %v3331
    %v3402 = vpack.c.b16 %v3334, %v3332
    %v3403 = vpack.c.b16 %v3337, %v3335
    %v3404 = vpack.c.b16 %v3338, %v3336
    %v3405 = vpack.c.b16 %v3341, %v3339
    %v3406 = vpack.c.b16 %v3342, %v3340
    %3471 = vmatprep.subr.bf16.mxu0 %v3358
    %3472 = vmatpush1.bf16.msra.mxu0 %v3357
    %3473 = vmatprep.subr.bf16.mxu0 %v3356
    %3474 = vmatpush1.bf16.msra.mxu0 %v3355
    %3475 = vmatprep.subr.bf16.mxu0 %v3354
    %3476 = vmatpush1.bf16.msra.mxu0 %v3353
    %3477 = vmatprep.subr.bf16.mxu0 %v3352
    %3478 = vmatpush1.bf16.msra.mxu0 %v3351
    %3479 = vmatprep.subr.bf16.mxu0 %v3350
    %3480 = vmatpush1.bf16.msra.mxu0 %v3349
    %3481 = vmatprep.subr.bf16.mxu0 %v3348
    %3482 = vmatpush1.bf16.msra.mxu0 %v3347
    %3483 = vmatprep.subr.bf16.mxu0 %v3346
    %3484 = vmatpush1.bf16.msra.mxu0 %v3345
    %3485 = vmatprep.subr.bf16.mxu0 %v3344
    %3486 = vmatpush1.bf16.msra.mxu0 %v3343
    %3487 = vmatprep.subr.bf16.mxu0 %v3374
    %3488 = vmatpush2.bf16.msra.mxu0 %v3373
    %3489 = vmatprep.subr.bf16.mxu0 %v3372
    %3490 = vmatpush2.bf16.msra.mxu0 %v3371
    %3491 = vmatprep.subr.bf16.mxu0 %v3370
    %3492 = vmatpush2.bf16.msra.mxu0 %v3369
    %3493 = vmatprep.subr.bf16.mxu0 %v3368
    %3494 = vmatpush2.bf16.msra.mxu0 %v3367
    %3495 = vmatprep.subr.bf16.mxu0 %v3366
    %3496 = vmatpush2.bf16.msra.mxu0 %v3365
    %3497 = vmatprep.subr.bf16.mxu0 %v3364
    %3498 = vmatpush2.bf16.msra.mxu0 %v3363
    %3499 = vmatprep.subr.bf16.mxu0 %v3362
    %3500 = vmatpush2.bf16.msra.mxu0 %v3361
    %3501 = vmatprep.subr.bf16.mxu0 %v3360
    %3502 = vmatpush2.bf16.msra.mxu0 %v3359
    %3503 = vmatprep.mubr.bf16.mxu0 %v3044
    %3504 = vmatmul.mubr.bf16.gmra.mxu0 %v3043
    %v3505 = vpop.f32.mrf.mxu0
    %v3506 = vadd.f32 %v3144, %v3505
    %v3507 = vpop.f32.mrf.mxu0
    %v3508 = vadd.f32 %v3148, %v3507
    %v3509 = vpop.f32.mrf.mxu0
    %v3510 = vadd.f32 %v3144, %v3509
    %v3511 = vpop.f32.mrf.mxu0
    %v3512 = vadd.f32 %v3148, %v3511
    %3513 = vmatprep.mubr.bf16.mxu0 %v3048
    %3514 = vmatmul.mubr.bf16.gmra.mxu0 %v3047
    %v3515 = vpop.f32.mrf.mxu0
    %v3516 = vadd.f32 %v3144, %v3515
    %v3517 = vpop.f32.mrf.mxu0
    %v3518 = vadd.f32 %v3148, %v3517
    %v3519 = vpop.f32.mrf.mxu0
    %v3520 = vadd.f32 %v3144, %v3519
    %v3521 = vpop.f32.mrf.mxu0
    %v3522 = vadd.f32 %v3148, %v3521
    %3523 = vmatprep.mubr.bf16.mxu0 %v3052
    %3524 = vmatmul.mubr.bf16.gmra.mxu0 %v3051
    %v3525 = vpop.f32.mrf.mxu0
    %v3526 = vadd.f32 %v3144, %v3525
    %v3527 = vpop.f32.mrf.mxu0
    %v3528 = vadd.f32 %v3148, %v3527
    %v3529 = vpop.f32.mrf.mxu0
    %v3530 = vadd.f32 %v3144, %v3529
    %v3531 = vpop.f32.mrf.mxu0
    %v3532 = vadd.f32 %v3148, %v3531
    %3533 = vmatprep.mubr.bf16.mxu0 %v3056
    %3534 = vmatmul.mubr.bf16.gmra.mxu0 %v3055
    %v3535 = vpop.f32.mrf.mxu0
    %v3536 = vadd.f32 %v3144, %v3535
    %v3537 = vpop.f32.mrf.mxu0
    %v3538 = vadd.f32 %v3148, %v3537
    %v3539 = vpop.f32.mrf.mxu0
    %v3540 = vadd.f32 %v3144, %v3539
    %v3541 = vpop.f32.mrf.mxu0
    %v3542 = vadd.f32 %v3148, %v3541
    %3543 = vmatprep.mubr.bf16.mxu0 %v3060
    %3544 = vmatmul.mubr.bf16.gmra.mxu0 %v3059
    %v3545 = vpop.f32.mrf.mxu0
    %v3546 = vadd.f32 %v3144, %v3545
    %v3547 = vpop.f32.mrf.mxu0
    %v3548 = vadd.f32 %v3148, %v3547
    %v3549 = vpop.f32.mrf.mxu0
    %v3550 = vadd.f32 %v3144, %v3549
    %v3551 = vpop.f32.mrf.mxu0
    %v3552 = vadd.f32 %v3148, %v3551
    %3553 = vmatprep.mubr.bf16.mxu0 %v3064
    %3554 = vmatmul.mubr.bf16.gmra.mxu0 %v3063
    %v3555 = vpop.f32.mrf.mxu0
    %v3556 = vadd.f32 %v3144, %v3555
    %v3557 = vpop.f32.mrf.mxu0
    %v3558 = vadd.f32 %v3148, %v3557
    %v3559 = vpop.f32.mrf.mxu0
    %v3560 = vadd.f32 %v3144, %v3559
    %v3561 = vpop.f32.mrf.mxu0
    %v3562 = vadd.f32 %v3148, %v3561
    %3563 = vmatprep.mubr.bf16.mxu0 %v3068
    %3564 = vmatmul.mubr.bf16.gmra.mxu0 %v3067
    %v3565 = vpop.f32.mrf.mxu0
    %v3566 = vadd.f32 %v3144, %v3565
    %v3567 = vpop.f32.mrf.mxu0
    %v3568 = vadd.f32 %v3148, %v3567
    %v3569 = vpop.f32.mrf.mxu0
    %v3570 = vadd.f32 %v3144, %v3569
    %v3571 = vpop.f32.mrf.mxu0
    %v3572 = vadd.f32 %v3148, %v3571
    %3573 = vmatprep.mubr.bf16.mxu0 %v3072
    %3574 = vmatmul.mubr.bf16.gmra.mxu0 %v3071
    %v3575 = vpop.f32.mrf.mxu0
    %v3576 = vadd.f32 %v3144, %v3575
    %v3577 = vpop.f32.mrf.mxu0
    %v3578 = vadd.f32 %v3148, %v3577
    %v3579 = vpop.f32.mrf.mxu0
    %v3580 = vadd.f32 %v3144, %v3579
    %v3581 = vpop.f32.mrf.mxu0
    %v3582 = vadd.f32 %v3148, %v3581
    %3583 = vdwg.mxu0
    %3584 = vmatprep.subr.bf16.mxu0 %v3390
    %3585 = vmatpush1.bf16.msra.mxu0 %v3389
    %3586 = vmatprep.subr.bf16.mxu0 %v3388
    %3587 = vmatpush1.bf16.msra.mxu0 %v3387
    %3588 = vmatprep.subr.bf16.mxu0 %v3386
    %3589 = vmatpush1.bf16.msra.mxu0 %v3385
    %3590 = vmatprep.subr.bf16.mxu0 %v3384
    %3591 = vmatpush1.bf16.msra.mxu0 %v3383
    %3592 = vmatprep.subr.bf16.mxu0 %v3382
    %3593 = vmatpush1.bf16.msra.mxu0 %v3381
    %3594 = vmatprep.subr.bf16.mxu0 %v3380
    %3595 = vmatpush1.bf16.msra.mxu0 %v3379
    %3596 = vmatprep.subr.bf16.mxu0 %v3378
    %3597 = vmatpush1.bf16.msra.mxu0 %v3377
    %3598 = vmatprep.subr.bf16.mxu0 %v3376
    %3599 = vmatpush1.bf16.msra.mxu0 %v3375
    %3600 = vmatprep.subr.bf16.mxu0 %v3406
    %3601 = vmatpush2.bf16.msra.mxu0 %v3405
    %3602 = vmatprep.subr.bf16.mxu0 %v3404
    %3603 = vmatpush2.bf16.msra.mxu0 %v3403
    %3604 = vmatprep.subr.bf16.mxu0 %v3402
    %3605 = vmatpush2.bf16.msra.mxu0 %v3401
    %3606 = vmatprep.subr.bf16.mxu0 %v3400
    %3607 = vmatpush2.bf16.msra.mxu0 %v3399
    %3608 = vmatprep.subr.bf16.mxu0 %v3398
    %3609 = vmatpush2.bf16.msra.mxu0 %v3397
    %3610 = vmatprep.subr.bf16.mxu0 %v3396
    %3611 = vmatpush2.bf16.msra.mxu0 %v3395
    %3612 = vmatprep.subr.bf16.mxu0 %v3394
    %3613 = vmatpush2.bf16.msra.mxu0 %v3393
    %3614 = vmatprep.subr.bf16.mxu0 %v3392
    %3615 = vmatpush2.bf16.msra.mxu0 %v3391
    %3616 = vmatprep.mubr.bf16.mxu0 %v3046
    %3617 = vmatmul.mubr.bf16.gmra.mxu0 %v3045
    %v3618 = vpop.f32.mrf.mxu0
    %v3619 = vadd.f32 %v3506, %v3618
    %v3620 = vpop.f32.mrf.mxu0
    %v3621 = vadd.f32 %v3508, %v3620
    %v3622 = vpop.f32.mrf.mxu0
    %v3623 = vadd.f32 %v3510, %v3622
    %v3624 = vpop.f32.mrf.mxu0
    %v3625 = vadd.f32 %v3512, %v3624
    %3626 = vmatprep.mubr.bf16.mxu0 %v3050
    %3627 = vmatmul.mubr.bf16.gmra.mxu0 %v3049
    %v3628 = vpop.f32.mrf.mxu0
    %v3629 = vadd.f32 %v3516, %v3628
    %v3630 = vpop.f32.mrf.mxu0
    %v3631 = vadd.f32 %v3518, %v3630
    %v3632 = vpop.f32.mrf.mxu0
    %v3633 = vadd.f32 %v3520, %v3632
    %v3634 = vpop.f32.mrf.mxu0
    %v3635 = vadd.f32 %v3522, %v3634
    %3636 = vmatprep.mubr.bf16.mxu0 %v3054
    %3637 = vmatmul.mubr.bf16.gmra.mxu0 %v3053
    %v3638 = vpop.f32.mrf.mxu0
    %v3639 = vadd.f32 %v3526, %v3638
    %v3640 = vpop.f32.mrf.mxu0
    %v3641 = vadd.f32 %v3528, %v3640
    %v3642 = vpop.f32.mrf.mxu0
    %v3643 = vadd.f32 %v3530, %v3642
    %v3644 = vpop.f32.mrf.mxu0
    %v3645 = vadd.f32 %v3532, %v3644
    %3646 = vmatprep.mubr.bf16.mxu0 %v3058
    %3647 = vmatmul.mubr.bf16.gmra.mxu0 %v3057
    %v3648 = vpop.f32.mrf.mxu0
    %v3649 = vadd.f32 %v3536, %v3648
    %v3650 = vpop.f32.mrf.mxu0
    %v3651 = vadd.f32 %v3538, %v3650
    %v3652 = vpop.f32.mrf.mxu0
    %v3653 = vadd.f32 %v3540, %v3652
    %v3654 = vpop.f32.mrf.mxu0
    %v3655 = vadd.f32 %v3542, %v3654
    %3656 = vmatprep.mubr.bf16.mxu0 %v3062
    %3657 = vmatmul.mubr.bf16.gmra.mxu0 %v3061
    %v3658 = vpop.f32.mrf.mxu0
    %v3659 = vadd.f32 %v3546, %v3658
    %v3660 = vpop.f32.mrf.mxu0
    %v3661 = vadd.f32 %v3548, %v3660
    %v3662 = vpop.f32.mrf.mxu0
    %v3663 = vadd.f32 %v3550, %v3662
    %v3664 = vpop.f32.mrf.mxu0
    %v3665 = vadd.f32 %v3552, %v3664
    %3666 = vmatprep.mubr.bf16.mxu0 %v3066
    %3667 = vmatmul.mubr.bf16.gmra.mxu0 %v3065
    %v3668 = vpop.f32.mrf.mxu0
    %v3669 = vadd.f32 %v3556, %v3668
    %v3670 = vpop.f32.mrf.mxu0
    %v3671 = vadd.f32 %v3558, %v3670
    %v3672 = vpop.f32.mrf.mxu0
    %v3673 = vadd.f32 %v3560, %v3672
    %v3674 = vpop.f32.mrf.mxu0
    %v3675 = vadd.f32 %v3562, %v3674
    %3676 = vmatprep.mubr.bf16.mxu0 %v3070
    %3677 = vmatmul.mubr.bf16.gmra.mxu0 %v3069
    %v3678 = vpop.f32.mrf.mxu0
    %v3679 = vadd.f32 %v3566, %v3678
    %v3680 = vpop.f32.mrf.mxu0
    %v3681 = vadd.f32 %v3568, %v3680
    %v3682 = vpop.f32.mrf.mxu0
    %v3683 = vadd.f32 %v3570, %v3682
    %v3684 = vpop.f32.mrf.mxu0
    %v3685 = vadd.f32 %v3572, %v3684
    %3686 = vmatprep.mubr.bf16.mxu0 %v3074
    %3687 = vmatmul.mubr.bf16.gmra.mxu0 %v3073
    %v3688 = vpop.f32.mrf.mxu0
    %v3689 = vadd.f32 %v3576, %v3688
    %v3690 = vpop.f32.mrf.mxu0
    %v3691 = vadd.f32 %v3578, %v3690
    %v3692 = vpop.f32.mrf.mxu0
    %v3693 = vadd.f32 %v3580, %v3692
    %v3694 = vpop.f32.mrf.mxu0
    %v3695 = vadd.f32 %v3582, %v3694
    %3696 = vdwg.mxu0
    %v3697 = vmul.f32 %v3619, 0.2
    %v3698 = vmul.f32 %v3621, 0.2
    %v3699 = vmul.f32 %v3623, 0.2
    %v3700 = vmul.f32 %v3625, 0.2
    %v3701 = vmul.f32 %v3629, 0.2
    %v3702 = vmul.f32 %v3631, 0.2
    %v3703 = vmul.f32 %v3633, 0.2
    %v3704 = vmul.f32 %v3635, 0.2
    %v3705 = vmul.f32 %v3639, 0.2
    %v3706 = vmul.f32 %v3641, 0.2
    %v3707 = vmul.f32 %v3643, 0.2
    %v3708 = vmul.f32 %v3645, 0.2
    %v3709 = vmul.f32 %v3649, 0.2
    %v3710 = vmul.f32 %v3651, 0.2
    %v3711 = vmul.f32 %v3653, 0.2
    %v3712 = vmul.f32 %v3655, 0.2
    %v3713 = vmul.f32 %v3659, 0.2
    %v3714 = vmul.f32 %v3661, 0.2
    %v3715 = vmul.f32 %v3663, 0.2
    %v3716 = vmul.f32 %v3665, 0.2
    %v3717 = vmul.f32 %v3669, 0.2
    %v3718 = vmul.f32 %v3671, 0.2
    %v3719 = vmul.f32 %v3673, 0.2
    %v3720 = vmul.f32 %v3675, 0.2
    %v3721 = vmul.f32 %v3679, 0.2
    %v3722 = vmul.f32 %v3681, 0.2
    %v3723 = vmul.f32 %v3683, 0.2
    %v3724 = vmul.f32 %v3685, 0.2
    %v3725 = vmul.f32 %v3689, 0.2
    %v3726 = vmul.f32 %v3691, 0.2
    %v3727 = vmul.f32 %v3693, 0.2
    %v3728 = vmul.f32 %v3695, 0.2
    %v3729 = vmax.f32 %v3619, %v3697
    %v3730 = vmax.f32 %v3621, %v3698
    %v3731 = vmax.f32 %v3623, %v3699
    %v3732 = vmax.f32 %v3625, %v3700
    %v3733 = vmax.f32 %v3629, %v3701
    %v3734 = vmax.f32 %v3631, %v3702
    %v3735 = vmax.f32 %v3633, %v3703
    %v3736 = vmax.f32 %v3635, %v3704
    %v3737 = vmax.f32 %v3639, %v3705
    %v3738 = vmax.f32 %v3641, %v3706
    %v3739 = vmax.f32 %v3643, %v3707
    %v3740 = vmax.f32 %v3645, %v3708
    %v3741 = vmax.f32 %v3649, %v3709
    %v3742 = vmax.f32 %v3651, %v3710
    %v3743 = vmax.f32 %v3653, %v3711
    %v3744 = vmax.f32 %v3655, %v3712
    %v3745 = vmax.f32 %v3659, %v3713
    %v3746 = vmax.f32 %v3661, %v3714
    %v3747 = vmax.f32 %v3663, %v3715
    %v3748 = vmax.f32 %v3665, %v3716
    %v3749 = vmax.f32 %v3669, %v3717
    %v3750 = vmax.f32 %v3671, %v3718
    %v3751 = vmax.f32 %v3673, %v3719
    %v3752 = vmax.f32 %v3675, %v3720
    %v3753 = vmax.f32 %v3679, %v3721
    %v3754 = vmax.f32 %v3681, %v3722
    %v3755 = vmax.f32 %v3683, %v3723
    %v3756 = vmax.f32 %v3685, %v3724
    %v3757 = vmax.f32 %v3689, %v3725
    %v3758 = vmax.f32 %v3691, %v3726
    %v3759 = vmax.f32 %v3693, %v3727
    %v3760 = vmax.f32 %v3695, %v3728
    %v3761 = vld [vmem:[%s5] sm:$0x3]
    %v3762 = vunpack.c.l.bf16 %v3761
    %v3764 = vlaneseq
    %v3765 = vshrl.u32 %v3764, 7
    %v3766 = vsub.s32 0, %v3765
    %v3767 = vrot.slane %v3762, %v3766
    %v3768 = vlaneseq
    %v3769 = vshrl.u32 %v3768, 7
    %v3770 = vsub.s32 2, %v3769
    %v3771 = vrot.slane %v3762, %v3770
    %v3774 = vlaneseq
    %v3775 = vshrl.u32 %v3774, 7
    %v3776 = vsub.s32 0, %v3775
    %v3777 = vrot.slane %v3767, %v3776
    %v3778 = vlaneseq
    %v3779 = vshrl.u32 %v3778, 7
    %v3780 = vsub.s32 0, %v3779
    %v3781 = vrot.slane %v3771, %v3780
    %v3782 = vmul.f32 %v3729, %v3777
    %v3783 = vmul.f32 %v3730, %v3781
    %v3784 = vmul.f32 %v3731, %v3777
    %v3785 = vmul.f32 %v3732, %v3781
    %v3786 = vmul.f32 %v3733, %v3777
    %v3787 = vmul.f32 %v3734, %v3781
    %v3788 = vmul.f32 %v3735, %v3777
    %v3789 = vmul.f32 %v3736, %v3781
    %v3790 = vmul.f32 %v3737, %v3777
    %v3791 = vmul.f32 %v3738, %v3781
    %v3792 = vmul.f32 %v3739, %v3777
    %v3793 = vmul.f32 %v3740, %v3781
    %v3794 = vmul.f32 %v3741, %v3777
    %v3795 = vmul.f32 %v3742, %v3781
    %v3796 = vmul.f32 %v3743, %v3777
    %v3797 = vmul.f32 %v3744, %v3781
    %v3798 = vmul.f32 %v3745, %v3777
    %v3799 = vmul.f32 %v3746, %v3781
    %v3800 = vmul.f32 %v3747, %v3777
    %v3801 = vmul.f32 %v3748, %v3781
    %v3802 = vmul.f32 %v3749, %v3777
    %v3803 = vmul.f32 %v3750, %v3781
    %v3804 = vmul.f32 %v3751, %v3777
    %v3805 = vmul.f32 %v3752, %v3781
    %v3806 = vmul.f32 %v3753, %v3777
    %v3807 = vmul.f32 %v3754, %v3781
    %v3808 = vmul.f32 %v3755, %v3777
    %v3809 = vmul.f32 %v3756, %v3781
    %v3810 = vmul.f32 %v3757, %v3777
    %v3811 = vmul.f32 %v3758, %v3781
    %v3812 = vmul.f32 %v3759, %v3777
    %v3813 = vmul.f32 %v3760, %v3781
    %v3814 = vadd.f32 %v3782, %v3783
    %3815 = vadd.xlane.f32.xlu0 %v3814
    %v3816 = vpop.xlane.xlu0 %3815
    %v3817 = vadd.f32 %v3784, %v3785
    %3818 = vadd.xlane.f32.xlu0 %v3817
    %v3819 = vpop.xlane.xlu0 %3818
    %v3820 = vadd.f32 %v3786, %v3787
    %3821 = vadd.xlane.f32.xlu0 %v3820
    %v3822 = vpop.xlane.xlu0 %3821
    %v3823 = vadd.f32 %v3788, %v3789
    %3824 = vadd.xlane.f32.xlu0 %v3823
    %v3825 = vpop.xlane.xlu0 %3824
    %v3826 = vadd.f32 %v3790, %v3791
    %3827 = vadd.xlane.f32.xlu0 %v3826
    %v3828 = vpop.xlane.xlu0 %3827
    %v3829 = vadd.f32 %v3792, %v3793
    %3830 = vadd.xlane.f32.xlu0 %v3829
    %v3831 = vpop.xlane.xlu0 %3830
    %v3832 = vadd.f32 %v3794, %v3795
    %3833 = vadd.xlane.f32.xlu0 %v3832
    %v3834 = vpop.xlane.xlu0 %3833
    %v3835 = vadd.f32 %v3796, %v3797
    %3836 = vadd.xlane.f32.xlu0 %v3835
    %v3837 = vpop.xlane.xlu0 %3836
    %v3838 = vadd.f32 %v3798, %v3799
    %3839 = vadd.xlane.f32.xlu0 %v3838
    %v3840 = vpop.xlane.xlu0 %3839
    %v3841 = vadd.f32 %v3800, %v3801
    %3842 = vadd.xlane.f32.xlu0 %v3841
    %v3843 = vpop.xlane.xlu0 %3842
    %v3844 = vadd.f32 %v3802, %v3803
    %3845 = vadd.xlane.f32.xlu0 %v3844
    %v3846 = vpop.xlane.xlu0 %3845
    %v3847 = vadd.f32 %v3804, %v3805
    %3848 = vadd.xlane.f32.xlu0 %v3847
    %v3849 = vpop.xlane.xlu0 %3848
    %v3850 = vadd.f32 %v3806, %v3807
    %3851 = vadd.xlane.f32.xlu0 %v3850
    %v3852 = vpop.xlane.xlu0 %3851
    %v3853 = vadd.f32 %v3808, %v3809
    %3854 = vadd.xlane.f32.xlu0 %v3853
    %v3855 = vpop.xlane.xlu0 %3854
    %v3856 = vadd.f32 %v3810, %v3811
    %3857 = vadd.xlane.f32.xlu0 %v3856
    %v3858 = vpop.xlane.xlu0 %3857
    %v3859 = vadd.f32 %v3812, %v3813
    %3860 = vadd.xlane.f32.xlu0 %v3859
    %v3861 = vpop.xlane.xlu0 %3860
    %v3862 = vld [vmem:[#allocation2] sm:$0x1]
    %v3864 = vlaneseq
    %v3865 = vshrl.u32 %v3864, 7
    %v3866 = vsub.s32 0, %v3865
    %v3867 = vrot.slane %v3862, %v3866
    %v3869 = vadd.f32 %v3816, %v3867
    %v3870 = vadd.f32 %v3819, %v3867
    %v3871 = vadd.f32 %v3822, %v3867
    %v3872 = vadd.f32 %v3825, %v3867
    %v3873 = vadd.f32 %v3828, %v3867
    %v3874 = vadd.f32 %v3831, %v3867
    %v3875 = vadd.f32 %v3834, %v3867
    %v3876 = vadd.f32 %v3837, %v3867
    %v3877 = vadd.f32 %v3840, %v3867
    %v3878 = vadd.f32 %v3843, %v3867
    %v3879 = vadd.f32 %v3846, %v3867
    %v3880 = vadd.f32 %v3849, %v3867
    %v3881 = vadd.f32 %v3852, %v3867
    %v3882 = vadd.f32 %v3855, %v3867
    %v3883 = vadd.f32 %v3858, %v3867
    %v3884 = vadd.f32 %v3861, %v3867
    %v3885 = vsub.f32 0.0, %v3869
    %v3886 = vsub.f32 0.0, %v3870
    %v3887 = vsub.f32 0.0, %v3871
    %v3888 = vsub.f32 0.0, %v3872
    %v3889 = vsub.f32 0.0, %v3873
    %v3890 = vsub.f32 0.0, %v3874
    %v3891 = vsub.f32 0.0, %v3875
    %v3892 = vsub.f32 0.0, %v3876
    %v3893 = vsub.f32 0.0, %v3877
    %v3894 = vsub.f32 0.0, %v3878
    %v3895 = vsub.f32 0.0, %v3879
    %v3896 = vsub.f32 0.0, %v3880
    %v3897 = vsub.f32 0.0, %v3881
    %v3898 = vsub.f32 0.0, %v3882
    %v3899 = vsub.f32 0.0, %v3883
    %v3900 = vsub.f32 0.0, %v3884
    %v3901 = vmul.f32 %v3885, 1.442695
    %v3902 = vpow.pop %v3901
    %v3903 = vmul.f32 %v3886, 1.442695
    %v3904 = vpow.pop %v3903
    %v3905 = vmul.f32 %v3887, 1.442695
    %v3906 = vpow.pop %v3905
    %v3907 = vmul.f32 %v3888, 1.442695
    %v3908 = vpow.pop %v3907
    %v3909 = vmul.f32 %v3889, 1.442695
    %v3910 = vpow.pop %v3909
    %v3911 = vmul.f32 %v3890, 1.442695
    %v3912 = vpow.pop %v3911
    %v3913 = vmul.f32 %v3891, 1.442695
    %v3914 = vpow.pop %v3913
    %v3915 = vmul.f32 %v3892, 1.442695
    %v3916 = vpow.pop %v3915
    %v3917 = vmul.f32 %v3893, 1.442695
    %v3918 = vpow.pop %v3917
    %v3919 = vmul.f32 %v3894, 1.442695
    %v3920 = vpow.pop %v3919
    %v3921 = vmul.f32 %v3895, 1.442695
    %v3922 = vpow.pop %v3921
    %v3923 = vmul.f32 %v3896, 1.442695
    %v3924 = vpow.pop %v3923
    %v3925 = vmul.f32 %v3897, 1.442695
    %v3926 = vpow.pop %v3925
    %v3927 = vmul.f32 %v3898, 1.442695
    %v3928 = vpow.pop %v3927
    %v3929 = vmul.f32 %v3899, 1.442695
    %v3930 = vpow.pop %v3929
    %v3931 = vmul.f32 %v3900, 1.442695
    %v3932 = vpow.pop %v3931
    %v3933 = vadd.f32 %v3902, 1.0
    %v3934 = vadd.f32 %v3904, 1.0
    %v3935 = vadd.f32 %v3906, 1.0
    %v3936 = vadd.f32 %v3908, 1.0
    %v3937 = vadd.f32 %v3910, 1.0
    %v3938 = vadd.f32 %v3912, 1.0
    %v3939 = vadd.f32 %v3914, 1.0
    %v3940 = vadd.f32 %v3916, 1.0
    %v3941 = vadd.f32 %v3918, 1.0
    %v3942 = vadd.f32 %v3920, 1.0
    %v3943 = vadd.f32 %v3922, 1.0
    %v3944 = vadd.f32 %v3924, 1.0
    %v3945 = vadd.f32 %v3926, 1.0
    %v3946 = vadd.f32 %v3928, 1.0
    %v3947 = vadd.f32 %v3930, 1.0
    %v3948 = vadd.f32 %v3932, 1.0
    %v3949 = vrcp.pop %v3933
    %v3950 = vrcp.pop %v3934
    %v3951 = vrcp.pop %v3935
    %v3952 = vrcp.pop %v3936
    %v3953 = vrcp.pop %v3937
    %v3954 = vrcp.pop %v3938
    %v3955 = vrcp.pop %v3939
    %v3956 = vrcp.pop %v3940
    %v3957 = vrcp.pop %v3941
    %v3958 = vrcp.pop %v3942
    %v3959 = vrcp.pop %v3943
    %v3960 = vrcp.pop %v3944
    %v3961 = vrcp.pop %v3945
    %v3962 = vrcp.pop %v3946
    %v3963 = vrcp.pop %v3947
    %v3964 = vrcp.pop %v3948
    %vm3965 = vcmask 7168
    %3966 = vst.msk [vmem:[%s7] sm:$0xff] %vm3965, %v3949
    %3967 = vst.msk [vmem:[%s7 + $0x8] sm:$0xff] %vm3965, %v3950
    %3968 = vst.msk [vmem:[%s7 + $0x10] sm:$0xff] %vm3965, %v3951
    %3969 = vst.msk [vmem:[%s7 + $0x18] sm:$0xff] %vm3965, %v3952
    %3970 = vst.msk [vmem:[%s7 + $0x20] sm:$0xff] %vm3965, %v3953
    %3971 = vst.msk [vmem:[%s7 + $0x28] sm:$0xff] %vm3965, %v3954
    %3972 = vst.msk [vmem:[%s7 + $0x30] sm:$0xff] %vm3965, %v3955
    %3973 = vst.msk [vmem:[%s7 + $0x38] sm:$0xff] %vm3965, %v3956
    %3974 = vst.msk [vmem:[%s7 + $0x40] sm:$0xff] %vm3965, %v3957
    %3975 = vst.msk [vmem:[%s7 + $0x48] sm:$0xff] %vm3965, %v3958
    %3976 = vst.msk [vmem:[%s7 + $0x50] sm:$0xff] %vm3965, %v3959
    %3977 = vst.msk [vmem:[%s7 + $0x58] sm:$0xff] %vm3965, %v3960
    %3978 = vst.msk [vmem:[%s7 + $0x60] sm:$0xff] %vm3965, %v3961
    %3979 = vst.msk [vmem:[%s7 + $0x68] sm:$0xff] %vm3965, %v3962
    %3980 = vst.msk [vmem:[%s7 + $0x70] sm:$0xff] %vm3965, %v3963
    %3981 = vst.msk [vmem:[%s7 + $0x78] sm:$0xff] %vm3965, %v3964
    // Predicated region
    $region42: #{tpu_custom_call.1} parent=1 // pred_check
      _
    $region43: #{tpu_custom_call.1} parent=1 // pred_check_branch
      %3983 = sbr.rel (0) target = $region45
    $region44: #{tpu_custom_call.1} parent=1 // pred_region
      _
    $region45: #{tpu_custom_call.1} parent=1 // pred_fallthru
      _
    // Predicated region
    $region46: #{tpu_custom_call.1} parent=1 // pred_check
      _
    $region47: #{tpu_custom_call.1} parent=1 // pred_check_branch
      %3985 = sbr.rel (0) target = $region49
    $region48: #{tpu_custom_call.1} parent=1 // pred_region
      _
    $region49: #{tpu_custom_call.1} parent=1 // pred_fallthru
      _
    %3986 = vsyncpa [#allocation4], 1
    %3987 = vsyncpa [#allocation6], 1

</llo_original>
